<compile_context>
chip_gen: v7x
topology: tpu7x:2x2x1
jax: 0.10.0
libtpu: 0.0.40
codegen_flags: <defaults>
</compile_context>

<pallas_src>
import jax
import jax.numpy as jnp
from jax import lax
from jax.experimental import pallas as pl
from jax.experimental.pallas import tpu as pltpu

# ---------------------------------------------------------------------------
# Problem sizes (small, consistent with the module)
# ---------------------------------------------------------------------------
B = 2          # batch
T = 8          # sequence length
OBS_DIM = 8    # observation feature dim
HID = 256      # GRU hidden size (fixed by the module)
ACT_DIM = 4    # number of discrete actions


# ---------------------------------------------------------------------------
# Pallas kernel: GRU recurrence (input projection precomputed) + ReLU +
# fused policy/value head + Categorical.log_prob
# ---------------------------------------------------------------------------
def a2c_kernel(act_ref,       # (B, 1)        i32   SMEM
               gi_ref,        # (T, B, 3H)    f32   obs@W_ih with r/z (+ ih-n) biases folded
               w_hh_ref,      # (H, 3H)       f32   [r|z|n] gate order (PyTorch)
               b_hh_n_ref,    # (1, H)        f32   hidden-side n-gate bias
               w_heads_ref,   # (H, A+1)      f32   [W_pi | W_v] fused
               b_heads_ref,   # (1, A+1)      f32   [b_pi | b_v] fused
               fea_ref,       # out: (B, H)   f32   Encoder output relu(h_T)
               logp_ref,      # out: (B, 1)   f32
               v_ref):        # out: (B, 1)   f32
    t_steps = gi_ref.shape[0]
    batch = gi_ref.shape[1]
    hid = w_hh_ref.shape[0]
    a_dim = w_heads_ref.shape[1] - 1

    w_hh = w_hh_ref[...]
    # Hoist the (1,H) -> (B,H) broadcast out of the unrolled recurrence
    # (broadcast_in_dim is not CSE'd across iterations).
    b_hh_n = jnp.broadcast_to(b_hh_n_ref[...], (batch, hid))

    # Serial GRU recurrence, statically unrolled (T is a small compile-time
    # constant): only one (B,H)x(H,3H) matmul + elementwise work per step.
    h = jnp.zeros((batch, hid), jnp.float32)
    for t in range(t_steps):
        gi = gi_ref[t]                                               # (B, 3H)
        gh = jnp.dot(h, w_hh, preferred_element_type=jnp.float32)    # (B, 3H)
        r = jax.nn.sigmoid(gi[:, :hid] + gh[:, :hid])                # biases pre-folded
        z = jax.nn.sigmoid(gi[:, hid:2 * hid] + gh[:, hid:2 * hid])  # biases pre-folded
        n = jnp.tanh(gi[:, 2 * hid:] + r * (gh[:, 2 * hid:] + b_hh_n))
        h = (1.0 - z) * n + z * h

    fea = jnp.maximum(h, 0.0)                                        # ReLU -> Encoder output
    fea_ref[...] = fea

    # Fused policy + value head: a single (B,H)x(H,A+1) matmul.
    heads = jnp.dot(fea, w_heads_ref[...],
                    preferred_element_type=jnp.float32) + b_heads_ref[...]   # (B, A+1)
    logits = heads[:, :a_dim]                                        # (B, A)
    v_ref[...] = heads[:, a_dim:]                                    # (B, 1)

    # log_softmax + gather of the taken action (actions read from SMEM).
    m = jnp.max(logits, axis=-1, keepdims=True)
    lse = m + jnp.log(jnp.sum(jnp.exp(logits - m), axis=-1, keepdims=True))
    logp_all = logits - lse                                          # (B, A)

    iota_a = lax.broadcasted_iota(jnp.int32, (1, a_dim), 1)
    for b in range(batch):                                           # B is tiny & static
        sel = iota_a == act_ref[b, 0]                                # scalar from SMEM
        logp_ref[b:b + 1, :] = jnp.sum(
            jnp.where(sel, logp_all[b:b + 1, :], 0.0), axis=-1, keepdims=True)


# ---------------------------------------------------------------------------
# Wrapper
# ---------------------------------------------------------------------------
def a2c_forward(obs, act, params):
    """obs: (B, T, D) f32 batch-first, act: (B,) int.

    Returns (fea, logp, v): (B, 256) Encoder features, (B,) log-prob, (B,) value.
    """
    H = params["w_hh"].shape[0]
    b_ih, b_hh = params["b_ih"], params["b_hh"]                      # (1, 3H) each

    # Fold r/z biases (b_ih + b_hh) and the input-side n bias into the input
    # projection; compute the projection once in XLA, directly time-major.
    b_gi = jnp.concatenate(
        [b_ih[:, :2 * H] + b_hh[:, :2 * H], b_ih[:, 2 * H:]], axis=-1)        # (1, 3H)
    gi_all = jnp.einsum("btd,dh->tbh",
                        obs.astype(jnp.float32), params["w_ih"]) + b_gi       # (T, B, 3H)
    b_hh_n = b_hh[:, 2 * H:]                                                  # (1, H)

    # Fuse policy and value heads into one weight/bias.
    w_heads = jnp.concatenate([params["w_pi"], params["w_v"]], axis=-1)       # (H, A+1)
    b_heads = jnp.concatenate([params["b_pi"], params["b_v"]], axis=-1)       # (1, A+1)

    act2d = act.astype(jnp.int32).reshape(-1, 1)                              # (B, 1)

    batch = obs.shape[0]
    vmem = pl.BlockSpec(memory_space=pltpu.MemorySpace.VMEM)
    smem = pl.BlockSpec(memory_space=pltpu.MemorySpace.SMEM)

    fea, logp, v = pl.pallas_call(
        a2c_kernel,
        out_shape=(jax.ShapeDtypeStruct((batch, H), jnp.float32),
                   jax.ShapeDtypeStruct((batch, 1), jnp.float32),
                   jax.ShapeDtypeStruct((batch, 1), jnp.float32)),
        in_specs=[smem, vmem, vmem, vmem, vmem, vmem],
        out_specs=(vmem, vmem, vmem),
    )(act2d, gi_all, params["w_hh"], b_hh_n, w_heads, b_heads)
    return fea, logp[:, 0], v[:, 0]


# ---------------------------------------------------------------------------
# Pure-JAX reference (mirrors torch.nn.GRU + ReLU + heads + Categorical.log_prob)
# ---------------------------------------------------------------------------
def a2c_reference(obs, act, params):
    H = HID
    h = jnp.zeros((obs.shape[0], H), jnp.float32)
    for t in range(obs.shape[1]):
        x_t = obs[:, t, :]
        gi = x_t @ params["w_ih"] + params["b_ih"]
        gh = h @ params["w_hh"] + params["b_hh"]
        r = jax.nn.sigmoid(gi[:, :H] + gh[:, :H])
        z = jax.nn.sigmoid(gi[:, H:2 * H] + gh[:, H:2 * H])
        n = jnp.tanh(gi[:, 2 * H:] + r * gh[:, 2 * H:])
        h = (1.0 - z) * n + z * h
    fea = jnp.maximum(h, 0.0)
    logits = fea @ params["w_pi"] + params["b_pi"]
    logp_all = jax.nn.log_softmax(logits, axis=-1)
    logp = jnp.take_along_axis(logp_all, act.astype(jnp.int32)[:, None], axis=-1)[:, 0]
    v = (fea @ params["w_v"] + params["b_v"])[:, 0]
    return fea, logp, v


# ---------------------------------------------------------------------------
# Deterministic parameter initialization (shapes from the module's __init__)
# ---------------------------------------------------------------------------
def init_params(key):
    ks = jax.random.split(key, 8)
    s = 0.1
    # GRU weights in PyTorch [r|z|n] gate order, pre-transposed to (in, 3H)
    return {
        "w_ih": s * jax.random.normal(ks[0], (OBS_DIM, 3 * HID), jnp.float32),
        "w_hh": s * jax.random.normal(ks[1], (HID, 3 * HID), jnp.float32),
        "b_ih": s * jax.random.normal(ks[2], (1, 3 * HID), jnp.float32),
        "b_hh": s * jax.random.normal(ks[3], (1, 3 * HID), jnp.float32),
        "w_pi": s * jax.random.normal(ks[4], (HID, ACT_DIM), jnp.float32),
        "b_pi": s * jax.random.normal(ks[5], (1, ACT_DIM), jnp.float32),
        "w_v":  s * jax.random.normal(ks[6], (HID, 1), jnp.float32),
        "b_v":  s * jax.random.normal(ks[7], (1, 1), jnp.float32),
    }


if __name__ == "__main__":
    key = jax.random.PRNGKey(0)
    k_obs, k_act, k_par = jax.random.split(key, 3)

    obs = jax.random.normal(k_obs, (B, T, OBS_DIM), jnp.float32)
    act = jax.random.randint(k_act, (B,), 0, ACT_DIM, jnp.int32)
    params = init_params(k_par)

    fea, logp, v = jax.block_until_ready(a2c_forward(obs, act, params))

    fea_ref, logp_ref, v_ref = a2c_reference(obs, act, params)
    assert fea.shape == (B, HID) and logp.shape == (B,) and v.shape == (B,)
    assert jnp.allclose(fea, fea_ref, atol=1e-4, rtol=1e-4)
    assert jnp.allclose(logp, logp_ref, atol=1e-4, rtol=1e-4)
    assert jnp.allclose(v, v_ref, atol=1e-4, rtol=1e-4)

    print("KERNEL_OK")
</pallas_src>

<mosaic_0001>
module attributes {stable_mosaic.version = 11 : i64} {
  func.func @a2c_kernel(%arg0: memref<2x1xi32, #tpu.memory_space<smem>>, %arg1: memref<8x2x768xf32, #tpu.memory_space<vmem>>, %arg2: memref<256x768xf32, #tpu.memory_space<vmem>>, %arg3: memref<1x256xf32, #tpu.memory_space<vmem>>, %arg4: memref<256x5xf32, #tpu.memory_space<vmem>>, %arg5: memref<1x5xf32, #tpu.memory_space<vmem>>, %arg6: memref<2x256xf32, #tpu.memory_space<vmem>>, %arg7: memref<2x1xf32, #tpu.memory_space<vmem>>, %arg8: memref<2x1xf32, #tpu.memory_space<vmem>>) attributes {dimension_semantics = [], scalar_prefetch = 0 : i64, scratch_operands = 0 : i64, tpu.core_type = #tpu.core_type<tc>} {
    %c0 = arith.constant 0 : index
    %c0_0 = arith.constant 0 : index
    %0 = vector.load %arg2[%c0, %c0_0] : memref<256x768xf32, #tpu.memory_space<vmem>>, vector<256x768xf32>
    %c0_1 = arith.constant 0 : index
    %c0_2 = arith.constant 0 : index
    %1 = vector.load %arg3[%c0_1, %c0_2] : memref<1x256xf32, #tpu.memory_space<vmem>>, vector<1x256xf32>
    %2 = vector.shape_cast %1 : vector<1x256xf32> to vector<1x256xf32>
    %3 = vector.broadcast %2 : vector<1x256xf32> to vector<2x256xf32>
    %cst = arith.constant 0.000000e+00 : f32
    %4 = vector.broadcast %cst : f32 to vector<2x256xf32>
    %c0_3 = arith.constant 0 : index
    %c0_4 = arith.constant 0 : index
    %c0_5 = arith.constant 0 : index
    %5 = vector.load %arg1[%c0_3, %c0_4, %c0_5] : memref<8x2x768xf32, #tpu.memory_space<vmem>>, vector<1x2x768xf32>
    %6 = vector.shape_cast %5 : vector<1x2x768xf32> to vector<2x768xf32>
    %cst_6 = arith.constant dense<0.000000e+00> : vector<2x768xf32>
    %7 = tpu.matmul %4, %0, %cst_6 {dimension_numbers = #tpu.dot_dimension_numbers<[1], [0], [0], [1], [0, 0, 1, 1], [], []>} : vector<2x256xf32>, vector<256x768xf32>, vector<2x768xf32> -> vector<2x768xf32>
    %8 = vector.extract_strided_slice %6 {offsets = [0, 0], sizes = [2, 256], strides = [1, 1]} : vector<2x768xf32> to vector<2x256xf32>
    %9 = vector.extract_strided_slice %7 {offsets = [0, 0], sizes = [2, 256], strides = [1, 1]} : vector<2x768xf32> to vector<2x256xf32>
    %10 = arith.addf %8, %9 : vector<2x256xf32>
    %11 = arith.negf %10 : vector<2x256xf32>
    %12 = math.exp %11 : vector<2x256xf32>
    %cst_7 = arith.constant 1.000000e+00 : f32
    %13 = vector.broadcast %cst_7 : f32 to vector<2x256xf32>
    %14 = arith.addf %13, %12 : vector<2x256xf32>
    %15 = arith.divf %13, %14 : vector<2x256xf32>
    %16 = vector.extract_strided_slice %6 {offsets = [0, 256], sizes = [2, 256], strides = [1, 1]} : vector<2x768xf32> to vector<2x256xf32>
    %17 = vector.extract_strided_slice %7 {offsets = [0, 256], sizes = [2, 256], strides = [1, 1]} : vector<2x768xf32> to vector<2x256xf32>
    %18 = arith.addf %16, %17 : vector<2x256xf32>
    %19 = arith.negf %18 : vector<2x256xf32>
    %20 = math.exp %19 : vector<2x256xf32>
    %cst_8 = arith.constant 1.000000e+00 : f32
    %21 = vector.broadcast %cst_8 : f32 to vector<2x256xf32>
    %22 = arith.addf %21, %20 : vector<2x256xf32>
    %23 = arith.divf %21, %22 : vector<2x256xf32>
    %24 = vector.extract_strided_slice %6 {offsets = [0, 512], sizes = [2, 256], strides = [1, 1]} : vector<2x768xf32> to vector<2x256xf32>
    %25 = vector.extract_strided_slice %7 {offsets = [0, 512], sizes = [2, 256], strides = [1, 1]} : vector<2x768xf32> to vector<2x256xf32>
    %26 = arith.addf %25, %3 : vector<2x256xf32>
    %27 = arith.mulf %15, %26 : vector<2x256xf32>
    %28 = arith.addf %24, %27 : vector<2x256xf32>
    %29 = math.tanh %28 : vector<2x256xf32>
    %cst_9 = arith.constant 1.000000e+00 : f32
    %30 = vector.broadcast %cst_9 : f32 to vector<2x256xf32>
    %31 = arith.subf %30, %23 : vector<2x256xf32>
    %32 = arith.mulf %31, %29 : vector<2x256xf32>
    %33 = arith.mulf %23, %4 : vector<2x256xf32>
    %34 = arith.addf %32, %33 : vector<2x256xf32>
    %c1 = arith.constant 1 : index
    %c0_10 = arith.constant 0 : index
    %c0_11 = arith.constant 0 : index
    %35 = vector.load %arg1[%c1, %c0_10, %c0_11] : memref<8x2x768xf32, #tpu.memory_space<vmem>>, vector<1x2x768xf32>
    %36 = vector.shape_cast %35 : vector<1x2x768xf32> to vector<2x768xf32>
    %cst_12 = arith.constant dense<0.000000e+00> : vector<2x768xf32>
    %37 = tpu.matmul %34, %0, %cst_12 {dimension_numbers = #tpu.dot_dimension_numbers<[1], [0], [0], [1], [0, 0, 1, 1], [], []>} : vector<2x256xf32>, vector<256x768xf32>, vector<2x768xf32> -> vector<2x768xf32>
    %38 = vector.extract_strided_slice %36 {offsets = [0, 0], sizes = [2, 256], strides = [1, 1]} : vector<2x768xf32> to vector<2x256xf32>
    %39 = vector.extract_strided_slice %37 {offsets = [0, 0], sizes = [2, 256], strides = [1, 1]} : vector<2x768xf32> to vector<2x256xf32>
    %40 = arith.addf %38, %39 : vector<2x256xf32>
    %41 = arith.negf %40 : vector<2x256xf32>
    %42 = math.exp %41 : vector<2x256xf32>
    %cst_13 = arith.constant 1.000000e+00 : f32
    %43 = vector.broadcast %cst_13 : f32 to vector<2x256xf32>
    %44 = arith.addf %43, %42 : vector<2x256xf32>
    %45 = arith.divf %43, %44 : vector<2x256xf32>
    %46 = vector.extract_strided_slice %36 {offsets = [0, 256], sizes = [2, 256], strides = [1, 1]} : vector<2x768xf32> to vector<2x256xf32>
    %47 = vector.extract_strided_slice %37 {offsets = [0, 256], sizes = [2, 256], strides = [1, 1]} : vector<2x768xf32> to vector<2x256xf32>
    %48 = arith.addf %46, %47 : vector<2x256xf32>
    %49 = arith.negf %48 : vector<2x256xf32>
    %50 = math.exp %49 : vector<2x256xf32>
    %cst_14 = arith.constant 1.000000e+00 : f32
    %51 = vector.broadcast %cst_14 : f32 to vector<2x256xf32>
    %52 = arith.addf %51, %50 : vector<2x256xf32>
    %53 = arith.divf %51, %52 : vector<2x256xf32>
    %54 = vector.extract_strided_slice %36 {offsets = [0, 512], sizes = [2, 256], strides = [1, 1]} : vector<2x768xf32> to vector<2x256xf32>
    %55 = vector.extract_strided_slice %37 {offsets = [0, 512], sizes = [2, 256], strides = [1, 1]} : vector<2x768xf32> to vector<2x256xf32>
    %56 = arith.addf %55, %3 : vector<2x256xf32>
    %57 = arith.mulf %45, %56 : vector<2x256xf32>
    %58 = arith.addf %54, %57 : vector<2x256xf32>
    %59 = math.tanh %58 : vector<2x256xf32>
    %cst_15 = arith.constant 1.000000e+00 : f32
    %60 = vector.broadcast %cst_15 : f32 to vector<2x256xf32>
    %61 = arith.subf %60, %53 : vector<2x256xf32>
    %62 = arith.mulf %61, %59 : vector<2x256xf32>
    %63 = arith.mulf %53, %34 : vector<2x256xf32>
    %64 = arith.addf %62, %63 : vector<2x256xf32>
    %c2 = arith.constant 2 : index
    %c0_16 = arith.constant 0 : index
    %c0_17 = arith.constant 0 : index
    %65 = vector.load %arg1[%c2, %c0_16, %c0_17] : memref<8x2x768xf32, #tpu.memory_space<vmem>>, vector<1x2x768xf32>
    %66 = vector.shape_cast %65 : vector<1x2x768xf32> to vector<2x768xf32>
    %cst_18 = arith.constant dense<0.000000e+00> : vector<2x768xf32>
    %67 = tpu.matmul %64, %0, %cst_18 {dimension_numbers = #tpu.dot_dimension_numbers<[1], [0], [0], [1], [0, 0, 1, 1], [], []>} : vector<2x256xf32>, vector<256x768xf32>, vector<2x768xf32> -> vector<2x768xf32>
    %68 = vector.extract_strided_slice %66 {offsets = [0, 0], sizes = [2, 256], strides = [1, 1]} : vector<2x768xf32> to vector<2x256xf32>
    %69 = vector.extract_strided_slice %67 {offsets = [0, 0], sizes = [2, 256], strides = [1, 1]} : vector<2x768xf32> to vector<2x256xf32>
    %70 = arith.addf %68, %69 : vector<2x256xf32>
    %71 = arith.negf %70 : vector<2x256xf32>
    %72 = math.exp %71 : vector<2x256xf32>
    %cst_19 = arith.constant 1.000000e+00 : f32
    %73 = vector.broadcast %cst_19 : f32 to vector<2x256xf32>
    %74 = arith.addf %73, %72 : vector<2x256xf32>
    %75 = arith.divf %73, %74 : vector<2x256xf32>
    %76 = vector.extract_strided_slice %66 {offsets = [0, 256], sizes = [2, 256], strides = [1, 1]} : vector<2x768xf32> to vector<2x256xf32>
    %77 = vector.extract_strided_slice %67 {offsets = [0, 256], sizes = [2, 256], strides = [1, 1]} : vector<2x768xf32> to vector<2x256xf32>
    %78 = arith.addf %76, %77 : vector<2x256xf32>
    %79 = arith.negf %78 : vector<2x256xf32>
    %80 = math.exp %79 : vector<2x256xf32>
    %cst_20 = arith.constant 1.000000e+00 : f32
    %81 = vector.broadcast %cst_20 : f32 to vector<2x256xf32>
    %82 = arith.addf %81, %80 : vector<2x256xf32>
    %83 = arith.divf %81, %82 : vector<2x256xf32>
    %84 = vector.extract_strided_slice %66 {offsets = [0, 512], sizes = [2, 256], strides = [1, 1]} : vector<2x768xf32> to vector<2x256xf32>
    %85 = vector.extract_strided_slice %67 {offsets = [0, 512], sizes = [2, 256], strides = [1, 1]} : vector<2x768xf32> to vector<2x256xf32>
    %86 = arith.addf %85, %3 : vector<2x256xf32>
    %87 = arith.mulf %75, %86 : vector<2x256xf32>
    %88 = arith.addf %84, %87 : vector<2x256xf32>
    %89 = math.tanh %88 : vector<2x256xf32>
    %cst_21 = arith.constant 1.000000e+00 : f32
    %90 = vector.broadcast %cst_21 : f32 to vector<2x256xf32>
    %91 = arith.subf %90, %83 : vector<2x256xf32>
    %92 = arith.mulf %91, %89 : vector<2x256xf32>
    %93 = arith.mulf %83, %64 : vector<2x256xf32>
    %94 = arith.addf %92, %93 : vector<2x256xf32>
    %c3 = arith.constant 3 : index
    %c0_22 = arith.constant 0 : index
    %c0_23 = arith.constant 0 : index
    %95 = vector.load %arg1[%c3, %c0_22, %c0_23] : memref<8x2x768xf32, #tpu.memory_space<vmem>>, vector<1x2x768xf32>
    %96 = vector.shape_cast %95 : vector<1x2x768xf32> to vector<2x768xf32>
    %cst_24 = arith.constant dense<0.000000e+00> : vector<2x768xf32>
    %97 = tpu.matmul %94, %0, %cst_24 {dimension_numbers = #tpu.dot_dimension_numbers<[1], [0], [0], [1], [0, 0, 1, 1], [], []>} : vector<2x256xf32>, vector<256x768xf32>, vector<2x768xf32> -> vector<2x768xf32>
    %98 = vector.extract_strided_slice %96 {offsets = [0, 0], sizes = [2, 256], strides = [1, 1]} : vector<2x768xf32> to vector<2x256xf32>
    %99 = vector.extract_strided_slice %97 {offsets = [0, 0], sizes = [2, 256], strides = [1, 1]} : vector<2x768xf32> to vector<2x256xf32>
    %100 = arith.addf %98, %99 : vector<2x256xf32>
    %101 = arith.negf %100 : vector<2x256xf32>
    %102 = math.exp %101 : vector<2x256xf32>
    %cst_25 = arith.constant 1.000000e+00 : f32
    %103 = vector.broadcast %cst_25 : f32 to vector<2x256xf32>
    %104 = arith.addf %103, %102 : vector<2x256xf32>
    %105 = arith.divf %103, %104 : vector<2x256xf32>
    %106 = vector.extract_strided_slice %96 {offsets = [0, 256], sizes = [2, 256], strides = [1, 1]} : vector<2x768xf32> to vector<2x256xf32>
    %107 = vector.extract_strided_slice %97 {offsets = [0, 256], sizes = [2, 256], strides = [1, 1]} : vector<2x768xf32> to vector<2x256xf32>
    %108 = arith.addf %106, %107 : vector<2x256xf32>
    %109 = arith.negf %108 : vector<2x256xf32>
    %110 = math.exp %109 : vector<2x256xf32>
    %cst_26 = arith.constant 1.000000e+00 : f32
    %111 = vector.broadcast %cst_26 : f32 to vector<2x256xf32>
    %112 = arith.addf %111, %110 : vector<2x256xf32>
    %113 = arith.divf %111, %112 : vector<2x256xf32>
    %114 = vector.extract_strided_slice %96 {offsets = [0, 512], sizes = [2, 256], strides = [1, 1]} : vector<2x768xf32> to vector<2x256xf32>
    %115 = vector.extract_strided_slice %97 {offsets = [0, 512], sizes = [2, 256], strides = [1, 1]} : vector<2x768xf32> to vector<2x256xf32>
    %116 = arith.addf %115, %3 : vector<2x256xf32>
    %117 = arith.mulf %105, %116 : vector<2x256xf32>
    %118 = arith.addf %114, %117 : vector<2x256xf32>
    %119 = math.tanh %118 : vector<2x256xf32>
    %cst_27 = arith.constant 1.000000e+00 : f32
    %120 = vector.broadcast %cst_27 : f32 to vector<2x256xf32>
    %121 = arith.subf %120, %113 : vector<2x256xf32>
    %122 = arith.mulf %121, %119 : vector<2x256xf32>
    %123 = arith.mulf %113, %94 : vector<2x256xf32>
    %124 = arith.addf %122, %123 : vector<2x256xf32>
    %c4 = arith.constant 4 : index
    %c0_28 = arith.constant 0 : index
    %c0_29 = arith.constant 0 : index
    %125 = vector.load %arg1[%c4, %c0_28, %c0_29] : memref<8x2x768xf32, #tpu.memory_space<vmem>>, vector<1x2x768xf32>
    %126 = vector.shape_cast %125 : vector<1x2x768xf32> to vector<2x768xf32>
    %cst_30 = arith.constant dense<0.000000e+00> : vector<2x768xf32>
    %127 = tpu.matmul %124, %0, %cst_30 {dimension_numbers = #tpu.dot_dimension_numbers<[1], [0], [0], [1], [0, 0, 1, 1], [], []>} : vector<2x256xf32>, vector<256x768xf32>, vector<2x768xf32> -> vector<2x768xf32>
    %128 = vector.extract_strided_slice %126 {offsets = [0, 0], sizes = [2, 256], strides = [1, 1]} : vector<2x768xf32> to vector<2x256xf32>
    %129 = vector.extract_strided_slice %127 {offsets = [0, 0], sizes = [2, 256], strides = [1, 1]} : vector<2x768xf32> to vector<2x256xf32>
    %130 = arith.addf %128, %129 : vector<2x256xf32>
    %131 = arith.negf %130 : vector<2x256xf32>
    %132 = math.exp %131 : vector<2x256xf32>
    %cst_31 = arith.constant 1.000000e+00 : f32
    %133 = vector.broadcast %cst_31 : f32 to vector<2x256xf32>
    %134 = arith.addf %133, %132 : vector<2x256xf32>
    %135 = arith.divf %133, %134 : vector<2x256xf32>
    %136 = vector.extract_strided_slice %126 {offsets = [0, 256], sizes = [2, 256], strides = [1, 1]} : vector<2x768xf32> to vector<2x256xf32>
    %137 = vector.extract_strided_slice %127 {offsets = [0, 256], sizes = [2, 256], strides = [1, 1]} : vector<2x768xf32> to vector<2x256xf32>
    %138 = arith.addf %136, %137 : vector<2x256xf32>
    %139 = arith.negf %138 : vector<2x256xf32>
    %140 = math.exp %139 : vector<2x256xf32>
    %cst_32 = arith.constant 1.000000e+00 : f32
    %141 = vector.broadcast %cst_32 : f32 to vector<2x256xf32>
    %142 = arith.addf %141, %140 : vector<2x256xf32>
    %143 = arith.divf %141, %142 : vector<2x256xf32>
    %144 = vector.extract_strided_slice %126 {offsets = [0, 512], sizes = [2, 256], strides = [1, 1]} : vector<2x768xf32> to vector<2x256xf32>
    %145 = vector.extract_strided_slice %127 {offsets = [0, 512], sizes = [2, 256], strides = [1, 1]} : vector<2x768xf32> to vector<2x256xf32>
    %146 = arith.addf %145, %3 : vector<2x256xf32>
    %147 = arith.mulf %135, %146 : vector<2x256xf32>
    %148 = arith.addf %144, %147 : vector<2x256xf32>
    %149 = math.tanh %148 : vector<2x256xf32>
    %cst_33 = arith.constant 1.000000e+00 : f32
    %150 = vector.broadcast %cst_33 : f32 to vector<2x256xf32>
    %151 = arith.subf %150, %143 : vector<2x256xf32>
    %152 = arith.mulf %151, %149 : vector<2x256xf32>
    %153 = arith.mulf %143, %124 : vector<2x256xf32>
    %154 = arith.addf %152, %153 : vector<2x256xf32>
    %c5 = arith.constant 5 : index
    %c0_34 = arith.constant 0 : index
    %c0_35 = arith.constant 0 : index
    %155 = vector.load %arg1[%c5, %c0_34, %c0_35] : memref<8x2x768xf32, #tpu.memory_space<vmem>>, vector<1x2x768xf32>
    %156 = vector.shape_cast %155 : vector<1x2x768xf32> to vector<2x768xf32>
    %cst_36 = arith.constant dense<0.000000e+00> : vector<2x768xf32>
    %157 = tpu.matmul %154, %0, %cst_36 {dimension_numbers = #tpu.dot_dimension_numbers<[1], [0], [0], [1], [0, 0, 1, 1], [], []>} : vector<2x256xf32>, vector<256x768xf32>, vector<2x768xf32> -> vector<2x768xf32>
    %158 = vector.extract_strided_slice %156 {offsets = [0, 0], sizes = [2, 256], strides = [1, 1]} : vector<2x768xf32> to vector<2x256xf32>
    %159 = vector.extract_strided_slice %157 {offsets = [0, 0], sizes = [2, 256], strides = [1, 1]} : vector<2x768xf32> to vector<2x256xf32>
    %160 = arith.addf %158, %159 : vector<2x256xf32>
    %161 = arith.negf %160 : vector<2x256xf32>
    %162 = math.exp %161 : vector<2x256xf32>
    %cst_37 = arith.constant 1.000000e+00 : f32
    %163 = vector.broadcast %cst_37 : f32 to vector<2x256xf32>
    %164 = arith.addf %163, %162 : vector<2x256xf32>
    %165 = arith.divf %163, %164 : vector<2x256xf32>
    %166 = vector.extract_strided_slice %156 {offsets = [0, 256], sizes = [2, 256], strides = [1, 1]} : vector<2x768xf32> to vector<2x256xf32>
    %167 = vector.extract_strided_slice %157 {offsets = [0, 256], sizes = [2, 256], strides = [1, 1]} : vector<2x768xf32> to vector<2x256xf32>
    %168 = arith.addf %166, %167 : vector<2x256xf32>
    %169 = arith.negf %168 : vector<2x256xf32>
    %170 = math.exp %169 : vector<2x256xf32>
    %cst_38 = arith.constant 1.000000e+00 : f32
    %171 = vector.broadcast %cst_38 : f32 to vector<2x256xf32>
    %172 = arith.addf %171, %170 : vector<2x256xf32>
    %173 = arith.divf %171, %172 : vector<2x256xf32>
    %174 = vector.extract_strided_slice %156 {offsets = [0, 512], sizes = [2, 256], strides = [1, 1]} : vector<2x768xf32> to vector<2x256xf32>
    %175 = vector.extract_strided_slice %157 {offsets = [0, 512], sizes = [2, 256], strides = [1, 1]} : vector<2x768xf32> to vector<2x256xf32>
    %176 = arith.addf %175, %3 : vector<2x256xf32>
    %177 = arith.mulf %165, %176 : vector<2x256xf32>
    %178 = arith.addf %174, %177 : vector<2x256xf32>
    %179 = math.tanh %178 : vector<2x256xf32>
    %cst_39 = arith.constant 1.000000e+00 : f32
    %180 = vector.broadcast %cst_39 : f32 to vector<2x256xf32>
    %181 = arith.subf %180, %173 : vector<2x256xf32>
    %182 = arith.mulf %181, %179 : vector<2x256xf32>
    %183 = arith.mulf %173, %154 : vector<2x256xf32>
    %184 = arith.addf %182, %183 : vector<2x256xf32>
    %c6 = arith.constant 6 : index
    %c0_40 = arith.constant 0 : index
    %c0_41 = arith.constant 0 : index
    %185 = vector.load %arg1[%c6, %c0_40, %c0_41] : memref<8x2x768xf32, #tpu.memory_space<vmem>>, vector<1x2x768xf32>
    %186 = vector.shape_cast %185 : vector<1x2x768xf32> to vector<2x768xf32>
    %cst_42 = arith.constant dense<0.000000e+00> : vector<2x768xf32>
    %187 = tpu.matmul %184, %0, %cst_42 {dimension_numbers = #tpu.dot_dimension_numbers<[1], [0], [0], [1], [0, 0, 1, 1], [], []>} : vector<2x256xf32>, vector<256x768xf32>, vector<2x768xf32> -> vector<2x768xf32>
    %188 = vector.extract_strided_slice %186 {offsets = [0, 0], sizes = [2, 256], strides = [1, 1]} : vector<2x768xf32> to vector<2x256xf32>
    %189 = vector.extract_strided_slice %187 {offsets = [0, 0], sizes = [2, 256], strides = [1, 1]} : vector<2x768xf32> to vector<2x256xf32>
    %190 = arith.addf %188, %189 : vector<2x256xf32>
    %191 = arith.negf %190 : vector<2x256xf32>
    %192 = math.exp %191 : vector<2x256xf32>
    %cst_43 = arith.constant 1.000000e+00 : f32
    %193 = vector.broadcast %cst_43 : f32 to vector<2x256xf32>
    %194 = arith.addf %193, %192 : vector<2x256xf32>
    %195 = arith.divf %193, %194 : vector<2x256xf32>
    %196 = vector.extract_strided_slice %186 {offsets = [0, 256], sizes = [2, 256], strides = [1, 1]} : vector<2x768xf32> to vector<2x256xf32>
    %197 = vector.extract_strided_slice %187 {offsets = [0, 256], sizes = [2, 256], strides = [1, 1]} : vector<2x768xf32> to vector<2x256xf32>
    %198 = arith.addf %196, %197 : vector<2x256xf32>
    %199 = arith.negf %198 : vector<2x256xf32>
    %200 = math.exp %199 : vector<2x256xf32>
    %cst_44 = arith.constant 1.000000e+00 : f32
    %201 = vector.broadcast %cst_44 : f32 to vector<2x256xf32>
    %202 = arith.addf %201, %200 : vector<2x256xf32>
    %203 = arith.divf %201, %202 : vector<2x256xf32>
    %204 = vector.extract_strided_slice %186 {offsets = [0, 512], sizes = [2, 256], strides = [1, 1]} : vector<2x768xf32> to vector<2x256xf32>
    %205 = vector.extract_strided_slice %187 {offsets = [0, 512], sizes = [2, 256], strides = [1, 1]} : vector<2x768xf32> to vector<2x256xf32>
    %206 = arith.addf %205, %3 : vector<2x256xf32>
    %207 = arith.mulf %195, %206 : vector<2x256xf32>
    %208 = arith.addf %204, %207 : vector<2x256xf32>
    %209 = math.tanh %208 : vector<2x256xf32>
    %cst_45 = arith.constant 1.000000e+00 : f32
    %210 = vector.broadcast %cst_45 : f32 to vector<2x256xf32>
    %211 = arith.subf %210, %203 : vector<2x256xf32>
    %212 = arith.mulf %211, %209 : vector<2x256xf32>
    %213 = arith.mulf %203, %184 : vector<2x256xf32>
    %214 = arith.addf %212, %213 : vector<2x256xf32>
    %c7 = arith.constant 7 : index
    %c0_46 = arith.constant 0 : index
    %c0_47 = arith.constant 0 : index
    %215 = vector.load %arg1[%c7, %c0_46, %c0_47] : memref<8x2x768xf32, #tpu.memory_space<vmem>>, vector<1x2x768xf32>
    %216 = vector.shape_cast %215 : vector<1x2x768xf32> to vector<2x768xf32>
    %cst_48 = arith.constant dense<0.000000e+00> : vector<2x768xf32>
    %217 = tpu.matmul %214, %0, %cst_48 {dimension_numbers = #tpu.dot_dimension_numbers<[1], [0], [0], [1], [0, 0, 1, 1], [], []>} : vector<2x256xf32>, vector<256x768xf32>, vector<2x768xf32> -> vector<2x768xf32>
    %218 = vector.extract_strided_slice %216 {offsets = [0, 0], sizes = [2, 256], strides = [1, 1]} : vector<2x768xf32> to vector<2x256xf32>
    %219 = vector.extract_strided_slice %217 {offsets = [0, 0], sizes = [2, 256], strides = [1, 1]} : vector<2x768xf32> to vector<2x256xf32>
    %220 = arith.addf %218, %219 : vector<2x256xf32>
    %221 = arith.negf %220 : vector<2x256xf32>
    %222 = math.exp %221 : vector<2x256xf32>
    %cst_49 = arith.constant 1.000000e+00 : f32
    %223 = vector.broadcast %cst_49 : f32 to vector<2x256xf32>
    %224 = arith.addf %223, %222 : vector<2x256xf32>
    %225 = arith.divf %223, %224 : vector<2x256xf32>
    %226 = vector.extract_strided_slice %216 {offsets = [0, 256], sizes = [2, 256], strides = [1, 1]} : vector<2x768xf32> to vector<2x256xf32>
    %227 = vector.extract_strided_slice %217 {offsets = [0, 256], sizes = [2, 256], strides = [1, 1]} : vector<2x768xf32> to vector<2x256xf32>
    %228 = arith.addf %226, %227 : vector<2x256xf32>
    %229 = arith.negf %228 : vector<2x256xf32>
    %230 = math.exp %229 : vector<2x256xf32>
    %cst_50 = arith.constant 1.000000e+00 : f32
    %231 = vector.broadcast %cst_50 : f32 to vector<2x256xf32>
    %232 = arith.addf %231, %230 : vector<2x256xf32>
    %233 = arith.divf %231, %232 : vector<2x256xf32>
    %234 = vector.extract_strided_slice %216 {offsets = [0, 512], sizes = [2, 256], strides = [1, 1]} : vector<2x768xf32> to vector<2x256xf32>
    %235 = vector.extract_strided_slice %217 {offsets = [0, 512], sizes = [2, 256], strides = [1, 1]} : vector<2x768xf32> to vector<2x256xf32>
    %236 = arith.addf %235, %3 : vector<2x256xf32>
    %237 = arith.mulf %225, %236 : vector<2x256xf32>
    %238 = arith.addf %234, %237 : vector<2x256xf32>
    %239 = math.tanh %238 : vector<2x256xf32>
    %cst_51 = arith.constant 1.000000e+00 : f32
    %240 = vector.broadcast %cst_51 : f32 to vector<2x256xf32>
    %241 = arith.subf %240, %233 : vector<2x256xf32>
    %242 = arith.mulf %241, %239 : vector<2x256xf32>
    %243 = arith.mulf %233, %214 : vector<2x256xf32>
    %244 = arith.addf %242, %243 : vector<2x256xf32>
    %cst_52 = arith.constant 0.000000e+00 : f32
    %245 = vector.broadcast %cst_52 : f32 to vector<2x256xf32>
    %246 = arith.maximumf %244, %245 : vector<2x256xf32>
    %c0_53 = arith.constant 0 : index
    %c0_54 = arith.constant 0 : index
    %247 = vector.load %arg6[%c0_53, %c0_54] : memref<2x256xf32, #tpu.memory_space<vmem>>, vector<2x256xf32>
    tpu.vector_store %arg6[%c0_53, %c0_54], %246 {strides = array<i32>} : memref<2x256xf32, #tpu.memory_space<vmem>>, vector<2x256xf32>,
    %c0_55 = arith.constant 0 : index
    %c0_56 = arith.constant 0 : index
    %248 = vector.load %arg4[%c0_55, %c0_56] : memref<256x5xf32, #tpu.memory_space<vmem>>, vector<256x5xf32>
    %cst_57 = arith.constant dense<0.000000e+00> : vector<2x5xf32>
    %249 = tpu.matmul %246, %248, %cst_57 {dimension_numbers = #tpu.dot_dimension_numbers<[1], [0], [0], [1], [0, 0, 1, 1], [], []>} : vector<2x256xf32>, vector<256x5xf32>, vector<2x5xf32> -> vector<2x5xf32>
    %c0_58 = arith.constant 0 : index
    %c0_59 = arith.constant 0 : index
    %250 = vector.load %arg5[%c0_58, %c0_59] : memref<1x5xf32, #tpu.memory_space<vmem>>, vector<1x5xf32>
    %251 = vector.broadcast %250 : vector<1x5xf32> to vector<2x5xf32>
    %252 = arith.addf %249, %251 : vector<2x5xf32>
    %253 = vector.extract_strided_slice %252 {offsets = [0, 0], sizes = [2, 4], strides = [1, 1]} : vector<2x5xf32> to vector<2x4xf32>
    %254 = vector.extract_strided_slice %252 {offsets = [0, 4], sizes = [2, 1], strides = [1, 1]} : vector<2x5xf32> to vector<2x1xf32>
    %c0_60 = arith.constant 0 : index
    %c0_61 = arith.constant 0 : index
    %255 = vector.load %arg8[%c0_60, %c0_61] : memref<2x1xf32, #tpu.memory_space<vmem>>, vector<2x1xf32>
    tpu.vector_store %arg8[%c0_60, %c0_61], %254 {strides = array<i32>} : memref<2x1xf32, #tpu.memory_space<vmem>>, vector<2x1xf32>,
    %cst_62 = arith.constant dense<0xFF800000> : vector<2xf32>
    %256 = vector.multi_reduction <maximumf>, %253, %cst_62 [1] : vector<2x4xf32> to vector<2xf32>
    %257 = vector.shape_cast %256 : vector<2xf32> to vector<2x1xf32>
    %258 = vector.broadcast %257 : vector<2x1xf32> to vector<2x4xf32>
    %259 = arith.subf %253, %258 : vector<2x4xf32>
    %260 = math.exp %259 : vector<2x4xf32>
    %cst_63 = arith.constant dense<0.000000e+00> : vector<2xf32>
    %261 = vector.multi_reduction <add>, %260, %cst_63 [1] : vector<2x4xf32> to vector<2xf32>
    %262 = vector.shape_cast %261 : vector<2xf32> to vector<2x1xf32>
    %263 = math.log %262 : vector<2x1xf32>
    %264 = arith.addf %257, %263 : vector<2x1xf32>
    %265 = vector.broadcast %264 : vector<2x1xf32> to vector<2x4xf32>
    %266 = arith.subf %253, %265 : vector<2x4xf32>
    %267 = tpu.iota {dimensions = array<i32: 1>} : vector<1x4xi32>
    %c0_64 = arith.constant 0 : index
    %c0_65 = arith.constant 0 : index
    %268 = memref.load %arg0[%c0_64, %c0_65] : memref<2x1xi32, #tpu.memory_space<smem>>
    %269 = vector.broadcast %268 : i32 to vector<1x4xi32>
    %270 = arith.cmpi eq, %267, %269 : vector<1x4xi32>
    %271 = vector.extract_strided_slice %266 {offsets = [0, 0], sizes = [1, 4], strides = [1, 1]} : vector<2x4xf32> to vector<1x4xf32>
    %cst_66 = arith.constant 0.000000e+00 : f32
    %272 = vector.broadcast %cst_66 : f32 to vector<1x4xf32>
    %273 = arith.select %270, %271, %272 : vector<1x4xi1>, vector<1x4xf32>
    %cst_67 = arith.constant dense<0.000000e+00> : vector<1xf32>
    %274 = vector.multi_reduction <add>, %273, %cst_67 [1] : vector<1x4xf32> to vector<1xf32>
    %275 = vector.shape_cast %274 : vector<1xf32> to vector<1x1xf32>
    %c0_68 = arith.constant 0 : index
    %c0_69 = arith.constant 0 : index
    %276 = vector.load %arg7[%c0_68, %c0_69] : memref<2x1xf32, #tpu.memory_space<vmem>>, vector<1x1xf32>
    tpu.vector_store %arg7[%c0_68, %c0_69], %275 {strides = array<i32>} : memref<2x1xf32, #tpu.memory_space<vmem>>, vector<1x1xf32>,
    %c1_70 = arith.constant 1 : index
    %c0_71 = arith.constant 0 : index
    %277 = memref.load %arg0[%c1_70, %c0_71] : memref<2x1xi32, #tpu.memory_space<smem>>
    %278 = vector.broadcast %277 : i32 to vector<1x4xi32>
    %279 = arith.cmpi eq, %267, %278 : vector<1x4xi32>
    %280 = vector.extract_strided_slice %266 {offsets = [1, 0], sizes = [1, 4], strides = [1, 1]} : vector<2x4xf32> to vector<1x4xf32>
    %cst_72 = arith.constant 0.000000e+00 : f32
    %281 = vector.broadcast %cst_72 : f32 to vector<1x4xf32>
    %282 = arith.select %279, %280, %281 : vector<1x4xi1>, vector<1x4xf32>
    %cst_73 = arith.constant dense<0.000000e+00> : vector<1xf32>
    %283 = vector.multi_reduction <add>, %282, %cst_73 [1] : vector<1x4xf32> to vector<1xf32>
    %284 = vector.shape_cast %283 : vector<1xf32> to vector<1x1xf32>
    %c1_74 = arith.constant 1 : index
    %c0_75 = arith.constant 0 : index
    %285 = vector.load %arg7[%c1_74, %c0_75] : memref<2x1xf32, #tpu.memory_space<vmem>>, vector<1x1xf32>
    tpu.vector_store %arg7[%c1_74, %c0_75], %284 {strides = array<i32>} : memref<2x1xf32, #tpu.memory_space<vmem>>, vector<1x1xf32>,
    return
  }
}

</mosaic_0001>

<llo_original>
// kernel: tpu_custom_call.1
$region0: #{tpu_custom_call.1}
  #allocation0 [shape = 'u32[]', space=smem, size = 0x4, offset = 0x4, fixed_abs, tag = 'smem constant byte address 0x4 - core index']
  #allocation1 [shape = 'u32[144,128]{1,0:T(1,128)}', space=vmem, size = 0x12000, scoped, tag = 'internal scratch']
  %s0 = inlined_call_operand.vmem [shape: s32[2,1], index: 0, kind: input, shape index: {}]
  %s1 = inlined_call_operand.vmem [shape: f32[8,2,768], index: 1, kind: input, shape index: {}]
  %s2 = inlined_call_operand.hbm [shape: f32[256,768], index: 2, kind: input, shape index: {}]
  %s3 = inlined_call_operand.vmem [shape: f32[1,256], index: 3, kind: input, shape index: {}]
  %s4 = inlined_call_operand.vmem [shape: f32[256,5], index: 4, kind: input, shape index: {}]
  %s5 = inlined_call_operand.vmem [shape: f32[1,5], index: 5, kind: input, shape index: {}]
  %s6 = inlined_call_operand.hbm [shape: f32[2,256], index: 6, kind: output, shape index: {0}]
  %s7 = inlined_call_operand.vmem [shape: f32[2,1], index: 7, kind: output, shape index: {1}]
  %s8 = inlined_call_operand.vmem [shape: f32[2,1], index: 8, kind: output, shape index: {2}]
  %9 = xla_tuple %s6, %s7, %s8
  %s10 = sld [smem:[#allocation0]]
  $region58: #{tpu_custom_call.1} parent=0
    _
  %s12 = ssub.s32 1, %s10
  %s13 = scalar_select 0, %s12, %s10
  $region1: #{tpu_custom_call.1} parent=0
    #allocation2 [shape = 'u8[1024]{0}', space=smem, size = 0x400, scoped, tag = 'input window, operand 0, single buffered']
    #allocation3 [shape = 's32[1]{0}', space=sflag, size = 0x4, scoped, tag = 'scoped memory for tpu_custom_call.1']
    #allocation4 [shape = 's32[1]{0}', space=sflag, size = 0x4, scoped, tag = 'scoped memory for tpu_custom_call.1']
    #allocation5 [shape = 's32[1]{0}', space=sflag, size = 0x4, scoped, tag = 'scoped memory for tpu_custom_call.1']
    #allocation6 [shape = 'u8[786432]{0}', space=vmem, size = 0xc0000, scoped, tag = 'input window, operand 2, single buffered']
    #allocation7 [shape = 'u8[2048]{0}', space=vmem, size = 0x800, scoped, tag = 'output window, operand 0, single buffered']
    %14 = vsyncpa [#allocation5], 0
    %15 = vsyncpa [#allocation3], 0
    %16 = vsyncpa [#allocation4], 0
    // Predicated region
    $region2: #{tpu_custom_call.1} parent=1 // pred_check
      _
    $region3: #{tpu_custom_call.1} parent=1 // pred_check_branch
      %18 = sbr.rel (0) target = $region5
    $region4: #{tpu_custom_call.1} parent=1 // pred_region
      %s20 = ssub.s32 32, 32
      %21 = vsyncadd [#allocation5], %s20
      %s23 = sshll.u32 %s0, 4
      %s24 = int_to_ptr.vmem [resolvable:$true] %s23
      %26 = dma.vmem_to_smem %s24, 32, [#allocation2], [#allocation5]
    $region5: #{tpu_custom_call.1} parent=1 // pred_fallthru
      _
    // Predicated region
    $region6: #{tpu_custom_call.1} parent=1 // pred_check
      _
    $region7: #{tpu_custom_call.1} parent=1 // pred_check_branch
      %28 = sbr.rel (0) target = $region9
    $region8: #{tpu_custom_call.1} parent=1 // pred_region
      _
    $region9: #{tpu_custom_call.1} parent=1 // pred_fallthru
      _
    // Predicated region
    $region10: #{tpu_custom_call.1} parent=1 // pred_check
      _
    $region11: #{tpu_custom_call.1} parent=1 // pred_check_branch
      %30 = sbr.rel (0) target = $region13
    $region12: #{tpu_custom_call.1} parent=1 // pred_region
      %s32 = ssub.s32 24576, 24576
      %33 = vsyncadd [#allocation3], %s32
      %s34 = sshll.u32 [#allocation6], 4
      %s35 = int_to_ptr.vmem [resolvable:$true] %s34
      %40 = dma.hbm_to_vmem [thread:$0]  %s2, 24576, %s35, [#allocation3], 768, 768, 48
    $region13: #{tpu_custom_call.1} parent=1 // pred_fallthru
      _
    // Predicated region
    $region14: #{tpu_custom_call.1} parent=1 // pred_check
      _
    $region15: #{tpu_custom_call.1} parent=1 // pred_check_branch
      %42 = sbr.rel (0) target = $region17
    $region16: #{tpu_custom_call.1} parent=1 // pred_region
      _
    $region17: #{tpu_custom_call.1} parent=1 // pred_fallthru
      _
    // Predicated region
    $region18: #{tpu_custom_call.1} parent=1 // pred_check
      _
    $region19: #{tpu_custom_call.1} parent=1 // pred_check_branch
      %44 = sbr.rel (0) target = $region21
    $region20: #{tpu_custom_call.1} parent=1 // pred_region
      _
    $region21: #{tpu_custom_call.1} parent=1 // pred_fallthru
      _
    // Predicated region
    $region22: #{tpu_custom_call.1} parent=1 // pred_check
      _
    $region23: #{tpu_custom_call.1} parent=1 // pred_check_branch
      %46 = sbr.rel (0) target = $region25
    $region24: #{tpu_custom_call.1} parent=1 // pred_region
      _
    $region25: #{tpu_custom_call.1} parent=1 // pred_fallthru
      _
    // Predicated region
    $region26: #{tpu_custom_call.1} parent=1 // pred_check
      _
    $region27: #{tpu_custom_call.1} parent=1 // pred_check_branch
      %48 = sbr.rel (0) target = $region29
    $region28: #{tpu_custom_call.1} parent=1 // pred_region
      %49 = dma.done [#allocation5], 32
    $region29: #{tpu_custom_call.1} parent=1 // pred_fallthru
      _
    // Predicated region
    $region30: #{tpu_custom_call.1} parent=1 // pred_check
      _
    $region31: #{tpu_custom_call.1} parent=1 // pred_check_branch
      %51 = sbr.rel (0) target = $region33
    $region32: #{tpu_custom_call.1} parent=1 // pred_region
      %52 = dma.done [#allocation3], 24576
    $region33: #{tpu_custom_call.1} parent=1 // pred_fallthru
      _
    %53 = sfence
    %v54 = vld [vmem:[#allocation6] sm:$0xff]
    %v55 = vld [vmem:[#allocation6 + $0x8] sm:$0xff]
    %v56 = vld [vmem:[#allocation6 + $0x10] sm:$0xff]
    %v57 = vld [vmem:[#allocation6 + $0x18] sm:$0xff]
    %v58 = vld [vmem:[#allocation6 + $0x20] sm:$0xff]
    %v59 = vld [vmem:[#allocation6 + $0x28] sm:$0xff]
    %v60 = vld [vmem:[#allocation6 + $0x30] sm:$0xff]
    %v61 = vld [vmem:[#allocation6 + $0x38] sm:$0xff]
    %v62 = vld [vmem:[#allocation6 + $0x40] sm:$0xff]
    %v63 = vld [vmem:[#allocation6 + $0x48] sm:$0xff]
    %v64 = vld [vmem:[#allocation6 + $0x50] sm:$0xff]
    %v65 = vld [vmem:[#allocation6 + $0x58] sm:$0xff]
    %v66 = vld [vmem:[#allocation6 + $0x60] sm:$0xff]
    %v67 = vld [vmem:[#allocation6 + $0x68] sm:$0xff]
    %v68 = vld [vmem:[#allocation6 + $0x70] sm:$0xff]
    %v69 = vld [vmem:[#allocation6 + $0x78] sm:$0xff]
    %v70 = vld [vmem:[#allocation6 + $0x80] sm:$0xff]
    %v71 = vld [vmem:[#allocation6 + $0x88] sm:$0xff]
    %v72 = vld [vmem:[#allocation6 + $0x90] sm:$0xff]
    %v73 = vld [vmem:[#allocation6 + $0x98] sm:$0xff]
    %v74 = vld [vmem:[#allocation6 + $0xa0] sm:$0xff]
    %v75 = vld [vmem:[#allocation6 + $0xa8] sm:$0xff]
    %v76 = vld [vmem:[#allocation6 + $0xb0] sm:$0xff]
    %v77 = vld [vmem:[#allocation6 + $0xb8] sm:$0xff]
    %v78 = vld [vmem:[#allocation6 + $0xc0] sm:$0xff]
    %v79 = vld [vmem:[#allocation6 + $0xc8] sm:$0xff]
    %v80 = vld [vmem:[#allocation6 + $0xd0] sm:$0xff]
    %v81 = vld [vmem:[#allocation6 + $0xd8] sm:$0xff]
    %v82 = vld [vmem:[#allocation6 + $0xe0] sm:$0xff]
    %v83 = vld [vmem:[#allocation6 + $0xe8] sm:$0xff]
    %v84 = vld [vmem:[#allocation6 + $0xf0] sm:$0xff]
    %v85 = vld [vmem:[#allocation6 + $0xf8] sm:$0xff]
    %v86 = vld [vmem:[#allocation6 + $0x100] sm:$0xff]
    %v87 = vld [vmem:[#allocation6 + $0x108] sm:$0xff]
    %v88 = vld [vmem:[#allocation6 + $0x110] sm:$0xff]
    %v89 = vld [vmem:[#allocation6 + $0x118] sm:$0xff]
    %v90 = vld [vmem:[#allocation6 + $0x120] sm:$0xff]
    %v91 = vld [vmem:[#allocation6 + $0x128] sm:$0xff]
    %v92 = vld [vmem:[#allocation6 + $0x130] sm:$0xff]
    %v93 = vld [vmem:[#allocation6 + $0x138] sm:$0xff]
    %v94 = vld [vmem:[#allocation6 + $0x140] sm:$0xff]
    %v95 = vld [vmem:[#allocation6 + $0x148] sm:$0xff]
    %v96 = vld [vmem:[#allocation6 + $0x150] sm:$0xff]
    %v97 = vld [vmem:[#allocation6 + $0x158] sm:$0xff]
    %v98 = vld [vmem:[#allocation6 + $0x160] sm:$0xff]
    %v99 = vld [vmem:[#allocation6 + $0x168] sm:$0xff]
    %v100 = vld [vmem:[#allocation6 + $0x170] sm:$0xff]
    %v101 = vld [vmem:[#allocation6 + $0x178] sm:$0xff]
    %v102 = vld [vmem:[#allocation6 + $0x180] sm:$0xff]
    %v103 = vld [vmem:[#allocation6 + $0x188] sm:$0xff]
    %v104 = vld [vmem:[#allocation6 + $0x190] sm:$0xff]
    %v105 = vld [vmem:[#allocation6 + $0x198] sm:$0xff]
    %v106 = vld [vmem:[#allocation6 + $0x1a0] sm:$0xff]
    %v107 = vld [vmem:[#allocation6 + $0x1a8] sm:$0xff]
    %v108 = vld [vmem:[#allocation6 + $0x1b0] sm:$0xff]
    %v109 = vld [vmem:[#allocation6 + $0x1b8] sm:$0xff]
    %v110 = vld [vmem:[#allocation6 + $0x1c0] sm:$0xff]
    %v111 = vld [vmem:[#allocation6 + $0x1c8] sm:$0xff]
    %v112 = vld [vmem:[#allocation6 + $0x1d0] sm:$0xff]
    %v113 = vld [vmem:[#allocation6 + $0x1d8] sm:$0xff]
    %v114 = vld [vmem:[#allocation6 + $0x1e0] sm:$0xff]
    %v115 = vld [vmem:[#allocation6 + $0x1e8] sm:$0xff]
    %v116 = vld [vmem:[#allocation6 + $0x1f0] sm:$0xff]
    %v117 = vld [vmem:[#allocation6 + $0x1f8] sm:$0xff]
    %v118 = vld [vmem:[#allocation6 + $0x200] sm:$0xff]
    %v119 = vld [vmem:[#allocation6 + $0x208] sm:$0xff]
    %v120 = vld [vmem:[#allocation6 + $0x210] sm:$0xff]
    %v121 = vld [vmem:[#allocation6 + $0x218] sm:$0xff]
    %v122 = vld [vmem:[#allocation6 + $0x220] sm:$0xff]
    %v123 = vld [vmem:[#allocation6 + $0x228] sm:$0xff]
    %v124 = vld [vmem:[#allocation6 + $0x230] sm:$0xff]
    %v125 = vld [vmem:[#allocation6 + $0x238] sm:$0xff]
    %v126 = vld [vmem:[#allocation6 + $0x240] sm:$0xff]
    %v127 = vld [vmem:[#allocation6 + $0x248] sm:$0xff]
    %v128 = vld [vmem:[#allocation6 + $0x250] sm:$0xff]
    %v129 = vld [vmem:[#allocation6 + $0x258] sm:$0xff]
    %v130 = vld [vmem:[#allocation6 + $0x260] sm:$0xff]
    %v131 = vld [vmem:[#allocation6 + $0x268] sm:$0xff]
    %v132 = vld [vmem:[#allocation6 + $0x270] sm:$0xff]
    %v133 = vld [vmem:[#allocation6 + $0x278] sm:$0xff]
    %v134 = vld [vmem:[#allocation6 + $0x280] sm:$0xff]
    %v135 = vld [vmem:[#allocation6 + $0x288] sm:$0xff]
    %v136 = vld [vmem:[#allocation6 + $0x290] sm:$0xff]
    %v137 = vld [vmem:[#allocation6 + $0x298] sm:$0xff]
    %v138 = vld [vmem:[#allocation6 + $0x2a0] sm:$0xff]
    %v139 = vld [vmem:[#allocation6 + $0x2a8] sm:$0xff]
    %v140 = vld [vmem:[#allocation6 + $0x2b0] sm:$0xff]
    %v141 = vld [vmem:[#allocation6 + $0x2b8] sm:$0xff]
    %v142 = vld [vmem:[#allocation6 + $0x2c0] sm:$0xff]
    %v143 = vld [vmem:[#allocation6 + $0x2c8] sm:$0xff]
    %v144 = vld [vmem:[#allocation6 + $0x2d0] sm:$0xff]
    %v145 = vld [vmem:[#allocation6 + $0x2d8] sm:$0xff]
    %v146 = vld [vmem:[#allocation6 + $0x2e0] sm:$0xff]
    %v147 = vld [vmem:[#allocation6 + $0x2e8] sm:$0xff]
    %v148 = vld [vmem:[#allocation6 + $0x2f0] sm:$0xff]
    %v149 = vld [vmem:[#allocation6 + $0x2f8] sm:$0xff]
    %v150 = vld [vmem:[#allocation6 + $0x300] sm:$0xff]
    %v151 = vld [vmem:[#allocation6 + $0x308] sm:$0xff]
    %v152 = vld [vmem:[#allocation6 + $0x310] sm:$0xff]
    %v153 = vld [vmem:[#allocation6 + $0x318] sm:$0xff]
    %v154 = vld [vmem:[#allocation6 + $0x320] sm:$0xff]
    %v155 = vld [vmem:[#allocation6 + $0x328] sm:$0xff]
    %v156 = vld [vmem:[#allocation6 + $0x330] sm:$0xff]
    %v157 = vld [vmem:[#allocation6 + $0x338] sm:$0xff]
    %v158 = vld [vmem:[#allocation6 + $0x340] sm:$0xff]
    %v159 = vld [vmem:[#allocation6 + $0x348] sm:$0xff]
    %v160 = vld [vmem:[#allocation6 + $0x350] sm:$0xff]
    %v161 = vld [vmem:[#allocation6 + $0x358] sm:$0xff]
    %v162 = vld [vmem:[#allocation6 + $0x360] sm:$0xff]
    %v163 = vld [vmem:[#allocation6 + $0x368] sm:$0xff]
    %v164 = vld [vmem:[#allocation6 + $0x370] sm:$0xff]
    %v165 = vld [vmem:[#allocation6 + $0x378] sm:$0xff]
    %v166 = vld [vmem:[#allocation6 + $0x380] sm:$0xff]
    %v167 = vld [vmem:[#allocation6 + $0x388] sm:$0xff]
    %v168 = vld [vmem:[#allocation6 + $0x390] sm:$0xff]
    %v169 = vld [vmem:[#allocation6 + $0x398] sm:$0xff]
    %v170 = vld [vmem:[#allocation6 + $0x3a0] sm:$0xff]
    %v171 = vld [vmem:[#allocation6 + $0x3a8] sm:$0xff]
    %v172 = vld [vmem:[#allocation6 + $0x3b0] sm:$0xff]
    %v173 = vld [vmem:[#allocation6 + $0x3b8] sm:$0xff]
    %v174 = vld [vmem:[#allocation6 + $0x3c0] sm:$0xff]
    %v175 = vld [vmem:[#allocation6 + $0x3c8] sm:$0xff]
    %v176 = vld [vmem:[#allocation6 + $0x3d0] sm:$0xff]
    %v177 = vld [vmem:[#allocation6 + $0x3d8] sm:$0xff]
    %v178 = vld [vmem:[#allocation6 + $0x3e0] sm:$0xff]
    %v179 = vld [vmem:[#allocation6 + $0x3e8] sm:$0xff]
    %v180 = vld [vmem:[#allocation6 + $0x3f0] sm:$0xff]
    %v181 = vld [vmem:[#allocation6 + $0x3f8] sm:$0xff]
    %v182 = vld [vmem:[#allocation6 + $0x400] sm:$0xff]
    %v183 = vld [vmem:[#allocation6 + $0x408] sm:$0xff]
    %v184 = vld [vmem:[#allocation6 + $0x410] sm:$0xff]
    %v185 = vld [vmem:[#allocation6 + $0x418] sm:$0xff]
    %v186 = vld [vmem:[#allocation6 + $0x420] sm:$0xff]
    %v187 = vld [vmem:[#allocation6 + $0x428] sm:$0xff]
    %v188 = vld [vmem:[#allocation6 + $0x430] sm:$0xff]
    %v189 = vld [vmem:[#allocation6 + $0x438] sm:$0xff]
    %v190 = vld [vmem:[#allocation6 + $0x440] sm:$0xff]
    %v191 = vld [vmem:[#allocation6 + $0x448] sm:$0xff]
    %v192 = vld [vmem:[#allocation6 + $0x450] sm:$0xff]
    %v193 = vld [vmem:[#allocation6 + $0x458] sm:$0xff]
    %v194 = vld [vmem:[#allocation6 + $0x460] sm:$0xff]
    %v195 = vld [vmem:[#allocation6 + $0x468] sm:$0xff]
    %v196 = vld [vmem:[#allocation6 + $0x470] sm:$0xff]
    %v197 = vld [vmem:[#allocation6 + $0x478] sm:$0xff]
    %v198 = vld [vmem:[#allocation6 + $0x480] sm:$0xff]
    %v199 = vld [vmem:[#allocation6 + $0x488] sm:$0xff]
    %v200 = vld [vmem:[#allocation6 + $0x490] sm:$0xff]
    %v201 = vld [vmem:[#allocation6 + $0x498] sm:$0xff]
    %v202 = vld [vmem:[#allocation6 + $0x4a0] sm:$0xff]
    %v203 = vld [vmem:[#allocation6 + $0x4a8] sm:$0xff]
    %v204 = vld [vmem:[#allocation6 + $0x4b0] sm:$0xff]
    %v205 = vld [vmem:[#allocation6 + $0x4b8] sm:$0xff]
    %v206 = vld [vmem:[#allocation6 + $0x4c0] sm:$0xff]
    %v207 = vld [vmem:[#allocation6 + $0x4c8] sm:$0xff]
    %v208 = vld [vmem:[#allocation6 + $0x4d0] sm:$0xff]
    %v209 = vld [vmem:[#allocation6 + $0x4d8] sm:$0xff]
    %v210 = vld [vmem:[#allocation6 + $0x4e0] sm:$0xff]
    %v211 = vld [vmem:[#allocation6 + $0x4e8] sm:$0xff]
    %v212 = vld [vmem:[#allocation6 + $0x4f0] sm:$0xff]
    %v213 = vld [vmem:[#allocation6 + $0x4f8] sm:$0xff]
    %v214 = vld [vmem:[#allocation6 + $0x500] sm:$0xff]
    %v215 = vld [vmem:[#allocation6 + $0x508] sm:$0xff]
    %v216 = vld [vmem:[#allocation6 + $0x510] sm:$0xff]
    %v217 = vld [vmem:[#allocation6 + $0x518] sm:$0xff]
    %v218 = vld [vmem:[#allocation6 + $0x520] sm:$0xff]
    %v219 = vld [vmem:[#allocation6 + $0x528] sm:$0xff]
    %v220 = vld [vmem:[#allocation6 + $0x530] sm:$0xff]
    %v221 = vld [vmem:[#allocation6 + $0x538] sm:$0xff]
    %v222 = vld [vmem:[#allocation6 + $0x540] sm:$0xff]
    %v223 = vld [vmem:[#allocation6 + $0x548] sm:$0xff]
    %v224 = vld [vmem:[#allocation6 + $0x550] sm:$0xff]
    %v225 = vld [vmem:[#allocation6 + $0x558] sm:$0xff]
    %v226 = vld [vmem:[#allocation6 + $0x560] sm:$0xff]
    %v227 = vld [vmem:[#allocation6 + $0x568] sm:$0xff]
    %v228 = vld [vmem:[#allocation6 + $0x570] sm:$0xff]
    %v229 = vld [vmem:[#allocation6 + $0x578] sm:$0xff]
    %v230 = vld [vmem:[#allocation6 + $0x580] sm:$0xff]
    %v231 = vld [vmem:[#allocation6 + $0x588] sm:$0xff]
    %v232 = vld [vmem:[#allocation6 + $0x590] sm:$0xff]
    %v233 = vld [vmem:[#allocation6 + $0x598] sm:$0xff]
    %v234 = vld [vmem:[#allocation6 + $0x5a0] sm:$0xff]
    %v235 = vld [vmem:[#allocation6 + $0x5a8] sm:$0xff]
    %v236 = vld [vmem:[#allocation6 + $0x5b0] sm:$0xff]
    %v237 = vld [vmem:[#allocation6 + $0x5b8] sm:$0xff]
    %v238 = vld [vmem:[#allocation6 + $0x5c0] sm:$0xff]
    %v239 = vld [vmem:[#allocation6 + $0x5c8] sm:$0xff]
    %v240 = vld [vmem:[#allocation6 + $0x5d0] sm:$0xff]
    %v241 = vld [vmem:[#allocation6 + $0x5d8] sm:$0xff]
    %v242 = vld [vmem:[#allocation6 + $0x5e0] sm:$0xff]
    %v243 = vld [vmem:[#allocation6 + $0x5e8] sm:$0xff]
    %v244 = vld [vmem:[#allocation6 + $0x5f0] sm:$0xff]
    %v245 = vld [vmem:[#allocation6 + $0x5f8] sm:$0xff]
    %v246 = vld [vmem:[%s3] sm:$0x3]
    %v248 = vlaneseq
    %v249 = vshrl.u32 %v248, 7
    %v250 = vsub.s32 0, %v249
    %v251 = vrot.slane %v246, %v250
    %v252 = vlaneseq
    %v253 = vshrl.u32 %v252, 7
    %v254 = vsub.s32 1, %v253
    %v255 = vrot.slane %v246, %v254
    %v258 = vld [vmem:[%s1] sm:$0xff]
    %v259 = vld [vmem:[%s1 + $0x8] sm:$0xf]
    %260 = vmatprep.subr.mxu0 %v55
    %261 = vmatpush1.msra.mxu0 %v54
    %262 = vmatprep.subr.mxu0 %v61
    %263 = vmatpush1.msra.mxu0 %v60
    %264 = vmatprep.subr.mxu0 %v67
    %265 = vmatpush1.msra.mxu0 %v66
    %266 = vmatprep.subr.mxu0 %v73
    %267 = vmatpush1.msra.mxu0 %v72
    %268 = vmatprep.subr.mxu0 %v79
    %269 = vmatpush1.msra.mxu0 %v78
    %270 = vmatprep.subr.mxu0 %v85
    %271 = vmatpush1.msra.mxu0 %v84
    %272 = vmatprep.subr.mxu0 %v91
    %273 = vmatpush1.msra.mxu0 %v90
    %274 = vmatprep.subr.mxu0 %v97
    %275 = vmatpush1.msra.mxu0 %v96
    %276 = vmatprep.subr.mxu0 %v103
    %277 = vmatpush1.msra.mxu0 %v102
    %278 = vmatprep.subr.mxu0 %v109
    %279 = vmatpush1.msra.mxu0 %v108
    %280 = vmatprep.subr.mxu0 %v115
    %281 = vmatpush1.msra.mxu0 %v114
    %282 = vmatprep.subr.mxu0 %v121
    %283 = vmatpush1.msra.mxu0 %v120
    %284 = vmatprep.subr.mxu0 %v127
    %285 = vmatpush1.msra.mxu0 %v126
    %286 = vmatprep.subr.mxu0 %v133
    %287 = vmatpush1.msra.mxu0 %v132
    %288 = vmatprep.subr.mxu0 %v139
    %289 = vmatpush1.msra.mxu0 %v138
    %290 = vmatprep.subr.mxu0 %v145
    %291 = vmatpush1.msra.mxu0 %v144
    %292 = vmatprep.subr.mxu0 %v151
    %293 = vmatpush1.msra.mxu0 %v150
    %294 = vmatprep.subr.mxu0 %v157
    %295 = vmatpush1.msra.mxu0 %v156
    %296 = vmatprep.subr.mxu0 %v163
    %297 = vmatpush1.msra.mxu0 %v162
    %298 = vmatprep.subr.mxu0 %v169
    %299 = vmatpush1.msra.mxu0 %v168
    %300 = vmatprep.subr.mxu0 %v175
    %301 = vmatpush1.msra.mxu0 %v174
    %302 = vmatprep.subr.mxu0 %v181
    %303 = vmatpush1.msra.mxu0 %v180
    %304 = vmatprep.subr.mxu0 %v187
    %305 = vmatpush1.msra.mxu0 %v186
    %306 = vmatprep.subr.mxu0 %v193
    %307 = vmatpush1.msra.mxu0 %v192
    %308 = vmatprep.subr.mxu0 %v199
    %309 = vmatpush1.msra.mxu0 %v198
    %310 = vmatprep.subr.mxu0 %v205
    %311 = vmatpush1.msra.mxu0 %v204
    %312 = vmatprep.subr.mxu0 %v211
    %313 = vmatpush1.msra.mxu0 %v210
    %314 = vmatprep.subr.mxu0 %v217
    %315 = vmatpush1.msra.mxu0 %v216
    %316 = vmatprep.subr.mxu0 %v223
    %317 = vmatpush1.msra.mxu0 %v222
    %318 = vmatprep.subr.mxu0 %v229
    %319 = vmatpush1.msra.mxu0 %v228
    %320 = vmatprep.subr.mxu0 %v235
    %321 = vmatpush1.msra.mxu0 %v234
    %322 = vmatprep.subr.mxu0 %v241
    %323 = vmatpush1.msra.mxu0 %v240
    %324 = vmatprep.mubr.f32.mxu0 0.0
    %325 = vmatmul.mubr.f32.gmra.mrb[0].mxu0 0.0
    %v326 = vpop.f32.mrb[0].mxu0
    %v327 = vadd.f32 0.0, %v326
    %v328 = vpop.f32.mrb[0].mxu0
    %v329 = vadd.f32 0.0, %v328
    %330 = vdwg.mxu0
    %331 = vmatprep.subr.mxu0 %v57
    %332 = vmatpush1.msra.mxu0 %v56
    %333 = vmatprep.subr.mxu0 %v63
    %334 = vmatpush1.msra.mxu0 %v62
    %335 = vmatprep.subr.mxu0 %v69
    %336 = vmatpush1.msra.mxu0 %v68
    %337 = vmatprep.subr.mxu0 %v75
    %338 = vmatpush1.msra.mxu0 %v74
    %339 = vmatprep.subr.mxu0 %v81
    %340 = vmatpush1.msra.mxu0 %v80
    %341 = vmatprep.subr.mxu0 %v87
    %342 = vmatpush1.msra.mxu0 %v86
    %343 = vmatprep.subr.mxu0 %v93
    %344 = vmatpush1.msra.mxu0 %v92
    %345 = vmatprep.subr.mxu0 %v99
    %346 = vmatpush1.msra.mxu0 %v98
    %347 = vmatprep.subr.mxu0 %v105
    %348 = vmatpush1.msra.mxu0 %v104
    %349 = vmatprep.subr.mxu0 %v111
    %350 = vmatpush1.msra.mxu0 %v110
    %351 = vmatprep.subr.mxu0 %v117
    %352 = vmatpush1.msra.mxu0 %v116
    %353 = vmatprep.subr.mxu0 %v123
    %354 = vmatpush1.msra.mxu0 %v122
    %355 = vmatprep.subr.mxu0 %v129
    %356 = vmatpush1.msra.mxu0 %v128
    %357 = vmatprep.subr.mxu0 %v135
    %358 = vmatpush1.msra.mxu0 %v134
    %359 = vmatprep.subr.mxu0 %v141
    %360 = vmatpush1.msra.mxu0 %v140
    %361 = vmatprep.subr.mxu0 %v147
    %362 = vmatpush1.msra.mxu0 %v146
    %363 = vmatprep.subr.mxu0 %v153
    %364 = vmatpush1.msra.mxu0 %v152
    %365 = vmatprep.subr.mxu0 %v159
    %366 = vmatpush1.msra.mxu0 %v158
    %367 = vmatprep.subr.mxu0 %v165
    %368 = vmatpush1.msra.mxu0 %v164
    %369 = vmatprep.subr.mxu0 %v171
    %370 = vmatpush1.msra.mxu0 %v170
    %371 = vmatprep.subr.mxu0 %v177
    %372 = vmatpush1.msra.mxu0 %v176
    %373 = vmatprep.subr.mxu0 %v183
    %374 = vmatpush1.msra.mxu0 %v182
    %375 = vmatprep.subr.mxu0 %v189
    %376 = vmatpush1.msra.mxu0 %v188
    %377 = vmatprep.subr.mxu0 %v195
    %378 = vmatpush1.msra.mxu0 %v194
    %379 = vmatprep.subr.mxu0 %v201
    %380 = vmatpush1.msra.mxu0 %v200
    %381 = vmatprep.subr.mxu0 %v207
    %382 = vmatpush1.msra.mxu0 %v206
    %383 = vmatprep.subr.mxu0 %v213
    %384 = vmatpush1.msra.mxu0 %v212
    %385 = vmatprep.subr.mxu0 %v219
    %386 = vmatpush1.msra.mxu0 %v218
    %387 = vmatprep.subr.mxu0 %v225
    %388 = vmatpush1.msra.mxu0 %v224
    %389 = vmatprep.subr.mxu0 %v231
    %390 = vmatpush1.msra.mxu0 %v230
    %391 = vmatprep.subr.mxu0 %v237
    %392 = vmatpush1.msra.mxu0 %v236
    %393 = vmatprep.subr.mxu0 %v243
    %394 = vmatpush1.msra.mxu0 %v242
    %395 = vmatprep.mubr.f32.mxu0 0.0
    %396 = vmatmul.mubr.f32.gmra.mrb[0].mxu0 0.0
    %v397 = vpop.f32.mrb[0].mxu0
    %v398 = vadd.f32 0.0, %v397
    %v399 = vpop.f32.mrb[0].mxu0
    %v400 = vadd.f32 0.0, %v399
    %401 = vdwg.mxu0
    %402 = vmatprep.subr.mxu0 %v59
    %403 = vmatpush1.msra.mxu0 %v58
    %404 = vmatprep.subr.mxu0 %v65
    %405 = vmatpush1.msra.mxu0 %v64
    %406 = vmatprep.subr.mxu0 %v71
    %407 = vmatpush1.msra.mxu0 %v70
    %408 = vmatprep.subr.mxu0 %v77
    %409 = vmatpush1.msra.mxu0 %v76
    %410 = vmatprep.subr.mxu0 %v83
    %411 = vmatpush1.msra.mxu0 %v82
    %412 = vmatprep.subr.mxu0 %v89
    %413 = vmatpush1.msra.mxu0 %v88
    %414 = vmatprep.subr.mxu0 %v95
    %415 = vmatpush1.msra.mxu0 %v94
    %416 = vmatprep.subr.mxu0 %v101
    %417 = vmatpush1.msra.mxu0 %v100
    %418 = vmatprep.subr.mxu0 %v107
    %419 = vmatpush1.msra.mxu0 %v106
    %420 = vmatprep.subr.mxu0 %v113
    %421 = vmatpush1.msra.mxu0 %v112
    %422 = vmatprep.subr.mxu0 %v119
    %423 = vmatpush1.msra.mxu0 %v118
    %424 = vmatprep.subr.mxu0 %v125
    %425 = vmatpush1.msra.mxu0 %v124
    %426 = vmatprep.subr.mxu0 %v131
    %427 = vmatpush1.msra.mxu0 %v130
    %428 = vmatprep.subr.mxu0 %v137
    %429 = vmatpush1.msra.mxu0 %v136
    %430 = vmatprep.subr.mxu0 %v143
    %431 = vmatpush1.msra.mxu0 %v142
    %432 = vmatprep.subr.mxu0 %v149
    %433 = vmatpush1.msra.mxu0 %v148
    %434 = vmatprep.subr.mxu0 %v155
    %435 = vmatpush1.msra.mxu0 %v154
    %436 = vmatprep.subr.mxu0 %v161
    %437 = vmatpush1.msra.mxu0 %v160
    %438 = vmatprep.subr.mxu0 %v167
    %439 = vmatpush1.msra.mxu0 %v166
    %440 = vmatprep.subr.mxu0 %v173
    %441 = vmatpush1.msra.mxu0 %v172
    %442 = vmatprep.subr.mxu0 %v179
    %443 = vmatpush1.msra.mxu0 %v178
    %444 = vmatprep.subr.mxu0 %v185
    %445 = vmatpush1.msra.mxu0 %v184
    %446 = vmatprep.subr.mxu0 %v191
    %447 = vmatpush1.msra.mxu0 %v190
    %448 = vmatprep.subr.mxu0 %v197
    %449 = vmatpush1.msra.mxu0 %v196
    %450 = vmatprep.subr.mxu0 %v203
    %451 = vmatpush1.msra.mxu0 %v202
    %452 = vmatprep.subr.mxu0 %v209
    %453 = vmatpush1.msra.mxu0 %v208
    %454 = vmatprep.subr.mxu0 %v215
    %455 = vmatpush1.msra.mxu0 %v214
    %456 = vmatprep.subr.mxu0 %v221
    %457 = vmatpush1.msra.mxu0 %v220
    %458 = vmatprep.subr.mxu0 %v227
    %459 = vmatpush1.msra.mxu0 %v226
    %460 = vmatprep.subr.mxu0 %v233
    %461 = vmatpush1.msra.mxu0 %v232
    %462 = vmatprep.subr.mxu0 %v239
    %463 = vmatpush1.msra.mxu0 %v238
    %464 = vmatprep.subr.mxu0 %v245
    %465 = vmatpush1.msra.mxu0 %v244
    %466 = vmatprep.mubr.f32.mxu0 0.0
    %467 = vmatmul.mubr.f32.gmra.mrb[0].mxu0 0.0
    %v468 = vpop.f32.mrb[0].mxu0
    %v469 = vadd.f32 0.0, %v468
    %v470 = vpop.f32.mrb[0].mxu0
    %v471 = vadd.f32 0.0, %v470
    %472 = vdwg.mxu0
    %v475 = vcombine.low %v327, %v329
    %v477 = vunpack.c.l.s4 1983009808
    %v478 = vunpack.c.0.s8 %v477
    %v479 = vlaneseq
    %v480 = vshrl.u32 %v479, 7
    %v481 = vsub.s32 %v478, %v480
    %v482 = vrot.slane %v475, %v481
    %v484 = vadd.f32 %v258, %v482
    %v485 = vxor.u32 %v484, 2147483648
    %v486 = vmul.f32 %v485, 1.442695
    %v487 = vpow.pop %v486
    %v488 = vadd.f32 %v487, 1.0
    %v489 = vrcp.pop %v488
    %v490 = vmul.f32 1.0, %v489
    %v492 = vrot.slane %v258, 4
    %v496 = vcombine.low %v398, %v400
    %v498 = vunpack.c.l.s4 1983009808
    %v499 = vunpack.c.0.s8 %v498
    %v500 = vlaneseq
    %v501 = vshrl.u32 %v500, 7
    %v502 = vsub.s32 %v499, %v501
    %v503 = vrot.slane %v496, %v502
    %v505 = vadd.f32 %v492, %v503
    %v506 = vxor.u32 %v505, 2147483648
    %v507 = vmul.f32 %v506, 1.442695
    %v508 = vpow.pop %v507
    %v509 = vadd.f32 %v508, 1.0
    %v510 = vrcp.pop %v509
    %v511 = vmul.f32 1.0, %v510
    %v512 = vadd.f32 %v469, %v251
    %v513 = vadd.f32 %v471, %v255
    %v516 = vcombine.low %v512, %v513
    %v518 = vunpack.c.l.s4 1983009808
    %v519 = vunpack.c.0.s8 %v518
    %v520 = vlaneseq
    %v521 = vshrl.u32 %v520, 7
    %v522 = vsub.s32 %v519, %v521
    %v523 = vrot.slane %v516, %v522
    %v525 = vmul.f32 %v490, %v523
    %v526 = vadd.f32 %v259, %v525
    %v527 = vtanh.pop %v526
    %v528 = vsub.f32 1.0, %v511
    %v529 = vmul.f32 %v528, %v527
    %v530 = vmul.f32 %v511, 0.0
    %v531 = vadd.f32 %v529, %v530
    %s532 = scalar_lea.vmem %s1, 12
    %v533 = vld [vmem:[%s532] sm:$0xff]
    %v534 = vld [vmem:[%s532 + $0x8] sm:$0xf]
    %v537 = vunpack.c.l.s4 1983009808
    %v538 = vunpack.c.0.s8 %v537
    %v539 = vlaneseq
    %v540 = vshrl.u32 %v539, 7
    %v541 = vsub.s32 %v538, %v540
    %v542 = vrot.slane %v531, %v541
    %v543 = vcombine.high %v542, %v542
    %546 = vmatprep.subr.mxu0 %v55
    %547 = vmatpush1.msra.mxu0 %v54
    %548 = vmatprep.subr.mxu0 %v61
    %549 = vmatpush1.msra.mxu0 %v60
    %550 = vmatprep.subr.mxu0 %v67
    %551 = vmatpush1.msra.mxu0 %v66
    %552 = vmatprep.subr.mxu0 %v73
    %553 = vmatpush1.msra.mxu0 %v72
    %554 = vmatprep.subr.mxu0 %v79
    %555 = vmatpush1.msra.mxu0 %v78
    %556 = vmatprep.subr.mxu0 %v85
    %557 = vmatpush1.msra.mxu0 %v84
    %558 = vmatprep.subr.mxu0 %v91
    %559 = vmatpush1.msra.mxu0 %v90
    %560 = vmatprep.subr.mxu0 %v97
    %561 = vmatpush1.msra.mxu0 %v96
    %562 = vmatprep.subr.mxu0 %v103
    %563 = vmatpush1.msra.mxu0 %v102
    %564 = vmatprep.subr.mxu0 %v109
    %565 = vmatpush1.msra.mxu0 %v108
    %566 = vmatprep.subr.mxu0 %v115
    %567 = vmatpush1.msra.mxu0 %v114
    %568 = vmatprep.subr.mxu0 %v121
    %569 = vmatpush1.msra.mxu0 %v120
    %570 = vmatprep.subr.mxu0 %v127
    %571 = vmatpush1.msra.mxu0 %v126
    %572 = vmatprep.subr.mxu0 %v133
    %573 = vmatpush1.msra.mxu0 %v132
    %574 = vmatprep.subr.mxu0 %v139
    %575 = vmatpush1.msra.mxu0 %v138
    %576 = vmatprep.subr.mxu0 %v145
    %577 = vmatpush1.msra.mxu0 %v144
    %578 = vmatprep.subr.mxu0 %v151
    %579 = vmatpush1.msra.mxu0 %v150
    %580 = vmatprep.subr.mxu0 %v157
    %581 = vmatpush1.msra.mxu0 %v156
    %582 = vmatprep.subr.mxu0 %v163
    %583 = vmatpush1.msra.mxu0 %v162
    %584 = vmatprep.subr.mxu0 %v169
    %585 = vmatpush1.msra.mxu0 %v168
    %586 = vmatprep.subr.mxu0 %v175
    %587 = vmatpush1.msra.mxu0 %v174
    %588 = vmatprep.subr.mxu0 %v181
    %589 = vmatpush1.msra.mxu0 %v180
    %590 = vmatprep.subr.mxu0 %v187
    %591 = vmatpush1.msra.mxu0 %v186
    %592 = vmatprep.subr.mxu0 %v193
    %593 = vmatpush1.msra.mxu0 %v192
    %594 = vmatprep.subr.mxu0 %v199
    %595 = vmatpush1.msra.mxu0 %v198
    %596 = vmatprep.subr.mxu0 %v205
    %597 = vmatpush1.msra.mxu0 %v204
    %598 = vmatprep.subr.mxu0 %v211
    %599 = vmatpush1.msra.mxu0 %v210
    %600 = vmatprep.subr.mxu0 %v217
    %601 = vmatpush1.msra.mxu0 %v216
    %602 = vmatprep.subr.mxu0 %v223
    %603 = vmatpush1.msra.mxu0 %v222
    %604 = vmatprep.subr.mxu0 %v229
    %605 = vmatpush1.msra.mxu0 %v228
    %606 = vmatprep.subr.mxu0 %v235
    %607 = vmatpush1.msra.mxu0 %v234
    %608 = vmatprep.subr.mxu0 %v241
    %609 = vmatpush1.msra.mxu0 %v240
    %610 = vmatprep.mubr.f32.mxu0 %v543
    %611 = vmatmul.mubr.f32.gmra.mrb[0].mxu0 %v542
    %v612 = vpop.f32.mrb[0].mxu0
    %v613 = vadd.f32 0.0, %v612
    %v614 = vpop.f32.mrb[0].mxu0
    %v615 = vadd.f32 0.0, %v614
    %616 = vdwg.mxu0
    %617 = vmatprep.subr.mxu0 %v57
    %618 = vmatpush1.msra.mxu0 %v56
    %619 = vmatprep.subr.mxu0 %v63
    %620 = vmatpush1.msra.mxu0 %v62
    %621 = vmatprep.subr.mxu0 %v69
    %622 = vmatpush1.msra.mxu0 %v68
    %623 = vmatprep.subr.mxu0 %v75
    %624 = vmatpush1.msra.mxu0 %v74
    %625 = vmatprep.subr.mxu0 %v81
    %626 = vmatpush1.msra.mxu0 %v80
    %627 = vmatprep.subr.mxu0 %v87
    %628 = vmatpush1.msra.mxu0 %v86
    %629 = vmatprep.subr.mxu0 %v93
    %630 = vmatpush1.msra.mxu0 %v92
    %631 = vmatprep.subr.mxu0 %v99
    %632 = vmatpush1.msra.mxu0 %v98
    %633 = vmatprep.subr.mxu0 %v105
    %634 = vmatpush1.msra.mxu0 %v104
    %635 = vmatprep.subr.mxu0 %v111
    %636 = vmatpush1.msra.mxu0 %v110
    %637 = vmatprep.subr.mxu0 %v117
    %638 = vmatpush1.msra.mxu0 %v116
    %639 = vmatprep.subr.mxu0 %v123
    %640 = vmatpush1.msra.mxu0 %v122
    %641 = vmatprep.subr.mxu0 %v129
    %642 = vmatpush1.msra.mxu0 %v128
    %643 = vmatprep.subr.mxu0 %v135
    %644 = vmatpush1.msra.mxu0 %v134
    %645 = vmatprep.subr.mxu0 %v141
    %646 = vmatpush1.msra.mxu0 %v140
    %647 = vmatprep.subr.mxu0 %v147
    %648 = vmatpush1.msra.mxu0 %v146
    %649 = vmatprep.subr.mxu0 %v153
    %650 = vmatpush1.msra.mxu0 %v152
    %651 = vmatprep.subr.mxu0 %v159
    %652 = vmatpush1.msra.mxu0 %v158
    %653 = vmatprep.subr.mxu0 %v165
    %654 = vmatpush1.msra.mxu0 %v164
    %655 = vmatprep.subr.mxu0 %v171
    %656 = vmatpush1.msra.mxu0 %v170
    %657 = vmatprep.subr.mxu0 %v177
    %658 = vmatpush1.msra.mxu0 %v176
    %659 = vmatprep.subr.mxu0 %v183
    %660 = vmatpush1.msra.mxu0 %v182
    %661 = vmatprep.subr.mxu0 %v189
    %662 = vmatpush1.msra.mxu0 %v188
    %663 = vmatprep.subr.mxu0 %v195
    %664 = vmatpush1.msra.mxu0 %v194
    %665 = vmatprep.subr.mxu0 %v201
    %666 = vmatpush1.msra.mxu0 %v200
    %667 = vmatprep.subr.mxu0 %v207
    %668 = vmatpush1.msra.mxu0 %v206
    %669 = vmatprep.subr.mxu0 %v213
    %670 = vmatpush1.msra.mxu0 %v212
    %671 = vmatprep.subr.mxu0 %v219
    %672 = vmatpush1.msra.mxu0 %v218
    %673 = vmatprep.subr.mxu0 %v225
    %674 = vmatpush1.msra.mxu0 %v224
    %675 = vmatprep.subr.mxu0 %v231
    %676 = vmatpush1.msra.mxu0 %v230
    %677 = vmatprep.subr.mxu0 %v237
    %678 = vmatpush1.msra.mxu0 %v236
    %679 = vmatprep.subr.mxu0 %v243
    %680 = vmatpush1.msra.mxu0 %v242
    %681 = vmatprep.mubr.f32.mxu0 %v543
    %682 = vmatmul.mubr.f32.gmra.mrb[0].mxu0 %v542
    %v683 = vpop.f32.mrb[0].mxu0
    %v684 = vadd.f32 0.0, %v683
    %v685 = vpop.f32.mrb[0].mxu0
    %v686 = vadd.f32 0.0, %v685
    %687 = vdwg.mxu0
    %688 = vmatprep.subr.mxu0 %v59
    %689 = vmatpush1.msra.mxu0 %v58
    %690 = vmatprep.subr.mxu0 %v65
    %691 = vmatpush1.msra.mxu0 %v64
    %692 = vmatprep.subr.mxu0 %v71
    %693 = vmatpush1.msra.mxu0 %v70
    %694 = vmatprep.subr.mxu0 %v77
    %695 = vmatpush1.msra.mxu0 %v76
    %696 = vmatprep.subr.mxu0 %v83
    %697 = vmatpush1.msra.mxu0 %v82
    %698 = vmatprep.subr.mxu0 %v89
    %699 = vmatpush1.msra.mxu0 %v88
    %700 = vmatprep.subr.mxu0 %v95
    %701 = vmatpush1.msra.mxu0 %v94
    %702 = vmatprep.subr.mxu0 %v101
    %703 = vmatpush1.msra.mxu0 %v100
    %704 = vmatprep.subr.mxu0 %v107
    %705 = vmatpush1.msra.mxu0 %v106
    %706 = vmatprep.subr.mxu0 %v113
    %707 = vmatpush1.msra.mxu0 %v112
    %708 = vmatprep.subr.mxu0 %v119
    %709 = vmatpush1.msra.mxu0 %v118
    %710 = vmatprep.subr.mxu0 %v125
    %711 = vmatpush1.msra.mxu0 %v124
    %712 = vmatprep.subr.mxu0 %v131
    %713 = vmatpush1.msra.mxu0 %v130
    %714 = vmatprep.subr.mxu0 %v137
    %715 = vmatpush1.msra.mxu0 %v136
    %716 = vmatprep.subr.mxu0 %v143
    %717 = vmatpush1.msra.mxu0 %v142
    %718 = vmatprep.subr.mxu0 %v149
    %719 = vmatpush1.msra.mxu0 %v148
    %720 = vmatprep.subr.mxu0 %v155
    %721 = vmatpush1.msra.mxu0 %v154
    %722 = vmatprep.subr.mxu0 %v161
    %723 = vmatpush1.msra.mxu0 %v160
    %724 = vmatprep.subr.mxu0 %v167
    %725 = vmatpush1.msra.mxu0 %v166
    %726 = vmatprep.subr.mxu0 %v173
    %727 = vmatpush1.msra.mxu0 %v172
    %728 = vmatprep.subr.mxu0 %v179
    %729 = vmatpush1.msra.mxu0 %v178
    %730 = vmatprep.subr.mxu0 %v185
    %731 = vmatpush1.msra.mxu0 %v184
    %732 = vmatprep.subr.mxu0 %v191
    %733 = vmatpush1.msra.mxu0 %v190
    %734 = vmatprep.subr.mxu0 %v197
    %735 = vmatpush1.msra.mxu0 %v196
    %736 = vmatprep.subr.mxu0 %v203
    %737 = vmatpush1.msra.mxu0 %v202
    %738 = vmatprep.subr.mxu0 %v209
    %739 = vmatpush1.msra.mxu0 %v208
    %740 = vmatprep.subr.mxu0 %v215
    %741 = vmatpush1.msra.mxu0 %v214
    %742 = vmatprep.subr.mxu0 %v221
    %743 = vmatpush1.msra.mxu0 %v220
    %744 = vmatprep.subr.mxu0 %v227
    %745 = vmatpush1.msra.mxu0 %v226
    %746 = vmatprep.subr.mxu0 %v233
    %747 = vmatpush1.msra.mxu0 %v232
    %748 = vmatprep.subr.mxu0 %v239
    %749 = vmatpush1.msra.mxu0 %v238
    %750 = vmatprep.subr.mxu0 %v245
    %751 = vmatpush1.msra.mxu0 %v244
    %752 = vmatprep.mubr.f32.mxu0 %v543
    %753 = vmatmul.mubr.f32.gmra.mrb[0].mxu0 %v542
    %v754 = vpop.f32.mrb[0].mxu0
    %v755 = vadd.f32 0.0, %v754
    %v756 = vpop.f32.mrb[0].mxu0
    %v757 = vadd.f32 0.0, %v756
    %758 = vdwg.mxu0
    %v761 = vcombine.low %v613, %v615
    %v763 = vunpack.c.l.s4 1983009808
    %v764 = vunpack.c.0.s8 %v763
    %v765 = vlaneseq
    %v766 = vshrl.u32 %v765, 7
    %v767 = vsub.s32 %v764, %v766
    %v768 = vrot.slane %v761, %v767
    %v770 = vadd.f32 %v533, %v768
    %v771 = vxor.u32 %v770, 2147483648
    %v772 = vmul.f32 %v771, 1.442695
    %v773 = vpow.pop %v772
    %v774 = vadd.f32 %v773, 1.0
    %v775 = vrcp.pop %v774
    %v776 = vmul.f32 1.0, %v775
    %v778 = vrot.slane %v533, 4
    %v782 = vcombine.low %v684, %v686
    %v784 = vunpack.c.l.s4 1983009808
    %v785 = vunpack.c.0.s8 %v784
    %v786 = vlaneseq
    %v787 = vshrl.u32 %v786, 7
    %v788 = vsub.s32 %v785, %v787
    %v789 = vrot.slane %v782, %v788
    %v791 = vadd.f32 %v778, %v789
    %v792 = vxor.u32 %v791, 2147483648
    %v793 = vmul.f32 %v792, 1.442695
    %v794 = vpow.pop %v793
    %v795 = vadd.f32 %v794, 1.0
    %v796 = vrcp.pop %v795
    %v797 = vmul.f32 1.0, %v796
    %v798 = vadd.f32 %v755, %v251
    %v799 = vadd.f32 %v757, %v255
    %v802 = vcombine.low %v798, %v799
    %v804 = vunpack.c.l.s4 1983009808
    %v805 = vunpack.c.0.s8 %v804
    %v806 = vlaneseq
    %v807 = vshrl.u32 %v806, 7
    %v808 = vsub.s32 %v805, %v807
    %v809 = vrot.slane %v802, %v808
    %v811 = vmul.f32 %v776, %v809
    %v812 = vadd.f32 %v534, %v811
    %v813 = vtanh.pop %v812
    %v814 = vsub.f32 1.0, %v797
    %v815 = vmul.f32 %v814, %v813
    %v816 = vmul.f32 %v797, %v531
    %v817 = vadd.f32 %v815, %v816
    %s818 = scalar_lea.vmem %s1, 24
    %v819 = vld [vmem:[%s818] sm:$0xff]
    %v820 = vld [vmem:[%s818 + $0x8] sm:$0xf]
    %v823 = vunpack.c.l.s4 1983009808
    %v824 = vunpack.c.0.s8 %v823
    %v825 = vlaneseq
    %v826 = vshrl.u32 %v825, 7
    %v827 = vsub.s32 %v824, %v826
    %v828 = vrot.slane %v817, %v827
    %v829 = vcombine.high %v828, %v828
    %832 = vmatprep.subr.mxu0 %v55
    %833 = vmatpush1.msra.mxu0 %v54
    %834 = vmatprep.subr.mxu0 %v61
    %835 = vmatpush1.msra.mxu0 %v60
    %836 = vmatprep.subr.mxu0 %v67
    %837 = vmatpush1.msra.mxu0 %v66
    %838 = vmatprep.subr.mxu0 %v73
    %839 = vmatpush1.msra.mxu0 %v72
    %840 = vmatprep.subr.mxu0 %v79
    %841 = vmatpush1.msra.mxu0 %v78
    %842 = vmatprep.subr.mxu0 %v85
    %843 = vmatpush1.msra.mxu0 %v84
    %844 = vmatprep.subr.mxu0 %v91
    %845 = vmatpush1.msra.mxu0 %v90
    %846 = vmatprep.subr.mxu0 %v97
    %847 = vmatpush1.msra.mxu0 %v96
    %848 = vmatprep.subr.mxu0 %v103
    %849 = vmatpush1.msra.mxu0 %v102
    %850 = vmatprep.subr.mxu0 %v109
    %851 = vmatpush1.msra.mxu0 %v108
    %852 = vmatprep.subr.mxu0 %v115
    %853 = vmatpush1.msra.mxu0 %v114
    %854 = vmatprep.subr.mxu0 %v121
    %855 = vmatpush1.msra.mxu0 %v120
    %856 = vmatprep.subr.mxu0 %v127
    %857 = vmatpush1.msra.mxu0 %v126
    %858 = vmatprep.subr.mxu0 %v133
    %859 = vmatpush1.msra.mxu0 %v132
    %860 = vmatprep.subr.mxu0 %v139
    %861 = vmatpush1.msra.mxu0 %v138
    %862 = vmatprep.subr.mxu0 %v145
    %863 = vmatpush1.msra.mxu0 %v144
    %864 = vmatprep.subr.mxu0 %v151
    %865 = vmatpush1.msra.mxu0 %v150
    %866 = vmatprep.subr.mxu0 %v157
    %867 = vmatpush1.msra.mxu0 %v156
    %868 = vmatprep.subr.mxu0 %v163
    %869 = vmatpush1.msra.mxu0 %v162
    %870 = vmatprep.subr.mxu0 %v169
    %871 = vmatpush1.msra.mxu0 %v168
    %872 = vmatprep.subr.mxu0 %v175
    %873 = vmatpush1.msra.mxu0 %v174
    %874 = vmatprep.subr.mxu0 %v181
    %875 = vmatpush1.msra.mxu0 %v180
    %876 = vmatprep.subr.mxu0 %v187
    %877 = vmatpush1.msra.mxu0 %v186
    %878 = vmatprep.subr.mxu0 %v193
    %879 = vmatpush1.msra.mxu0 %v192
    %880 = vmatprep.subr.mxu0 %v199
    %881 = vmatpush1.msra.mxu0 %v198
    %882 = vmatprep.subr.mxu0 %v205
    %883 = vmatpush1.msra.mxu0 %v204
    %884 = vmatprep.subr.mxu0 %v211
    %885 = vmatpush1.msra.mxu0 %v210
    %886 = vmatprep.subr.mxu0 %v217
    %887 = vmatpush1.msra.mxu0 %v216
    %888 = vmatprep.subr.mxu0 %v223
    %889 = vmatpush1.msra.mxu0 %v222
    %890 = vmatprep.subr.mxu0 %v229
    %891 = vmatpush1.msra.mxu0 %v228
    %892 = vmatprep.subr.mxu0 %v235
    %893 = vmatpush1.msra.mxu0 %v234
    %894 = vmatprep.subr.mxu0 %v241
    %895 = vmatpush1.msra.mxu0 %v240
    %896 = vmatprep.mubr.f32.mxu0 %v829
    %897 = vmatmul.mubr.f32.gmra.mrb[0].mxu0 %v828
    %v898 = vpop.f32.mrb[0].mxu0
    %v899 = vadd.f32 0.0, %v898
    %v900 = vpop.f32.mrb[0].mxu0
    %v901 = vadd.f32 0.0, %v900
    %902 = vdwg.mxu0
    %903 = vmatprep.subr.mxu0 %v57
    %904 = vmatpush1.msra.mxu0 %v56
    %905 = vmatprep.subr.mxu0 %v63
    %906 = vmatpush1.msra.mxu0 %v62
    %907 = vmatprep.subr.mxu0 %v69
    %908 = vmatpush1.msra.mxu0 %v68
    %909 = vmatprep.subr.mxu0 %v75
    %910 = vmatpush1.msra.mxu0 %v74
    %911 = vmatprep.subr.mxu0 %v81
    %912 = vmatpush1.msra.mxu0 %v80
    %913 = vmatprep.subr.mxu0 %v87
    %914 = vmatpush1.msra.mxu0 %v86
    %915 = vmatprep.subr.mxu0 %v93
    %916 = vmatpush1.msra.mxu0 %v92
    %917 = vmatprep.subr.mxu0 %v99
    %918 = vmatpush1.msra.mxu0 %v98
    %919 = vmatprep.subr.mxu0 %v105
    %920 = vmatpush1.msra.mxu0 %v104
    %921 = vmatprep.subr.mxu0 %v111
    %922 = vmatpush1.msra.mxu0 %v110
    %923 = vmatprep.subr.mxu0 %v117
    %924 = vmatpush1.msra.mxu0 %v116
    %925 = vmatprep.subr.mxu0 %v123
    %926 = vmatpush1.msra.mxu0 %v122
    %927 = vmatprep.subr.mxu0 %v129
    %928 = vmatpush1.msra.mxu0 %v128
    %929 = vmatprep.subr.mxu0 %v135
    %930 = vmatpush1.msra.mxu0 %v134
    %931 = vmatprep.subr.mxu0 %v141
    %932 = vmatpush1.msra.mxu0 %v140
    %933 = vmatprep.subr.mxu0 %v147
    %934 = vmatpush1.msra.mxu0 %v146
    %935 = vmatprep.subr.mxu0 %v153
    %936 = vmatpush1.msra.mxu0 %v152
    %937 = vmatprep.subr.mxu0 %v159
    %938 = vmatpush1.msra.mxu0 %v158
    %939 = vmatprep.subr.mxu0 %v165
    %940 = vmatpush1.msra.mxu0 %v164
    %941 = vmatprep.subr.mxu0 %v171
    %942 = vmatpush1.msra.mxu0 %v170
    %943 = vmatprep.subr.mxu0 %v177
    %944 = vmatpush1.msra.mxu0 %v176
    %945 = vmatprep.subr.mxu0 %v183
    %946 = vmatpush1.msra.mxu0 %v182
    %947 = vmatprep.subr.mxu0 %v189
    %948 = vmatpush1.msra.mxu0 %v188
    %949 = vmatprep.subr.mxu0 %v195
    %950 = vmatpush1.msra.mxu0 %v194
    %951 = vmatprep.subr.mxu0 %v201
    %952 = vmatpush1.msra.mxu0 %v200
    %953 = vmatprep.subr.mxu0 %v207
    %954 = vmatpush1.msra.mxu0 %v206
    %955 = vmatprep.subr.mxu0 %v213
    %956 = vmatpush1.msra.mxu0 %v212
    %957 = vmatprep.subr.mxu0 %v219
    %958 = vmatpush1.msra.mxu0 %v218
    %959 = vmatprep.subr.mxu0 %v225
    %960 = vmatpush1.msra.mxu0 %v224
    %961 = vmatprep.subr.mxu0 %v231
    %962 = vmatpush1.msra.mxu0 %v230
    %963 = vmatprep.subr.mxu0 %v237
    %964 = vmatpush1.msra.mxu0 %v236
    %965 = vmatprep.subr.mxu0 %v243
    %966 = vmatpush1.msra.mxu0 %v242
    %967 = vmatprep.mubr.f32.mxu0 %v829
    %968 = vmatmul.mubr.f32.gmra.mrb[0].mxu0 %v828
    %v969 = vpop.f32.mrb[0].mxu0
    %v970 = vadd.f32 0.0, %v969
    %v971 = vpop.f32.mrb[0].mxu0
    %v972 = vadd.f32 0.0, %v971
    %973 = vdwg.mxu0
    %974 = vmatprep.subr.mxu0 %v59
    %975 = vmatpush1.msra.mxu0 %v58
    %976 = vmatprep.subr.mxu0 %v65
    %977 = vmatpush1.msra.mxu0 %v64
    %978 = vmatprep.subr.mxu0 %v71
    %979 = vmatpush1.msra.mxu0 %v70
    %980 = vmatprep.subr.mxu0 %v77
    %981 = vmatpush1.msra.mxu0 %v76
    %982 = vmatprep.subr.mxu0 %v83
    %983 = vmatpush1.msra.mxu0 %v82
    %984 = vmatprep.subr.mxu0 %v89
    %985 = vmatpush1.msra.mxu0 %v88
    %986 = vmatprep.subr.mxu0 %v95
    %987 = vmatpush1.msra.mxu0 %v94
    %988 = vmatprep.subr.mxu0 %v101
    %989 = vmatpush1.msra.mxu0 %v100
    %990 = vmatprep.subr.mxu0 %v107
    %991 = vmatpush1.msra.mxu0 %v106
    %992 = vmatprep.subr.mxu0 %v113
    %993 = vmatpush1.msra.mxu0 %v112
    %994 = vmatprep.subr.mxu0 %v119
    %995 = vmatpush1.msra.mxu0 %v118
    %996 = vmatprep.subr.mxu0 %v125
    %997 = vmatpush1.msra.mxu0 %v124
    %998 = vmatprep.subr.mxu0 %v131
    %999 = vmatpush1.msra.mxu0 %v130
    %1000 = vmatprep.subr.mxu0 %v137
    %1001 = vmatpush1.msra.mxu0 %v136
    %1002 = vmatprep.subr.mxu0 %v143
    %1003 = vmatpush1.msra.mxu0 %v142
    %1004 = vmatprep.subr.mxu0 %v149
    %1005 = vmatpush1.msra.mxu0 %v148
    %1006 = vmatprep.subr.mxu0 %v155
    %1007 = vmatpush1.msra.mxu0 %v154
    %1008 = vmatprep.subr.mxu0 %v161
    %1009 = vmatpush1.msra.mxu0 %v160
    %1010 = vmatprep.subr.mxu0 %v167
    %1011 = vmatpush1.msra.mxu0 %v166
    %1012 = vmatprep.subr.mxu0 %v173
    %1013 = vmatpush1.msra.mxu0 %v172
    %1014 = vmatprep.subr.mxu0 %v179
    %1015 = vmatpush1.msra.mxu0 %v178
    %1016 = vmatprep.subr.mxu0 %v185
    %1017 = vmatpush1.msra.mxu0 %v184
    %1018 = vmatprep.subr.mxu0 %v191
    %1019 = vmatpush1.msra.mxu0 %v190
    %1020 = vmatprep.subr.mxu0 %v197
    %1021 = vmatpush1.msra.mxu0 %v196
    %1022 = vmatprep.subr.mxu0 %v203
    %1023 = vmatpush1.msra.mxu0 %v202
    %1024 = vmatprep.subr.mxu0 %v209
    %1025 = vmatpush1.msra.mxu0 %v208
    %1026 = vmatprep.subr.mxu0 %v215
    %1027 = vmatpush1.msra.mxu0 %v214
    %1028 = vmatprep.subr.mxu0 %v221
    %1029 = vmatpush1.msra.mxu0 %v220
    %1030 = vmatprep.subr.mxu0 %v227
    %1031 = vmatpush1.msra.mxu0 %v226
    %1032 = vmatprep.subr.mxu0 %v233
    %1033 = vmatpush1.msra.mxu0 %v232
    %1034 = vmatprep.subr.mxu0 %v239
    %1035 = vmatpush1.msra.mxu0 %v238
    %1036 = vmatprep.subr.mxu0 %v245
    %1037 = vmatpush1.msra.mxu0 %v244
    %1038 = vmatprep.mubr.f32.mxu0 %v829
    %1039 = vmatmul.mubr.f32.gmra.mrb[0].mxu0 %v828
    %v1040 = vpop.f32.mrb[0].mxu0
    %v1041 = vadd.f32 0.0, %v1040
    %v1042 = vpop.f32.mrb[0].mxu0
    %v1043 = vadd.f32 0.0, %v1042
    %1044 = vdwg.mxu0
    %v1047 = vcombine.low %v899, %v901
    %v1049 = vunpack.c.l.s4 1983009808
    %v1050 = vunpack.c.0.s8 %v1049
    %v1051 = vlaneseq
    %v1052 = vshrl.u32 %v1051, 7
    %v1053 = vsub.s32 %v1050, %v1052
    %v1054 = vrot.slane %v1047, %v1053
    %v1056 = vadd.f32 %v819, %v1054
    %v1057 = vxor.u32 %v1056, 2147483648
    %v1058 = vmul.f32 %v1057, 1.442695
    %v1059 = vpow.pop %v1058
    %v1060 = vadd.f32 %v1059, 1.0
    %v1061 = vrcp.pop %v1060
    %v1062 = vmul.f32 1.0, %v1061
    %v1064 = vrot.slane %v819, 4
    %v1068 = vcombine.low %v970, %v972
    %v1070 = vunpack.c.l.s4 1983009808
    %v1071 = vunpack.c.0.s8 %v1070
    %v1072 = vlaneseq
    %v1073 = vshrl.u32 %v1072, 7
    %v1074 = vsub.s32 %v1071, %v1073
    %v1075 = vrot.slane %v1068, %v1074
    %v1077 = vadd.f32 %v1064, %v1075
    %v1078 = vxor.u32 %v1077, 2147483648
    %v1079 = vmul.f32 %v1078, 1.442695
    %v1080 = vpow.pop %v1079
    %v1081 = vadd.f32 %v1080, 1.0
    %v1082 = vrcp.pop %v1081
    %v1083 = vmul.f32 1.0, %v1082
    %v1084 = vadd.f32 %v1041, %v251
    %v1085 = vadd.f32 %v1043, %v255
    %v1088 = vcombine.low %v1084, %v1085
    %v1090 = vunpack.c.l.s4 1983009808
    %v1091 = vunpack.c.0.s8 %v1090
    %v1092 = vlaneseq
    %v1093 = vshrl.u32 %v1092, 7
    %v1094 = vsub.s32 %v1091, %v1093
    %v1095 = vrot.slane %v1088, %v1094
    %v1097 = vmul.f32 %v1062, %v1095
    %v1098 = vadd.f32 %v820, %v1097
    %v1099 = vtanh.pop %v1098
    %v1100 = vsub.f32 1.0, %v1083
    %v1101 = vmul.f32 %v1100, %v1099
    %v1102 = vmul.f32 %v1083, %v817
    %v1103 = vadd.f32 %v1101, %v1102
    %s1104 = scalar_lea.vmem %s1, 36
    %v1105 = vld [vmem:[%s1104] sm:$0xff]
    %v1106 = vld [vmem:[%s1104 + $0x8] sm:$0xf]
    %v1109 = vunpack.c.l.s4 1983009808
    %v1110 = vunpack.c.0.s8 %v1109
    %v1111 = vlaneseq
    %v1112 = vshrl.u32 %v1111, 7
    %v1113 = vsub.s32 %v1110, %v1112
    %v1114 = vrot.slane %v1103, %v1113
    %v1115 = vcombine.high %v1114, %v1114
    %1118 = vmatprep.subr.mxu0 %v55
    %1119 = vmatpush1.msra.mxu0 %v54
    %1120 = vmatprep.subr.mxu0 %v61
    %1121 = vmatpush1.msra.mxu0 %v60
    %1122 = vmatprep.subr.mxu0 %v67
    %1123 = vmatpush1.msra.mxu0 %v66
    %1124 = vmatprep.subr.mxu0 %v73
    %1125 = vmatpush1.msra.mxu0 %v72
    %1126 = vmatprep.subr.mxu0 %v79
    %1127 = vmatpush1.msra.mxu0 %v78
    %1128 = vmatprep.subr.mxu0 %v85
    %1129 = vmatpush1.msra.mxu0 %v84
    %1130 = vmatprep.subr.mxu0 %v91
    %1131 = vmatpush1.msra.mxu0 %v90
    %1132 = vmatprep.subr.mxu0 %v97
    %1133 = vmatpush1.msra.mxu0 %v96
    %1134 = vmatprep.subr.mxu0 %v103
    %1135 = vmatpush1.msra.mxu0 %v102
    %1136 = vmatprep.subr.mxu0 %v109
    %1137 = vmatpush1.msra.mxu0 %v108
    %1138 = vmatprep.subr.mxu0 %v115
    %1139 = vmatpush1.msra.mxu0 %v114
    %1140 = vmatprep.subr.mxu0 %v121
    %1141 = vmatpush1.msra.mxu0 %v120
    %1142 = vmatprep.subr.mxu0 %v127
    %1143 = vmatpush1.msra.mxu0 %v126
    %1144 = vmatprep.subr.mxu0 %v133
    %1145 = vmatpush1.msra.mxu0 %v132
    %1146 = vmatprep.subr.mxu0 %v139
    %1147 = vmatpush1.msra.mxu0 %v138
    %1148 = vmatprep.subr.mxu0 %v145
    %1149 = vmatpush1.msra.mxu0 %v144
    %1150 = vmatprep.subr.mxu0 %v151
    %1151 = vmatpush1.msra.mxu0 %v150
    %1152 = vmatprep.subr.mxu0 %v157
    %1153 = vmatpush1.msra.mxu0 %v156
    %1154 = vmatprep.subr.mxu0 %v163
    %1155 = vmatpush1.msra.mxu0 %v162
    %1156 = vmatprep.subr.mxu0 %v169
    %1157 = vmatpush1.msra.mxu0 %v168
    %1158 = vmatprep.subr.mxu0 %v175
    %1159 = vmatpush1.msra.mxu0 %v174
    %1160 = vmatprep.subr.mxu0 %v181
    %1161 = vmatpush1.msra.mxu0 %v180
    %1162 = vmatprep.subr.mxu0 %v187
    %1163 = vmatpush1.msra.mxu0 %v186
    %1164 = vmatprep.subr.mxu0 %v193
    %1165 = vmatpush1.msra.mxu0 %v192
    %1166 = vmatprep.subr.mxu0 %v199
    %1167 = vmatpush1.msra.mxu0 %v198
    %1168 = vmatprep.subr.mxu0 %v205
    %1169 = vmatpush1.msra.mxu0 %v204
    %1170 = vmatprep.subr.mxu0 %v211
    %1171 = vmatpush1.msra.mxu0 %v210
    %1172 = vmatprep.subr.mxu0 %v217
    %1173 = vmatpush1.msra.mxu0 %v216
    %1174 = vmatprep.subr.mxu0 %v223
    %1175 = vmatpush1.msra.mxu0 %v222
    %1176 = vmatprep.subr.mxu0 %v229
    %1177 = vmatpush1.msra.mxu0 %v228
    %1178 = vmatprep.subr.mxu0 %v235
    %1179 = vmatpush1.msra.mxu0 %v234
    %1180 = vmatprep.subr.mxu0 %v241
    %1181 = vmatpush1.msra.mxu0 %v240
    %1182 = vmatprep.mubr.f32.mxu0 %v1115
    %1183 = vmatmul.mubr.f32.gmra.mrb[0].mxu0 %v1114
    %v1184 = vpop.f32.mrb[0].mxu0
    %v1185 = vadd.f32 0.0, %v1184
    %v1186 = vpop.f32.mrb[0].mxu0
    %v1187 = vadd.f32 0.0, %v1186
    %1188 = vdwg.mxu0
    %1189 = vmatprep.subr.mxu0 %v57
    %1190 = vmatpush1.msra.mxu0 %v56
    %1191 = vmatprep.subr.mxu0 %v63
    %1192 = vmatpush1.msra.mxu0 %v62
    %1193 = vmatprep.subr.mxu0 %v69
    %1194 = vmatpush1.msra.mxu0 %v68
    %1195 = vmatprep.subr.mxu0 %v75
    %1196 = vmatpush1.msra.mxu0 %v74
    %1197 = vmatprep.subr.mxu0 %v81
    %1198 = vmatpush1.msra.mxu0 %v80
    %1199 = vmatprep.subr.mxu0 %v87
    %1200 = vmatpush1.msra.mxu0 %v86
    %1201 = vmatprep.subr.mxu0 %v93
    %1202 = vmatpush1.msra.mxu0 %v92
    %1203 = vmatprep.subr.mxu0 %v99
    %1204 = vmatpush1.msra.mxu0 %v98
    %1205 = vmatprep.subr.mxu0 %v105
    %1206 = vmatpush1.msra.mxu0 %v104
    %1207 = vmatprep.subr.mxu0 %v111
    %1208 = vmatpush1.msra.mxu0 %v110
    %1209 = vmatprep.subr.mxu0 %v117
    %1210 = vmatpush1.msra.mxu0 %v116
    %1211 = vmatprep.subr.mxu0 %v123
    %1212 = vmatpush1.msra.mxu0 %v122
    %1213 = vmatprep.subr.mxu0 %v129
    %1214 = vmatpush1.msra.mxu0 %v128
    %1215 = vmatprep.subr.mxu0 %v135
    %1216 = vmatpush1.msra.mxu0 %v134
    %1217 = vmatprep.subr.mxu0 %v141
    %1218 = vmatpush1.msra.mxu0 %v140
    %1219 = vmatprep.subr.mxu0 %v147
    %1220 = vmatpush1.msra.mxu0 %v146
    %1221 = vmatprep.subr.mxu0 %v153
    %1222 = vmatpush1.msra.mxu0 %v152
    %1223 = vmatprep.subr.mxu0 %v159
    %1224 = vmatpush1.msra.mxu0 %v158
    %1225 = vmatprep.subr.mxu0 %v165
    %1226 = vmatpush1.msra.mxu0 %v164
    %1227 = vmatprep.subr.mxu0 %v171
    %1228 = vmatpush1.msra.mxu0 %v170
    %1229 = vmatprep.subr.mxu0 %v177
    %1230 = vmatpush1.msra.mxu0 %v176
    %1231 = vmatprep.subr.mxu0 %v183
    %1232 = vmatpush1.msra.mxu0 %v182
    %1233 = vmatprep.subr.mxu0 %v189
    %1234 = vmatpush1.msra.mxu0 %v188
    %1235 = vmatprep.subr.mxu0 %v195
    %1236 = vmatpush1.msra.mxu0 %v194
    %1237 = vmatprep.subr.mxu0 %v201
    %1238 = vmatpush1.msra.mxu0 %v200
    %1239 = vmatprep.subr.mxu0 %v207
    %1240 = vmatpush1.msra.mxu0 %v206
    %1241 = vmatprep.subr.mxu0 %v213
    %1242 = vmatpush1.msra.mxu0 %v212
    %1243 = vmatprep.subr.mxu0 %v219
    %1244 = vmatpush1.msra.mxu0 %v218
    %1245 = vmatprep.subr.mxu0 %v225
    %1246 = vmatpush1.msra.mxu0 %v224
    %1247 = vmatprep.subr.mxu0 %v231
    %1248 = vmatpush1.msra.mxu0 %v230
    %1249 = vmatprep.subr.mxu0 %v237
    %1250 = vmatpush1.msra.mxu0 %v236
    %1251 = vmatprep.subr.mxu0 %v243
    %1252 = vmatpush1.msra.mxu0 %v242
    %1253 = vmatprep.mubr.f32.mxu0 %v1115
    %1254 = vmatmul.mubr.f32.gmra.mrb[0].mxu0 %v1114
    %v1255 = vpop.f32.mrb[0].mxu0
    %v1256 = vadd.f32 0.0, %v1255
    %v1257 = vpop.f32.mrb[0].mxu0
    %v1258 = vadd.f32 0.0, %v1257
    %1259 = vdwg.mxu0
    %1260 = vmatprep.subr.mxu0 %v59
    %1261 = vmatpush1.msra.mxu0 %v58
    %1262 = vmatprep.subr.mxu0 %v65
    %1263 = vmatpush1.msra.mxu0 %v64
    %1264 = vmatprep.subr.mxu0 %v71
    %1265 = vmatpush1.msra.mxu0 %v70
    %1266 = vmatprep.subr.mxu0 %v77
    %1267 = vmatpush1.msra.mxu0 %v76
    %1268 = vmatprep.subr.mxu0 %v83
    %1269 = vmatpush1.msra.mxu0 %v82
    %1270 = vmatprep.subr.mxu0 %v89
    %1271 = vmatpush1.msra.mxu0 %v88
    %1272 = vmatprep.subr.mxu0 %v95
    %1273 = vmatpush1.msra.mxu0 %v94
    %1274 = vmatprep.subr.mxu0 %v101
    %1275 = vmatpush1.msra.mxu0 %v100
    %1276 = vmatprep.subr.mxu0 %v107
    %1277 = vmatpush1.msra.mxu0 %v106
    %1278 = vmatprep.subr.mxu0 %v113
    %1279 = vmatpush1.msra.mxu0 %v112
    %1280 = vmatprep.subr.mxu0 %v119
    %1281 = vmatpush1.msra.mxu0 %v118
    %1282 = vmatprep.subr.mxu0 %v125
    %1283 = vmatpush1.msra.mxu0 %v124
    %1284 = vmatprep.subr.mxu0 %v131
    %1285 = vmatpush1.msra.mxu0 %v130
    %1286 = vmatprep.subr.mxu0 %v137
    %1287 = vmatpush1.msra.mxu0 %v136
    %1288 = vmatprep.subr.mxu0 %v143
    %1289 = vmatpush1.msra.mxu0 %v142
    %1290 = vmatprep.subr.mxu0 %v149
    %1291 = vmatpush1.msra.mxu0 %v148
    %1292 = vmatprep.subr.mxu0 %v155
    %1293 = vmatpush1.msra.mxu0 %v154
    %1294 = vmatprep.subr.mxu0 %v161
    %1295 = vmatpush1.msra.mxu0 %v160
    %1296 = vmatprep.subr.mxu0 %v167
    %1297 = vmatpush1.msra.mxu0 %v166
    %1298 = vmatprep.subr.mxu0 %v173
    %1299 = vmatpush1.msra.mxu0 %v172
    %1300 = vmatprep.subr.mxu0 %v179
    %1301 = vmatpush1.msra.mxu0 %v178
    %1302 = vmatprep.subr.mxu0 %v185
    %1303 = vmatpush1.msra.mxu0 %v184
    %1304 = vmatprep.subr.mxu0 %v191
    %1305 = vmatpush1.msra.mxu0 %v190
    %1306 = vmatprep.subr.mxu0 %v197
    %1307 = vmatpush1.msra.mxu0 %v196
    %1308 = vmatprep.subr.mxu0 %v203
    %1309 = vmatpush1.msra.mxu0 %v202
    %1310 = vmatprep.subr.mxu0 %v209
    %1311 = vmatpush1.msra.mxu0 %v208
    %1312 = vmatprep.subr.mxu0 %v215
    %1313 = vmatpush1.msra.mxu0 %v214
    %1314 = vmatprep.subr.mxu0 %v221
    %1315 = vmatpush1.msra.mxu0 %v220
    %1316 = vmatprep.subr.mxu0 %v227
    %1317 = vmatpush1.msra.mxu0 %v226
    %1318 = vmatprep.subr.mxu0 %v233
    %1319 = vmatpush1.msra.mxu0 %v232
    %1320 = vmatprep.subr.mxu0 %v239
    %1321 = vmatpush1.msra.mxu0 %v238
    %1322 = vmatprep.subr.mxu0 %v245
    %1323 = vmatpush1.msra.mxu0 %v244
    %1324 = vmatprep.mubr.f32.mxu0 %v1115
    %1325 = vmatmul.mubr.f32.gmra.mrb[0].mxu0 %v1114
    %v1326 = vpop.f32.mrb[0].mxu0
    %v1327 = vadd.f32 0.0, %v1326
    %v1328 = vpop.f32.mrb[0].mxu0
    %v1329 = vadd.f32 0.0, %v1328
    %1330 = vdwg.mxu0
    %v1333 = vcombine.low %v1185, %v1187
    %v1335 = vunpack.c.l.s4 1983009808
    %v1336 = vunpack.c.0.s8 %v1335
    %v1337 = vlaneseq
    %v1338 = vshrl.u32 %v1337, 7
    %v1339 = vsub.s32 %v1336, %v1338
    %v1340 = vrot.slane %v1333, %v1339
    %v1342 = vadd.f32 %v1105, %v1340
    %v1343 = vxor.u32 %v1342, 2147483648
    %v1344 = vmul.f32 %v1343, 1.442695
    %v1345 = vpow.pop %v1344
    %v1346 = vadd.f32 %v1345, 1.0
    %v1347 = vrcp.pop %v1346
    %v1348 = vmul.f32 1.0, %v1347
    %v1350 = vrot.slane %v1105, 4
    %v1354 = vcombine.low %v1256, %v1258
    %v1356 = vunpack.c.l.s4 1983009808
    %v1357 = vunpack.c.0.s8 %v1356
    %v1358 = vlaneseq
    %v1359 = vshrl.u32 %v1358, 7
    %v1360 = vsub.s32 %v1357, %v1359
    %v1361 = vrot.slane %v1354, %v1360
    %v1363 = vadd.f32 %v1350, %v1361
    %v1364 = vxor.u32 %v1363, 2147483648
    %v1365 = vmul.f32 %v1364, 1.442695
    %v1366 = vpow.pop %v1365
    %v1367 = vadd.f32 %v1366, 1.0
    %v1368 = vrcp.pop %v1367
    %v1369 = vmul.f32 1.0, %v1368
    %v1370 = vadd.f32 %v1327, %v251
    %v1371 = vadd.f32 %v1329, %v255
    %v1374 = vcombine.low %v1370, %v1371
    %v1376 = vunpack.c.l.s4 1983009808
    %v1377 = vunpack.c.0.s8 %v1376
    %v1378 = vlaneseq
    %v1379 = vshrl.u32 %v1378, 7
    %v1380 = vsub.s32 %v1377, %v1379
    %v1381 = vrot.slane %v1374, %v1380
    %v1383 = vmul.f32 %v1348, %v1381
    %v1384 = vadd.f32 %v1106, %v1383
    %v1385 = vtanh.pop %v1384
    %v1386 = vsub.f32 1.0, %v1369
    %v1387 = vmul.f32 %v1386, %v1385
    %v1388 = vmul.f32 %v1369, %v1103
    %v1389 = vadd.f32 %v1387, %v1388
    %s1390 = scalar_lea.vmem %s1, 48
    %v1391 = vld [vmem:[%s1390] sm:$0xff]
    %v1392 = vld [vmem:[%s1390 + $0x8] sm:$0xf]
    %v1395 = vunpack.c.l.s4 1983009808
    %v1396 = vunpack.c.0.s8 %v1395
    %v1397 = vlaneseq
    %v1398 = vshrl.u32 %v1397, 7
    %v1399 = vsub.s32 %v1396, %v1398
    %v1400 = vrot.slane %v1389, %v1399
    %v1401 = vcombine.high %v1400, %v1400
    %1404 = vmatprep.subr.mxu0 %v55
    %1405 = vmatpush1.msra.mxu0 %v54
    %1406 = vmatprep.subr.mxu0 %v61
    %1407 = vmatpush1.msra.mxu0 %v60
    %1408 = vmatprep.subr.mxu0 %v67
    %1409 = vmatpush1.msra.mxu0 %v66
    %1410 = vmatprep.subr.mxu0 %v73
    %1411 = vmatpush1.msra.mxu0 %v72
    %1412 = vmatprep.subr.mxu0 %v79
    %1413 = vmatpush1.msra.mxu0 %v78
    %1414 = vmatprep.subr.mxu0 %v85
    %1415 = vmatpush1.msra.mxu0 %v84
    %1416 = vmatprep.subr.mxu0 %v91
    %1417 = vmatpush1.msra.mxu0 %v90
    %1418 = vmatprep.subr.mxu0 %v97
    %1419 = vmatpush1.msra.mxu0 %v96
    %1420 = vmatprep.subr.mxu0 %v103
    %1421 = vmatpush1.msra.mxu0 %v102
    %1422 = vmatprep.subr.mxu0 %v109
    %1423 = vmatpush1.msra.mxu0 %v108
    %1424 = vmatprep.subr.mxu0 %v115
    %1425 = vmatpush1.msra.mxu0 %v114
    %1426 = vmatprep.subr.mxu0 %v121
    %1427 = vmatpush1.msra.mxu0 %v120
    %1428 = vmatprep.subr.mxu0 %v127
    %1429 = vmatpush1.msra.mxu0 %v126
    %1430 = vmatprep.subr.mxu0 %v133
    %1431 = vmatpush1.msra.mxu0 %v132
    %1432 = vmatprep.subr.mxu0 %v139
    %1433 = vmatpush1.msra.mxu0 %v138
    %1434 = vmatprep.subr.mxu0 %v145
    %1435 = vmatpush1.msra.mxu0 %v144
    %1436 = vmatprep.subr.mxu0 %v151
    %1437 = vmatpush1.msra.mxu0 %v150
    %1438 = vmatprep.subr.mxu0 %v157
    %1439 = vmatpush1.msra.mxu0 %v156
    %1440 = vmatprep.subr.mxu0 %v163
    %1441 = vmatpush1.msra.mxu0 %v162
    %1442 = vmatprep.subr.mxu0 %v169
    %1443 = vmatpush1.msra.mxu0 %v168
    %1444 = vmatprep.subr.mxu0 %v175
    %1445 = vmatpush1.msra.mxu0 %v174
    %1446 = vmatprep.subr.mxu0 %v181
    %1447 = vmatpush1.msra.mxu0 %v180
    %1448 = vmatprep.subr.mxu0 %v187
    %1449 = vmatpush1.msra.mxu0 %v186
    %1450 = vmatprep.subr.mxu0 %v193
    %1451 = vmatpush1.msra.mxu0 %v192
    %1452 = vmatprep.subr.mxu0 %v199
    %1453 = vmatpush1.msra.mxu0 %v198
    %1454 = vmatprep.subr.mxu0 %v205
    %1455 = vmatpush1.msra.mxu0 %v204
    %1456 = vmatprep.subr.mxu0 %v211
    %1457 = vmatpush1.msra.mxu0 %v210
    %1458 = vmatprep.subr.mxu0 %v217
    %1459 = vmatpush1.msra.mxu0 %v216
    %1460 = vmatprep.subr.mxu0 %v223
    %1461 = vmatpush1.msra.mxu0 %v222
    %1462 = vmatprep.subr.mxu0 %v229
    %1463 = vmatpush1.msra.mxu0 %v228
    %1464 = vmatprep.subr.mxu0 %v235
    %1465 = vmatpush1.msra.mxu0 %v234
    %1466 = vmatprep.subr.mxu0 %v241
    %1467 = vmatpush1.msra.mxu0 %v240
    %1468 = vmatprep.mubr.f32.mxu0 %v1401
    %1469 = vmatmul.mubr.f32.gmra.mrb[0].mxu0 %v1400
    %v1470 = vpop.f32.mrb[0].mxu0
    %v1471 = vadd.f32 0.0, %v1470
    %v1472 = vpop.f32.mrb[0].mxu0
    %v1473 = vadd.f32 0.0, %v1472
    %1474 = vdwg.mxu0
    %1475 = vmatprep.subr.mxu0 %v57
    %1476 = vmatpush1.msra.mxu0 %v56
    %1477 = vmatprep.subr.mxu0 %v63
    %1478 = vmatpush1.msra.mxu0 %v62
    %1479 = vmatprep.subr.mxu0 %v69
    %1480 = vmatpush1.msra.mxu0 %v68
    %1481 = vmatprep.subr.mxu0 %v75
    %1482 = vmatpush1.msra.mxu0 %v74
    %1483 = vmatprep.subr.mxu0 %v81
    %1484 = vmatpush1.msra.mxu0 %v80
    %1485 = vmatprep.subr.mxu0 %v87
    %1486 = vmatpush1.msra.mxu0 %v86
    %1487 = vmatprep.subr.mxu0 %v93
    %1488 = vmatpush1.msra.mxu0 %v92
    %1489 = vmatprep.subr.mxu0 %v99
    %1490 = vmatpush1.msra.mxu0 %v98
    %1491 = vmatprep.subr.mxu0 %v105
    %1492 = vmatpush1.msra.mxu0 %v104
    %1493 = vmatprep.subr.mxu0 %v111
    %1494 = vmatpush1.msra.mxu0 %v110
    %1495 = vmatprep.subr.mxu0 %v117
    %1496 = vmatpush1.msra.mxu0 %v116
    %1497 = vmatprep.subr.mxu0 %v123
    %1498 = vmatpush1.msra.mxu0 %v122
    %1499 = vmatprep.subr.mxu0 %v129
    %1500 = vmatpush1.msra.mxu0 %v128
    %1501 = vmatprep.subr.mxu0 %v135
    %1502 = vmatpush1.msra.mxu0 %v134
    %1503 = vmatprep.subr.mxu0 %v141
    %1504 = vmatpush1.msra.mxu0 %v140
    %1505 = vmatprep.subr.mxu0 %v147
    %1506 = vmatpush1.msra.mxu0 %v146
    %1507 = vmatprep.subr.mxu0 %v153
    %1508 = vmatpush1.msra.mxu0 %v152
    %1509 = vmatprep.subr.mxu0 %v159
    %1510 = vmatpush1.msra.mxu0 %v158
    %1511 = vmatprep.subr.mxu0 %v165
    %1512 = vmatpush1.msra.mxu0 %v164
    %1513 = vmatprep.subr.mxu0 %v171
    %1514 = vmatpush1.msra.mxu0 %v170
    %1515 = vmatprep.subr.mxu0 %v177
    %1516 = vmatpush1.msra.mxu0 %v176
    %1517 = vmatprep.subr.mxu0 %v183
    %1518 = vmatpush1.msra.mxu0 %v182
    %1519 = vmatprep.subr.mxu0 %v189
    %1520 = vmatpush1.msra.mxu0 %v188
    %1521 = vmatprep.subr.mxu0 %v195
    %1522 = vmatpush1.msra.mxu0 %v194
    %1523 = vmatprep.subr.mxu0 %v201
    %1524 = vmatpush1.msra.mxu0 %v200
    %1525 = vmatprep.subr.mxu0 %v207
    %1526 = vmatpush1.msra.mxu0 %v206
    %1527 = vmatprep.subr.mxu0 %v213
    %1528 = vmatpush1.msra.mxu0 %v212
    %1529 = vmatprep.subr.mxu0 %v219
    %1530 = vmatpush1.msra.mxu0 %v218
    %1531 = vmatprep.subr.mxu0 %v225
    %1532 = vmatpush1.msra.mxu0 %v224
    %1533 = vmatprep.subr.mxu0 %v231
    %1534 = vmatpush1.msra.mxu0 %v230
    %1535 = vmatprep.subr.mxu0 %v237
    %1536 = vmatpush1.msra.mxu0 %v236
    %1537 = vmatprep.subr.mxu0 %v243
    %1538 = vmatpush1.msra.mxu0 %v242
    %1539 = vmatprep.mubr.f32.mxu0 %v1401
    %1540 = vmatmul.mubr.f32.gmra.mrb[0].mxu0 %v1400
    %v1541 = vpop.f32.mrb[0].mxu0
    %v1542 = vadd.f32 0.0, %v1541
    %v1543 = vpop.f32.mrb[0].mxu0
    %v1544 = vadd.f32 0.0, %v1543
    %1545 = vdwg.mxu0
    %1546 = vmatprep.subr.mxu0 %v59
    %1547 = vmatpush1.msra.mxu0 %v58
    %1548 = vmatprep.subr.mxu0 %v65
    %1549 = vmatpush1.msra.mxu0 %v64
    %1550 = vmatprep.subr.mxu0 %v71
    %1551 = vmatpush1.msra.mxu0 %v70
    %1552 = vmatprep.subr.mxu0 %v77
    %1553 = vmatpush1.msra.mxu0 %v76
    %1554 = vmatprep.subr.mxu0 %v83
    %1555 = vmatpush1.msra.mxu0 %v82
    %1556 = vmatprep.subr.mxu0 %v89
    %1557 = vmatpush1.msra.mxu0 %v88
    %1558 = vmatprep.subr.mxu0 %v95
    %1559 = vmatpush1.msra.mxu0 %v94
    %1560 = vmatprep.subr.mxu0 %v101
    %1561 = vmatpush1.msra.mxu0 %v100
    %1562 = vmatprep.subr.mxu0 %v107
    %1563 = vmatpush1.msra.mxu0 %v106
    %1564 = vmatprep.subr.mxu0 %v113
    %1565 = vmatpush1.msra.mxu0 %v112
    %1566 = vmatprep.subr.mxu0 %v119
    %1567 = vmatpush1.msra.mxu0 %v118
    %1568 = vmatprep.subr.mxu0 %v125
    %1569 = vmatpush1.msra.mxu0 %v124
    %1570 = vmatprep.subr.mxu0 %v131
    %1571 = vmatpush1.msra.mxu0 %v130
    %1572 = vmatprep.subr.mxu0 %v137
    %1573 = vmatpush1.msra.mxu0 %v136
    %1574 = vmatprep.subr.mxu0 %v143
    %1575 = vmatpush1.msra.mxu0 %v142
    %1576 = vmatprep.subr.mxu0 %v149
    %1577 = vmatpush1.msra.mxu0 %v148
    %1578 = vmatprep.subr.mxu0 %v155
    %1579 = vmatpush1.msra.mxu0 %v154
    %1580 = vmatprep.subr.mxu0 %v161
    %1581 = vmatpush1.msra.mxu0 %v160
    %1582 = vmatprep.subr.mxu0 %v167
    %1583 = vmatpush1.msra.mxu0 %v166
    %1584 = vmatprep.subr.mxu0 %v173
    %1585 = vmatpush1.msra.mxu0 %v172
    %1586 = vmatprep.subr.mxu0 %v179
    %1587 = vmatpush1.msra.mxu0 %v178
    %1588 = vmatprep.subr.mxu0 %v185
    %1589 = vmatpush1.msra.mxu0 %v184
    %1590 = vmatprep.subr.mxu0 %v191
    %1591 = vmatpush1.msra.mxu0 %v190
    %1592 = vmatprep.subr.mxu0 %v197
    %1593 = vmatpush1.msra.mxu0 %v196
    %1594 = vmatprep.subr.mxu0 %v203
    %1595 = vmatpush1.msra.mxu0 %v202
    %1596 = vmatprep.subr.mxu0 %v209
    %1597 = vmatpush1.msra.mxu0 %v208
    %1598 = vmatprep.subr.mxu0 %v215
    %1599 = vmatpush1.msra.mxu0 %v214
    %1600 = vmatprep.subr.mxu0 %v221
    %1601 = vmatpush1.msra.mxu0 %v220
    %1602 = vmatprep.subr.mxu0 %v227
    %1603 = vmatpush1.msra.mxu0 %v226
    %1604 = vmatprep.subr.mxu0 %v233
    %1605 = vmatpush1.msra.mxu0 %v232
    %1606 = vmatprep.subr.mxu0 %v239
    %1607 = vmatpush1.msra.mxu0 %v238
    %1608 = vmatprep.subr.mxu0 %v245
    %1609 = vmatpush1.msra.mxu0 %v244
    %1610 = vmatprep.mubr.f32.mxu0 %v1401
    %1611 = vmatmul.mubr.f32.gmra.mrb[0].mxu0 %v1400
    %v1612 = vpop.f32.mrb[0].mxu0
    %v1613 = vadd.f32 0.0, %v1612
    %v1614 = vpop.f32.mrb[0].mxu0
    %v1615 = vadd.f32 0.0, %v1614
    %1616 = vdwg.mxu0
    %v1619 = vcombine.low %v1471, %v1473
    %v1621 = vunpack.c.l.s4 1983009808
    %v1622 = vunpack.c.0.s8 %v1621
    %v1623 = vlaneseq
    %v1624 = vshrl.u32 %v1623, 7
    %v1625 = vsub.s32 %v1622, %v1624
    %v1626 = vrot.slane %v1619, %v1625
    %v1628 = vadd.f32 %v1391, %v1626
    %v1629 = vxor.u32 %v1628, 2147483648
    %v1630 = vmul.f32 %v1629, 1.442695
    %v1631 = vpow.pop %v1630
    %v1632 = vadd.f32 %v1631, 1.0
    %v1633 = vrcp.pop %v1632
    %v1634 = vmul.f32 1.0, %v1633
    %v1636 = vrot.slane %v1391, 4
    %v1640 = vcombine.low %v1542, %v1544
    %v1642 = vunpack.c.l.s4 1983009808
    %v1643 = vunpack.c.0.s8 %v1642
    %v1644 = vlaneseq
    %v1645 = vshrl.u32 %v1644, 7
    %v1646 = vsub.s32 %v1643, %v1645
    %v1647 = vrot.slane %v1640, %v1646
    %v1649 = vadd.f32 %v1636, %v1647
    %v1650 = vxor.u32 %v1649, 2147483648
    %v1651 = vmul.f32 %v1650, 1.442695
    %v1652 = vpow.pop %v1651
    %v1653 = vadd.f32 %v1652, 1.0
    %v1654 = vrcp.pop %v1653
    %v1655 = vmul.f32 1.0, %v1654
    %v1656 = vadd.f32 %v1613, %v251
    %v1657 = vadd.f32 %v1615, %v255
    %v1660 = vcombine.low %v1656, %v1657
    %v1662 = vunpack.c.l.s4 1983009808
    %v1663 = vunpack.c.0.s8 %v1662
    %v1664 = vlaneseq
    %v1665 = vshrl.u32 %v1664, 7
    %v1666 = vsub.s32 %v1663, %v1665
    %v1667 = vrot.slane %v1660, %v1666
    %v1669 = vmul.f32 %v1634, %v1667
    %v1670 = vadd.f32 %v1392, %v1669
    %v1671 = vtanh.pop %v1670
    %v1672 = vsub.f32 1.0, %v1655
    %v1673 = vmul.f32 %v1672, %v1671
    %v1674 = vmul.f32 %v1655, %v1389
    %v1675 = vadd.f32 %v1673, %v1674
    %s1676 = scalar_lea.vmem %s1, 60
    %v1677 = vld [vmem:[%s1676] sm:$0xff]
    %v1678 = vld [vmem:[%s1676 + $0x8] sm:$0xf]
    %v1681 = vunpack.c.l.s4 1983009808
    %v1682 = vunpack.c.0.s8 %v1681
    %v1683 = vlaneseq
    %v1684 = vshrl.u32 %v1683, 7
    %v1685 = vsub.s32 %v1682, %v1684
    %v1686 = vrot.slane %v1675, %v1685
    %v1687 = vcombine.high %v1686, %v1686
    %1690 = vmatprep.subr.mxu0 %v55
    %1691 = vmatpush1.msra.mxu0 %v54
    %1692 = vmatprep.subr.mxu0 %v61
    %1693 = vmatpush1.msra.mxu0 %v60
    %1694 = vmatprep.subr.mxu0 %v67
    %1695 = vmatpush1.msra.mxu0 %v66
    %1696 = vmatprep.subr.mxu0 %v73
    %1697 = vmatpush1.msra.mxu0 %v72
    %1698 = vmatprep.subr.mxu0 %v79
    %1699 = vmatpush1.msra.mxu0 %v78
    %1700 = vmatprep.subr.mxu0 %v85
    %1701 = vmatpush1.msra.mxu0 %v84
    %1702 = vmatprep.subr.mxu0 %v91
    %1703 = vmatpush1.msra.mxu0 %v90
    %1704 = vmatprep.subr.mxu0 %v97
    %1705 = vmatpush1.msra.mxu0 %v96
    %1706 = vmatprep.subr.mxu0 %v103
    %1707 = vmatpush1.msra.mxu0 %v102
    %1708 = vmatprep.subr.mxu0 %v109
    %1709 = vmatpush1.msra.mxu0 %v108
    %1710 = vmatprep.subr.mxu0 %v115
    %1711 = vmatpush1.msra.mxu0 %v114
    %1712 = vmatprep.subr.mxu0 %v121
    %1713 = vmatpush1.msra.mxu0 %v120
    %1714 = vmatprep.subr.mxu0 %v127
    %1715 = vmatpush1.msra.mxu0 %v126
    %1716 = vmatprep.subr.mxu0 %v133
    %1717 = vmatpush1.msra.mxu0 %v132
    %1718 = vmatprep.subr.mxu0 %v139
    %1719 = vmatpush1.msra.mxu0 %v138
    %1720 = vmatprep.subr.mxu0 %v145
    %1721 = vmatpush1.msra.mxu0 %v144
    %1722 = vmatprep.subr.mxu0 %v151
    %1723 = vmatpush1.msra.mxu0 %v150
    %1724 = vmatprep.subr.mxu0 %v157
    %1725 = vmatpush1.msra.mxu0 %v156
    %1726 = vmatprep.subr.mxu0 %v163
    %1727 = vmatpush1.msra.mxu0 %v162
    %1728 = vmatprep.subr.mxu0 %v169
    %1729 = vmatpush1.msra.mxu0 %v168
    %1730 = vmatprep.subr.mxu0 %v175
    %1731 = vmatpush1.msra.mxu0 %v174
    %1732 = vmatprep.subr.mxu0 %v181
    %1733 = vmatpush1.msra.mxu0 %v180
    %1734 = vmatprep.subr.mxu0 %v187
    %1735 = vmatpush1.msra.mxu0 %v186
    %1736 = vmatprep.subr.mxu0 %v193
    %1737 = vmatpush1.msra.mxu0 %v192
    %1738 = vmatprep.subr.mxu0 %v199
    %1739 = vmatpush1.msra.mxu0 %v198
    %1740 = vmatprep.subr.mxu0 %v205
    %1741 = vmatpush1.msra.mxu0 %v204
    %1742 = vmatprep.subr.mxu0 %v211
    %1743 = vmatpush1.msra.mxu0 %v210
    %1744 = vmatprep.subr.mxu0 %v217
    %1745 = vmatpush1.msra.mxu0 %v216
    %1746 = vmatprep.subr.mxu0 %v223
    %1747 = vmatpush1.msra.mxu0 %v222
    %1748 = vmatprep.subr.mxu0 %v229
    %1749 = vmatpush1.msra.mxu0 %v228
    %1750 = vmatprep.subr.mxu0 %v235
    %1751 = vmatpush1.msra.mxu0 %v234
    %1752 = vmatprep.subr.mxu0 %v241
    %1753 = vmatpush1.msra.mxu0 %v240
    %1754 = vmatprep.mubr.f32.mxu0 %v1687
    %1755 = vmatmul.mubr.f32.gmra.mrb[0].mxu0 %v1686
    %v1756 = vpop.f32.mrb[0].mxu0
    %v1757 = vadd.f32 0.0, %v1756
    %v1758 = vpop.f32.mrb[0].mxu0
    %v1759 = vadd.f32 0.0, %v1758
    %1760 = vdwg.mxu0
    %1761 = vmatprep.subr.mxu0 %v57
    %1762 = vmatpush1.msra.mxu0 %v56
    %1763 = vmatprep.subr.mxu0 %v63
    %1764 = vmatpush1.msra.mxu0 %v62
    %1765 = vmatprep.subr.mxu0 %v69
    %1766 = vmatpush1.msra.mxu0 %v68
    %1767 = vmatprep.subr.mxu0 %v75
    %1768 = vmatpush1.msra.mxu0 %v74
    %1769 = vmatprep.subr.mxu0 %v81
    %1770 = vmatpush1.msra.mxu0 %v80
    %1771 = vmatprep.subr.mxu0 %v87
    %1772 = vmatpush1.msra.mxu0 %v86
    %1773 = vmatprep.subr.mxu0 %v93
    %1774 = vmatpush1.msra.mxu0 %v92
    %1775 = vmatprep.subr.mxu0 %v99
    %1776 = vmatpush1.msra.mxu0 %v98
    %1777 = vmatprep.subr.mxu0 %v105
    %1778 = vmatpush1.msra.mxu0 %v104
    %1779 = vmatprep.subr.mxu0 %v111
    %1780 = vmatpush1.msra.mxu0 %v110
    %1781 = vmatprep.subr.mxu0 %v117
    %1782 = vmatpush1.msra.mxu0 %v116
    %1783 = vmatprep.subr.mxu0 %v123
    %1784 = vmatpush1.msra.mxu0 %v122
    %1785 = vmatprep.subr.mxu0 %v129
    %1786 = vmatpush1.msra.mxu0 %v128
    %1787 = vmatprep.subr.mxu0 %v135
    %1788 = vmatpush1.msra.mxu0 %v134
    %1789 = vmatprep.subr.mxu0 %v141
    %1790 = vmatpush1.msra.mxu0 %v140
    %1791 = vmatprep.subr.mxu0 %v147
    %1792 = vmatpush1.msra.mxu0 %v146
    %1793 = vmatprep.subr.mxu0 %v153
    %1794 = vmatpush1.msra.mxu0 %v152
    %1795 = vmatprep.subr.mxu0 %v159
    %1796 = vmatpush1.msra.mxu0 %v158
    %1797 = vmatprep.subr.mxu0 %v165
    %1798 = vmatpush1.msra.mxu0 %v164
    %1799 = vmatprep.subr.mxu0 %v171
    %1800 = vmatpush1.msra.mxu0 %v170
    %1801 = vmatprep.subr.mxu0 %v177
    %1802 = vmatpush1.msra.mxu0 %v176
    %1803 = vmatprep.subr.mxu0 %v183
    %1804 = vmatpush1.msra.mxu0 %v182
    %1805 = vmatprep.subr.mxu0 %v189
    %1806 = vmatpush1.msra.mxu0 %v188
    %1807 = vmatprep.subr.mxu0 %v195
    %1808 = vmatpush1.msra.mxu0 %v194
    %1809 = vmatprep.subr.mxu0 %v201
    %1810 = vmatpush1.msra.mxu0 %v200
    %1811 = vmatprep.subr.mxu0 %v207
    %1812 = vmatpush1.msra.mxu0 %v206
    %1813 = vmatprep.subr.mxu0 %v213
    %1814 = vmatpush1.msra.mxu0 %v212
    %1815 = vmatprep.subr.mxu0 %v219
    %1816 = vmatpush1.msra.mxu0 %v218
    %1817 = vmatprep.subr.mxu0 %v225
    %1818 = vmatpush1.msra.mxu0 %v224
    %1819 = vmatprep.subr.mxu0 %v231
    %1820 = vmatpush1.msra.mxu0 %v230
    %1821 = vmatprep.subr.mxu0 %v237
    %1822 = vmatpush1.msra.mxu0 %v236
    %1823 = vmatprep.subr.mxu0 %v243
    %1824 = vmatpush1.msra.mxu0 %v242
    %1825 = vmatprep.mubr.f32.mxu0 %v1687
    %1826 = vmatmul.mubr.f32.gmra.mrb[0].mxu0 %v1686
    %v1827 = vpop.f32.mrb[0].mxu0
    %v1828 = vadd.f32 0.0, %v1827
    %v1829 = vpop.f32.mrb[0].mxu0
    %v1830 = vadd.f32 0.0, %v1829
    %1831 = vdwg.mxu0
    %1832 = vmatprep.subr.mxu0 %v59
    %1833 = vmatpush1.msra.mxu0 %v58
    %1834 = vmatprep.subr.mxu0 %v65
    %1835 = vmatpush1.msra.mxu0 %v64
    %1836 = vmatprep.subr.mxu0 %v71
    %1837 = vmatpush1.msra.mxu0 %v70
    %1838 = vmatprep.subr.mxu0 %v77
    %1839 = vmatpush1.msra.mxu0 %v76
    %1840 = vmatprep.subr.mxu0 %v83
    %1841 = vmatpush1.msra.mxu0 %v82
    %1842 = vmatprep.subr.mxu0 %v89
    %1843 = vmatpush1.msra.mxu0 %v88
    %1844 = vmatprep.subr.mxu0 %v95
    %1845 = vmatpush1.msra.mxu0 %v94
    %1846 = vmatprep.subr.mxu0 %v101
    %1847 = vmatpush1.msra.mxu0 %v100
    %1848 = vmatprep.subr.mxu0 %v107
    %1849 = vmatpush1.msra.mxu0 %v106
    %1850 = vmatprep.subr.mxu0 %v113
    %1851 = vmatpush1.msra.mxu0 %v112
    %1852 = vmatprep.subr.mxu0 %v119
    %1853 = vmatpush1.msra.mxu0 %v118
    %1854 = vmatprep.subr.mxu0 %v125
    %1855 = vmatpush1.msra.mxu0 %v124
    %1856 = vmatprep.subr.mxu0 %v131
    %1857 = vmatpush1.msra.mxu0 %v130
    %1858 = vmatprep.subr.mxu0 %v137
    %1859 = vmatpush1.msra.mxu0 %v136
    %1860 = vmatprep.subr.mxu0 %v143
    %1861 = vmatpush1.msra.mxu0 %v142
    %1862 = vmatprep.subr.mxu0 %v149
    %1863 = vmatpush1.msra.mxu0 %v148
    %1864 = vmatprep.subr.mxu0 %v155
    %1865 = vmatpush1.msra.mxu0 %v154
    %1866 = vmatprep.subr.mxu0 %v161
    %1867 = vmatpush1.msra.mxu0 %v160
    %1868 = vmatprep.subr.mxu0 %v167
    %1869 = vmatpush1.msra.mxu0 %v166
    %1870 = vmatprep.subr.mxu0 %v173
    %1871 = vmatpush1.msra.mxu0 %v172
    %1872 = vmatprep.subr.mxu0 %v179
    %1873 = vmatpush1.msra.mxu0 %v178
    %1874 = vmatprep.subr.mxu0 %v185
    %1875 = vmatpush1.msra.mxu0 %v184
    %1876 = vmatprep.subr.mxu0 %v191
    %1877 = vmatpush1.msra.mxu0 %v190
    %1878 = vmatprep.subr.mxu0 %v197
    %1879 = vmatpush1.msra.mxu0 %v196
    %1880 = vmatprep.subr.mxu0 %v203
    %1881 = vmatpush1.msra.mxu0 %v202
    %1882 = vmatprep.subr.mxu0 %v209
    %1883 = vmatpush1.msra.mxu0 %v208
    %1884 = vmatprep.subr.mxu0 %v215
    %1885 = vmatpush1.msra.mxu0 %v214
    %1886 = vmatprep.subr.mxu0 %v221
    %1887 = vmatpush1.msra.mxu0 %v220
    %1888 = vmatprep.subr.mxu0 %v227
    %1889 = vmatpush1.msra.mxu0 %v226
    %1890 = vmatprep.subr.mxu0 %v233
    %1891 = vmatpush1.msra.mxu0 %v232
    %1892 = vmatprep.subr.mxu0 %v239
    %1893 = vmatpush1.msra.mxu0 %v238
    %1894 = vmatprep.subr.mxu0 %v245
    %1895 = vmatpush1.msra.mxu0 %v244
    %1896 = vmatprep.mubr.f32.mxu0 %v1687
    %1897 = vmatmul.mubr.f32.gmra.mrb[0].mxu0 %v1686
    %v1898 = vpop.f32.mrb[0].mxu0
    %v1899 = vadd.f32 0.0, %v1898
    %v1900 = vpop.f32.mrb[0].mxu0
    %v1901 = vadd.f32 0.0, %v1900
    %1902 = vdwg.mxu0
    %v1905 = vcombine.low %v1757, %v1759
    %v1907 = vunpack.c.l.s4 1983009808
    %v1908 = vunpack.c.0.s8 %v1907
    %v1909 = vlaneseq
    %v1910 = vshrl.u32 %v1909, 7
    %v1911 = vsub.s32 %v1908, %v1910
    %v1912 = vrot.slane %v1905, %v1911
    %v1914 = vadd.f32 %v1677, %v1912
    %v1915 = vxor.u32 %v1914, 2147483648
    %v1916 = vmul.f32 %v1915, 1.442695
    %v1917 = vpow.pop %v1916
    %v1918 = vadd.f32 %v1917, 1.0
    %v1919 = vrcp.pop %v1918
    %v1920 = vmul.f32 1.0, %v1919
    %v1922 = vrot.slane %v1677, 4
    %v1926 = vcombine.low %v1828, %v1830
    %v1928 = vunpack.c.l.s4 1983009808
    %v1929 = vunpack.c.0.s8 %v1928
    %v1930 = vlaneseq
    %v1931 = vshrl.u32 %v1930, 7
    %v1932 = vsub.s32 %v1929, %v1931
    %v1933 = vrot.slane %v1926, %v1932
    %v1935 = vadd.f32 %v1922, %v1933
    %v1936 = vxor.u32 %v1935, 2147483648
    %v1937 = vmul.f32 %v1936, 1.442695
    %v1938 = vpow.pop %v1937
    %v1939 = vadd.f32 %v1938, 1.0
    %v1940 = vrcp.pop %v1939
    %v1941 = vmul.f32 1.0, %v1940
    %v1942 = vadd.f32 %v1899, %v251
    %v1943 = vadd.f32 %v1901, %v255
    %v1946 = vcombine.low %v1942, %v1943
    %v1948 = vunpack.c.l.s4 1983009808
    %v1949 = vunpack.c.0.s8 %v1948
    %v1950 = vlaneseq
    %v1951 = vshrl.u32 %v1950, 7
    %v1952 = vsub.s32 %v1949, %v1951
    %v1953 = vrot.slane %v1946, %v1952
    %v1955 = vmul.f32 %v1920, %v1953
    %v1956 = vadd.f32 %v1678, %v1955
    %v1957 = vtanh.pop %v1956
    %v1958 = vsub.f32 1.0, %v1941
    %v1959 = vmul.f32 %v1958, %v1957
    %v1960 = vmul.f32 %v1941, %v1675
    %v1961 = vadd.f32 %v1959, %v1960
    %s1962 = scalar_lea.vmem %s1, 72
    %v1963 = vld [vmem:[%s1962] sm:$0xff]
    %v1964 = vld [vmem:[%s1962 + $0x8] sm:$0xf]
    %v1967 = vunpack.c.l.s4 1983009808
    %v1968 = vunpack.c.0.s8 %v1967
    %v1969 = vlaneseq
    %v1970 = vshrl.u32 %v1969, 7
    %v1971 = vsub.s32 %v1968, %v1970
    %v1972 = vrot.slane %v1961, %v1971
    %v1973 = vcombine.high %v1972, %v1972
    %1976 = vmatprep.subr.mxu0 %v55
    %1977 = vmatpush1.msra.mxu0 %v54
    %1978 = vmatprep.subr.mxu0 %v61
    %1979 = vmatpush1.msra.mxu0 %v60
    %1980 = vmatprep.subr.mxu0 %v67
    %1981 = vmatpush1.msra.mxu0 %v66
    %1982 = vmatprep.subr.mxu0 %v73
    %1983 = vmatpush1.msra.mxu0 %v72
    %1984 = vmatprep.subr.mxu0 %v79
    %1985 = vmatpush1.msra.mxu0 %v78
    %1986 = vmatprep.subr.mxu0 %v85
    %1987 = vmatpush1.msra.mxu0 %v84
    %1988 = vmatprep.subr.mxu0 %v91
    %1989 = vmatpush1.msra.mxu0 %v90
    %1990 = vmatprep.subr.mxu0 %v97
    %1991 = vmatpush1.msra.mxu0 %v96
    %1992 = vmatprep.subr.mxu0 %v103
    %1993 = vmatpush1.msra.mxu0 %v102
    %1994 = vmatprep.subr.mxu0 %v109
    %1995 = vmatpush1.msra.mxu0 %v108
    %1996 = vmatprep.subr.mxu0 %v115
    %1997 = vmatpush1.msra.mxu0 %v114
    %1998 = vmatprep.subr.mxu0 %v121
    %1999 = vmatpush1.msra.mxu0 %v120
    %2000 = vmatprep.subr.mxu0 %v127
    %2001 = vmatpush1.msra.mxu0 %v126
    %2002 = vmatprep.subr.mxu0 %v133
    %2003 = vmatpush1.msra.mxu0 %v132
    %2004 = vmatprep.subr.mxu0 %v139
    %2005 = vmatpush1.msra.mxu0 %v138
    %2006 = vmatprep.subr.mxu0 %v145
    %2007 = vmatpush1.msra.mxu0 %v144
    %2008 = vmatprep.subr.mxu0 %v151
    %2009 = vmatpush1.msra.mxu0 %v150
    %2010 = vmatprep.subr.mxu0 %v157
    %2011 = vmatpush1.msra.mxu0 %v156
    %2012 = vmatprep.subr.mxu0 %v163
    %2013 = vmatpush1.msra.mxu0 %v162
    %2014 = vmatprep.subr.mxu0 %v169
    %2015 = vmatpush1.msra.mxu0 %v168
    %2016 = vmatprep.subr.mxu0 %v175
    %2017 = vmatpush1.msra.mxu0 %v174
    %2018 = vmatprep.subr.mxu0 %v181
    %2019 = vmatpush1.msra.mxu0 %v180
    %2020 = vmatprep.subr.mxu0 %v187
    %2021 = vmatpush1.msra.mxu0 %v186
    %2022 = vmatprep.subr.mxu0 %v193
    %2023 = vmatpush1.msra.mxu0 %v192
    %2024 = vmatprep.subr.mxu0 %v199
    %2025 = vmatpush1.msra.mxu0 %v198
    %2026 = vmatprep.subr.mxu0 %v205
    %2027 = vmatpush1.msra.mxu0 %v204
    %2028 = vmatprep.subr.mxu0 %v211
    %2029 = vmatpush1.msra.mxu0 %v210
    %2030 = vmatprep.subr.mxu0 %v217
    %2031 = vmatpush1.msra.mxu0 %v216
    %2032 = vmatprep.subr.mxu0 %v223
    %2033 = vmatpush1.msra.mxu0 %v222
    %2034 = vmatprep.subr.mxu0 %v229
    %2035 = vmatpush1.msra.mxu0 %v228
    %2036 = vmatprep.subr.mxu0 %v235
    %2037 = vmatpush1.msra.mxu0 %v234
    %2038 = vmatprep.subr.mxu0 %v241
    %2039 = vmatpush1.msra.mxu0 %v240
    %2040 = vmatprep.mubr.f32.mxu0 %v1973
    %2041 = vmatmul.mubr.f32.gmra.mrb[0].mxu0 %v1972
    %v2042 = vpop.f32.mrb[0].mxu0
    %v2043 = vadd.f32 0.0, %v2042
    %v2044 = vpop.f32.mrb[0].mxu0
    %v2045 = vadd.f32 0.0, %v2044
    %2046 = vdwg.mxu0
    %2047 = vmatprep.subr.mxu0 %v57
    %2048 = vmatpush1.msra.mxu0 %v56
    %2049 = vmatprep.subr.mxu0 %v63
    %2050 = vmatpush1.msra.mxu0 %v62
    %2051 = vmatprep.subr.mxu0 %v69
    %2052 = vmatpush1.msra.mxu0 %v68
    %2053 = vmatprep.subr.mxu0 %v75
    %2054 = vmatpush1.msra.mxu0 %v74
    %2055 = vmatprep.subr.mxu0 %v81
    %2056 = vmatpush1.msra.mxu0 %v80
    %2057 = vmatprep.subr.mxu0 %v87
    %2058 = vmatpush1.msra.mxu0 %v86
    %2059 = vmatprep.subr.mxu0 %v93
    %2060 = vmatpush1.msra.mxu0 %v92
    %2061 = vmatprep.subr.mxu0 %v99
    %2062 = vmatpush1.msra.mxu0 %v98
    %2063 = vmatprep.subr.mxu0 %v105
    %2064 = vmatpush1.msra.mxu0 %v104
    %2065 = vmatprep.subr.mxu0 %v111
    %2066 = vmatpush1.msra.mxu0 %v110
    %2067 = vmatprep.subr.mxu0 %v117
    %2068 = vmatpush1.msra.mxu0 %v116
    %2069 = vmatprep.subr.mxu0 %v123
    %2070 = vmatpush1.msra.mxu0 %v122
    %2071 = vmatprep.subr.mxu0 %v129
    %2072 = vmatpush1.msra.mxu0 %v128
    %2073 = vmatprep.subr.mxu0 %v135
    %2074 = vmatpush1.msra.mxu0 %v134
    %2075 = vmatprep.subr.mxu0 %v141
    %2076 = vmatpush1.msra.mxu0 %v140
    %2077 = vmatprep.subr.mxu0 %v147
    %2078 = vmatpush1.msra.mxu0 %v146
    %2079 = vmatprep.subr.mxu0 %v153
    %2080 = vmatpush1.msra.mxu0 %v152
    %2081 = vmatprep.subr.mxu0 %v159
    %2082 = vmatpush1.msra.mxu0 %v158
    %2083 = vmatprep.subr.mxu0 %v165
    %2084 = vmatpush1.msra.mxu0 %v164
    %2085 = vmatprep.subr.mxu0 %v171
    %2086 = vmatpush1.msra.mxu0 %v170
    %2087 = vmatprep.subr.mxu0 %v177
    %2088 = vmatpush1.msra.mxu0 %v176
    %2089 = vmatprep.subr.mxu0 %v183
    %2090 = vmatpush1.msra.mxu0 %v182
    %2091 = vmatprep.subr.mxu0 %v189
    %2092 = vmatpush1.msra.mxu0 %v188
    %2093 = vmatprep.subr.mxu0 %v195
    %2094 = vmatpush1.msra.mxu0 %v194
    %2095 = vmatprep.subr.mxu0 %v201
    %2096 = vmatpush1.msra.mxu0 %v200
    %2097 = vmatprep.subr.mxu0 %v207
    %2098 = vmatpush1.msra.mxu0 %v206
    %2099 = vmatprep.subr.mxu0 %v213
    %2100 = vmatpush1.msra.mxu0 %v212
    %2101 = vmatprep.subr.mxu0 %v219
    %2102 = vmatpush1.msra.mxu0 %v218
    %2103 = vmatprep.subr.mxu0 %v225
    %2104 = vmatpush1.msra.mxu0 %v224
    %2105 = vmatprep.subr.mxu0 %v231
    %2106 = vmatpush1.msra.mxu0 %v230
    %2107 = vmatprep.subr.mxu0 %v237
    %2108 = vmatpush1.msra.mxu0 %v236
    %2109 = vmatprep.subr.mxu0 %v243
    %2110 = vmatpush1.msra.mxu0 %v242
    %2111 = vmatprep.mubr.f32.mxu0 %v1973
    %2112 = vmatmul.mubr.f32.gmra.mrb[0].mxu0 %v1972
    %v2113 = vpop.f32.mrb[0].mxu0
    %v2114 = vadd.f32 0.0, %v2113
    %v2115 = vpop.f32.mrb[0].mxu0
    %v2116 = vadd.f32 0.0, %v2115
    %2117 = vdwg.mxu0
    %2118 = vmatprep.subr.mxu0 %v59
    %2119 = vmatpush1.msra.mxu0 %v58
    %2120 = vmatprep.subr.mxu0 %v65
    %2121 = vmatpush1.msra.mxu0 %v64
    %2122 = vmatprep.subr.mxu0 %v71
    %2123 = vmatpush1.msra.mxu0 %v70
    %2124 = vmatprep.subr.mxu0 %v77
    %2125 = vmatpush1.msra.mxu0 %v76
    %2126 = vmatprep.subr.mxu0 %v83
    %2127 = vmatpush1.msra.mxu0 %v82
    %2128 = vmatprep.subr.mxu0 %v89
    %2129 = vmatpush1.msra.mxu0 %v88
    %2130 = vmatprep.subr.mxu0 %v95
    %2131 = vmatpush1.msra.mxu0 %v94
    %2132 = vmatprep.subr.mxu0 %v101
    %2133 = vmatpush1.msra.mxu0 %v100
    %2134 = vmatprep.subr.mxu0 %v107
    %2135 = vmatpush1.msra.mxu0 %v106
    %2136 = vmatprep.subr.mxu0 %v113
    %2137 = vmatpush1.msra.mxu0 %v112
    %2138 = vmatprep.subr.mxu0 %v119
    %2139 = vmatpush1.msra.mxu0 %v118
    %2140 = vmatprep.subr.mxu0 %v125
    %2141 = vmatpush1.msra.mxu0 %v124
    %2142 = vmatprep.subr.mxu0 %v131
    %2143 = vmatpush1.msra.mxu0 %v130
    %2144 = vmatprep.subr.mxu0 %v137
    %2145 = vmatpush1.msra.mxu0 %v136
    %2146 = vmatprep.subr.mxu0 %v143
    %2147 = vmatpush1.msra.mxu0 %v142
    %2148 = vmatprep.subr.mxu0 %v149
    %2149 = vmatpush1.msra.mxu0 %v148
    %2150 = vmatprep.subr.mxu0 %v155
    %2151 = vmatpush1.msra.mxu0 %v154
    %2152 = vmatprep.subr.mxu0 %v161
    %2153 = vmatpush1.msra.mxu0 %v160
    %2154 = vmatprep.subr.mxu0 %v167
    %2155 = vmatpush1.msra.mxu0 %v166
    %2156 = vmatprep.subr.mxu0 %v173
    %2157 = vmatpush1.msra.mxu0 %v172
    %2158 = vmatprep.subr.mxu0 %v179
    %2159 = vmatpush1.msra.mxu0 %v178
    %2160 = vmatprep.subr.mxu0 %v185
    %2161 = vmatpush1.msra.mxu0 %v184
    %2162 = vmatprep.subr.mxu0 %v191
    %2163 = vmatpush1.msra.mxu0 %v190
    %2164 = vmatprep.subr.mxu0 %v197
    %2165 = vmatpush1.msra.mxu0 %v196
    %2166 = vmatprep.subr.mxu0 %v203
    %2167 = vmatpush1.msra.mxu0 %v202
    %2168 = vmatprep.subr.mxu0 %v209
    %2169 = vmatpush1.msra.mxu0 %v208
    %2170 = vmatprep.subr.mxu0 %v215
    %2171 = vmatpush1.msra.mxu0 %v214
    %2172 = vmatprep.subr.mxu0 %v221
    %2173 = vmatpush1.msra.mxu0 %v220
    %2174 = vmatprep.subr.mxu0 %v227
    %2175 = vmatpush1.msra.mxu0 %v226
    %2176 = vmatprep.subr.mxu0 %v233
    %2177 = vmatpush1.msra.mxu0 %v232
    %2178 = vmatprep.subr.mxu0 %v239
    %2179 = vmatpush1.msra.mxu0 %v238
    %2180 = vmatprep.subr.mxu0 %v245
    %2181 = vmatpush1.msra.mxu0 %v244
    %2182 = vmatprep.mubr.f32.mxu0 %v1973
    %2183 = vmatmul.mubr.f32.gmra.mrb[0].mxu0 %v1972
    %v2184 = vpop.f32.mrb[0].mxu0
    %v2185 = vadd.f32 0.0, %v2184
    %v2186 = vpop.f32.mrb[0].mxu0
    %v2187 = vadd.f32 0.0, %v2186
    %2188 = vdwg.mxu0
    %v2191 = vcombine.low %v2043, %v2045
    %v2193 = vunpack.c.l.s4 1983009808
    %v2194 = vunpack.c.0.s8 %v2193
    %v2195 = vlaneseq
    %v2196 = vshrl.u32 %v2195, 7
    %v2197 = vsub.s32 %v2194, %v2196
    %v2198 = vrot.slane %v2191, %v2197
    %v2200 = vadd.f32 %v1963, %v2198
    %v2201 = vxor.u32 %v2200, 2147483648
    %v2202 = vmul.f32 %v2201, 1.442695
    %v2203 = vpow.pop %v2202
    %v2204 = vadd.f32 %v2203, 1.0
    %v2205 = vrcp.pop %v2204
    %v2206 = vmul.f32 1.0, %v2205
    %v2208 = vrot.slane %v1963, 4
    %v2212 = vcombine.low %v2114, %v2116
    %v2214 = vunpack.c.l.s4 1983009808
    %v2215 = vunpack.c.0.s8 %v2214
    %v2216 = vlaneseq
    %v2217 = vshrl.u32 %v2216, 7
    %v2218 = vsub.s32 %v2215, %v2217
    %v2219 = vrot.slane %v2212, %v2218
    %v2221 = vadd.f32 %v2208, %v2219
    %v2222 = vxor.u32 %v2221, 2147483648
    %v2223 = vmul.f32 %v2222, 1.442695
    %v2224 = vpow.pop %v2223
    %v2225 = vadd.f32 %v2224, 1.0
    %v2226 = vrcp.pop %v2225
    %v2227 = vmul.f32 1.0, %v2226
    %v2228 = vadd.f32 %v2185, %v251
    %v2229 = vadd.f32 %v2187, %v255
    %v2232 = vcombine.low %v2228, %v2229
    %v2234 = vunpack.c.l.s4 1983009808
    %v2235 = vunpack.c.0.s8 %v2234
    %v2236 = vlaneseq
    %v2237 = vshrl.u32 %v2236, 7
    %v2238 = vsub.s32 %v2235, %v2237
    %v2239 = vrot.slane %v2232, %v2238
    %v2241 = vmul.f32 %v2206, %v2239
    %v2242 = vadd.f32 %v1964, %v2241
    %v2243 = vtanh.pop %v2242
    %v2244 = vsub.f32 1.0, %v2227
    %v2245 = vmul.f32 %v2244, %v2243
    %v2246 = vmul.f32 %v2227, %v1961
    %v2247 = vadd.f32 %v2245, %v2246
    %s2248 = scalar_lea.vmem %s1, 84
    %v2249 = vld [vmem:[%s2248] sm:$0xff]
    %v2250 = vld [vmem:[%s2248 + $0x8] sm:$0xf]
    %v2253 = vunpack.c.l.s4 1983009808
    %v2254 = vunpack.c.0.s8 %v2253
    %v2255 = vlaneseq
    %v2256 = vshrl.u32 %v2255, 7
    %v2257 = vsub.s32 %v2254, %v2256
    %v2258 = vrot.slane %v2247, %v2257
    %v2259 = vcombine.high %v2258, %v2258
    %2262 = vmatprep.subr.mxu0 %v55
    %2263 = vmatpush1.msra.mxu0 %v54
    %2264 = vmatprep.subr.mxu0 %v61
    %2265 = vmatpush1.msra.mxu0 %v60
    %2266 = vmatprep.subr.mxu0 %v67
    %2267 = vmatpush1.msra.mxu0 %v66
    %2268 = vmatprep.subr.mxu0 %v73
    %2269 = vmatpush1.msra.mxu0 %v72
    %2270 = vmatprep.subr.mxu0 %v79
    %2271 = vmatpush1.msra.mxu0 %v78
    %2272 = vmatprep.subr.mxu0 %v85
    %2273 = vmatpush1.msra.mxu0 %v84
    %2274 = vmatprep.subr.mxu0 %v91
    %2275 = vmatpush1.msra.mxu0 %v90
    %2276 = vmatprep.subr.mxu0 %v97
    %2277 = vmatpush1.msra.mxu0 %v96
    %2278 = vmatprep.subr.mxu0 %v103
    %2279 = vmatpush1.msra.mxu0 %v102
    %2280 = vmatprep.subr.mxu0 %v109
    %2281 = vmatpush1.msra.mxu0 %v108
    %2282 = vmatprep.subr.mxu0 %v115
    %2283 = vmatpush1.msra.mxu0 %v114
    %2284 = vmatprep.subr.mxu0 %v121
    %2285 = vmatpush1.msra.mxu0 %v120
    %2286 = vmatprep.subr.mxu0 %v127
    %2287 = vmatpush1.msra.mxu0 %v126
    %2288 = vmatprep.subr.mxu0 %v133
    %2289 = vmatpush1.msra.mxu0 %v132
    %2290 = vmatprep.subr.mxu0 %v139
    %2291 = vmatpush1.msra.mxu0 %v138
    %2292 = vmatprep.subr.mxu0 %v145
    %2293 = vmatpush1.msra.mxu0 %v144
    %2294 = vmatprep.subr.mxu0 %v151
    %2295 = vmatpush1.msra.mxu0 %v150
    %2296 = vmatprep.subr.mxu0 %v157
    %2297 = vmatpush1.msra.mxu0 %v156
    %2298 = vmatprep.subr.mxu0 %v163
    %2299 = vmatpush1.msra.mxu0 %v162
    %2300 = vmatprep.subr.mxu0 %v169
    %2301 = vmatpush1.msra.mxu0 %v168
    %2302 = vmatprep.subr.mxu0 %v175
    %2303 = vmatpush1.msra.mxu0 %v174
    %2304 = vmatprep.subr.mxu0 %v181
    %2305 = vmatpush1.msra.mxu0 %v180
    %2306 = vmatprep.subr.mxu0 %v187
    %2307 = vmatpush1.msra.mxu0 %v186
    %2308 = vmatprep.subr.mxu0 %v193
    %2309 = vmatpush1.msra.mxu0 %v192
    %2310 = vmatprep.subr.mxu0 %v199
    %2311 = vmatpush1.msra.mxu0 %v198
    %2312 = vmatprep.subr.mxu0 %v205
    %2313 = vmatpush1.msra.mxu0 %v204
    %2314 = vmatprep.subr.mxu0 %v211
    %2315 = vmatpush1.msra.mxu0 %v210
    %2316 = vmatprep.subr.mxu0 %v217
    %2317 = vmatpush1.msra.mxu0 %v216
    %2318 = vmatprep.subr.mxu0 %v223
    %2319 = vmatpush1.msra.mxu0 %v222
    %2320 = vmatprep.subr.mxu0 %v229
    %2321 = vmatpush1.msra.mxu0 %v228
    %2322 = vmatprep.subr.mxu0 %v235
    %2323 = vmatpush1.msra.mxu0 %v234
    %2324 = vmatprep.subr.mxu0 %v241
    %2325 = vmatpush1.msra.mxu0 %v240
    %2326 = vmatprep.mubr.f32.mxu0 %v2259
    %2327 = vmatmul.mubr.f32.gmra.mrb[0].mxu0 %v2258
    %v2328 = vpop.f32.mrb[0].mxu0
    %v2329 = vadd.f32 0.0, %v2328
    %v2330 = vpop.f32.mrb[0].mxu0
    %v2331 = vadd.f32 0.0, %v2330
    %2332 = vdwg.mxu0
    %2333 = vmatprep.subr.mxu0 %v57
    %2334 = vmatpush1.msra.mxu0 %v56
    %2335 = vmatprep.subr.mxu0 %v63
    %2336 = vmatpush1.msra.mxu0 %v62
    %2337 = vmatprep.subr.mxu0 %v69
    %2338 = vmatpush1.msra.mxu0 %v68
    %2339 = vmatprep.subr.mxu0 %v75
    %2340 = vmatpush1.msra.mxu0 %v74
    %2341 = vmatprep.subr.mxu0 %v81
    %2342 = vmatpush1.msra.mxu0 %v80
    %2343 = vmatprep.subr.mxu0 %v87
    %2344 = vmatpush1.msra.mxu0 %v86
    %2345 = vmatprep.subr.mxu0 %v93
    %2346 = vmatpush1.msra.mxu0 %v92
    %2347 = vmatprep.subr.mxu0 %v99
    %2348 = vmatpush1.msra.mxu0 %v98
    %2349 = vmatprep.subr.mxu0 %v105
    %2350 = vmatpush1.msra.mxu0 %v104
    %2351 = vmatprep.subr.mxu0 %v111
    %2352 = vmatpush1.msra.mxu0 %v110
    %2353 = vmatprep.subr.mxu0 %v117
    %2354 = vmatpush1.msra.mxu0 %v116
    %2355 = vmatprep.subr.mxu0 %v123
    %2356 = vmatpush1.msra.mxu0 %v122
    %2357 = vmatprep.subr.mxu0 %v129
    %2358 = vmatpush1.msra.mxu0 %v128
    %2359 = vmatprep.subr.mxu0 %v135
    %2360 = vmatpush1.msra.mxu0 %v134
    %2361 = vmatprep.subr.mxu0 %v141
    %2362 = vmatpush1.msra.mxu0 %v140
    %2363 = vmatprep.subr.mxu0 %v147
    %2364 = vmatpush1.msra.mxu0 %v146
    %2365 = vmatprep.subr.mxu0 %v153
    %2366 = vmatpush1.msra.mxu0 %v152
    %2367 = vmatprep.subr.mxu0 %v159
    %2368 = vmatpush1.msra.mxu0 %v158
    %2369 = vmatprep.subr.mxu0 %v165
    %2370 = vmatpush1.msra.mxu0 %v164
    %2371 = vmatprep.subr.mxu0 %v171
    %2372 = vmatpush1.msra.mxu0 %v170
    %2373 = vmatprep.subr.mxu0 %v177
    %2374 = vmatpush1.msra.mxu0 %v176
    %2375 = vmatprep.subr.mxu0 %v183
    %2376 = vmatpush1.msra.mxu0 %v182
    %2377 = vmatprep.subr.mxu0 %v189
    %2378 = vmatpush1.msra.mxu0 %v188
    %2379 = vmatprep.subr.mxu0 %v195
    %2380 = vmatpush1.msra.mxu0 %v194
    %2381 = vmatprep.subr.mxu0 %v201
    %2382 = vmatpush1.msra.mxu0 %v200
    %2383 = vmatprep.subr.mxu0 %v207
    %2384 = vmatpush1.msra.mxu0 %v206
    %2385 = vmatprep.subr.mxu0 %v213
    %2386 = vmatpush1.msra.mxu0 %v212
    %2387 = vmatprep.subr.mxu0 %v219
    %2388 = vmatpush1.msra.mxu0 %v218
    %2389 = vmatprep.subr.mxu0 %v225
    %2390 = vmatpush1.msra.mxu0 %v224
    %2391 = vmatprep.subr.mxu0 %v231
    %2392 = vmatpush1.msra.mxu0 %v230
    %2393 = vmatprep.subr.mxu0 %v237
    %2394 = vmatpush1.msra.mxu0 %v236
    %2395 = vmatprep.subr.mxu0 %v243
    %2396 = vmatpush1.msra.mxu0 %v242
    %2397 = vmatprep.mubr.f32.mxu0 %v2259
    %2398 = vmatmul.mubr.f32.gmra.mrb[0].mxu0 %v2258
    %v2399 = vpop.f32.mrb[0].mxu0
    %v2400 = vadd.f32 0.0, %v2399
    %v2401 = vpop.f32.mrb[0].mxu0
    %v2402 = vadd.f32 0.0, %v2401
    %2403 = vdwg.mxu0
    %2404 = vmatprep.subr.mxu0 %v59
    %2405 = vmatpush1.msra.mxu0 %v58
    %2406 = vmatprep.subr.mxu0 %v65
    %2407 = vmatpush1.msra.mxu0 %v64
    %2408 = vmatprep.subr.mxu0 %v71
    %2409 = vmatpush1.msra.mxu0 %v70
    %2410 = vmatprep.subr.mxu0 %v77
    %2411 = vmatpush1.msra.mxu0 %v76
    %2412 = vmatprep.subr.mxu0 %v83
    %2413 = vmatpush1.msra.mxu0 %v82
    %2414 = vmatprep.subr.mxu0 %v89
    %2415 = vmatpush1.msra.mxu0 %v88
    %2416 = vmatprep.subr.mxu0 %v95
    %2417 = vmatpush1.msra.mxu0 %v94
    %2418 = vmatprep.subr.mxu0 %v101
    %2419 = vmatpush1.msra.mxu0 %v100
    %2420 = vmatprep.subr.mxu0 %v107
    %2421 = vmatpush1.msra.mxu0 %v106
    %2422 = vmatprep.subr.mxu0 %v113
    %2423 = vmatpush1.msra.mxu0 %v112
    %2424 = vmatprep.subr.mxu0 %v119
    %2425 = vmatpush1.msra.mxu0 %v118
    %2426 = vmatprep.subr.mxu0 %v125
    %2427 = vmatpush1.msra.mxu0 %v124
    %2428 = vmatprep.subr.mxu0 %v131
    %2429 = vmatpush1.msra.mxu0 %v130
    %2430 = vmatprep.subr.mxu0 %v137
    %2431 = vmatpush1.msra.mxu0 %v136
    %2432 = vmatprep.subr.mxu0 %v143
    %2433 = vmatpush1.msra.mxu0 %v142
    %2434 = vmatprep.subr.mxu0 %v149
    %2435 = vmatpush1.msra.mxu0 %v148
    %2436 = vmatprep.subr.mxu0 %v155
    %2437 = vmatpush1.msra.mxu0 %v154
    %2438 = vmatprep.subr.mxu0 %v161
    %2439 = vmatpush1.msra.mxu0 %v160
    %2440 = vmatprep.subr.mxu0 %v167
    %2441 = vmatpush1.msra.mxu0 %v166
    %2442 = vmatprep.subr.mxu0 %v173
    %2443 = vmatpush1.msra.mxu0 %v172
    %2444 = vmatprep.subr.mxu0 %v179
    %2445 = vmatpush1.msra.mxu0 %v178
    %2446 = vmatprep.subr.mxu0 %v185
    %2447 = vmatpush1.msra.mxu0 %v184
    %2448 = vmatprep.subr.mxu0 %v191
    %2449 = vmatpush1.msra.mxu0 %v190
    %2450 = vmatprep.subr.mxu0 %v197
    %2451 = vmatpush1.msra.mxu0 %v196
    %2452 = vmatprep.subr.mxu0 %v203
    %2453 = vmatpush1.msra.mxu0 %v202
    %2454 = vmatprep.subr.mxu0 %v209
    %2455 = vmatpush1.msra.mxu0 %v208
    %2456 = vmatprep.subr.mxu0 %v215
    %2457 = vmatpush1.msra.mxu0 %v214
    %2458 = vmatprep.subr.mxu0 %v221
    %2459 = vmatpush1.msra.mxu0 %v220
    %2460 = vmatprep.subr.mxu0 %v227
    %2461 = vmatpush1.msra.mxu0 %v226
    %2462 = vmatprep.subr.mxu0 %v233
    %2463 = vmatpush1.msra.mxu0 %v232
    %2464 = vmatprep.subr.mxu0 %v239
    %2465 = vmatpush1.msra.mxu0 %v238
    %2466 = vmatprep.subr.mxu0 %v245
    %2467 = vmatpush1.msra.mxu0 %v244
    %2468 = vmatprep.mubr.f32.mxu0 %v2259
    %2469 = vmatmul.mubr.f32.gmra.mrb[0].mxu0 %v2258
    %v2470 = vpop.f32.mrb[0].mxu0
    %v2471 = vadd.f32 0.0, %v2470
    %v2472 = vpop.f32.mrb[0].mxu0
    %v2473 = vadd.f32 0.0, %v2472
    %2474 = vdwg.mxu0
    %v2477 = vcombine.low %v2329, %v2331
    %v2479 = vunpack.c.l.s4 1983009808
    %v2480 = vunpack.c.0.s8 %v2479
    %v2481 = vlaneseq
    %v2482 = vshrl.u32 %v2481, 7
    %v2483 = vsub.s32 %v2480, %v2482
    %v2484 = vrot.slane %v2477, %v2483
    %v2486 = vadd.f32 %v2249, %v2484
    %v2487 = vxor.u32 %v2486, 2147483648
    %v2488 = vmul.f32 %v2487, 1.442695
    %v2489 = vpow.pop %v2488
    %v2490 = vadd.f32 %v2489, 1.0
    %v2491 = vrcp.pop %v2490
    %v2492 = vmul.f32 1.0, %v2491
    %v2494 = vrot.slane %v2249, 4
    %v2498 = vcombine.low %v2400, %v2402
    %v2500 = vunpack.c.l.s4 1983009808
    %v2501 = vunpack.c.0.s8 %v2500
    %v2502 = vlaneseq
    %v2503 = vshrl.u32 %v2502, 7
    %v2504 = vsub.s32 %v2501, %v2503
    %v2505 = vrot.slane %v2498, %v2504
    %v2507 = vadd.f32 %v2494, %v2505
    %v2508 = vxor.u32 %v2507, 2147483648
    %v2509 = vmul.f32 %v2508, 1.442695
    %v2510 = vpow.pop %v2509
    %v2511 = vadd.f32 %v2510, 1.0
    %v2512 = vrcp.pop %v2511
    %v2513 = vmul.f32 1.0, %v2512
    %v2514 = vadd.f32 %v2471, %v251
    %v2515 = vadd.f32 %v2473, %v255
    %v2518 = vcombine.low %v2514, %v2515
    %v2520 = vunpack.c.l.s4 1983009808
    %v2521 = vunpack.c.0.s8 %v2520
    %v2522 = vlaneseq
    %v2523 = vshrl.u32 %v2522, 7
    %v2524 = vsub.s32 %v2521, %v2523
    %v2525 = vrot.slane %v2518, %v2524
    %v2527 = vmul.f32 %v2492, %v2525
    %v2528 = vadd.f32 %v2250, %v2527
    %v2529 = vtanh.pop %v2528
    %v2530 = vsub.f32 1.0, %v2513
    %v2531 = vmul.f32 %v2530, %v2529
    %v2532 = vmul.f32 %v2513, %v2247
    %v2533 = vadd.f32 %v2531, %v2532
    %v2534 = vmax.f32 %v2533, 0.0
    %2535 = vst [vmem:[#allocation7] sm:$0xf] %v2534
    %v2536 = vld [vmem:[%s4] sm:$0xff]
    %v2537 = vld [vmem:[%s4 + $0x8] sm:$0xff]
    %v2538 = vld [vmem:[%s4 + $0x10] sm:$0xff]
    %v2539 = vld [vmem:[%s4 + $0x18] sm:$0xff]
    %v2540 = vld [vmem:[%s4 + $0x20] sm:$0xff]
    %v2541 = vld [vmem:[%s4 + $0x28] sm:$0xff]
    %v2542 = vld [vmem:[%s4 + $0x30] sm:$0xff]
    %v2543 = vld [vmem:[%s4 + $0x38] sm:$0xff]
    %v2544 = vld [vmem:[%s4 + $0x40] sm:$0xff]
    %v2545 = vld [vmem:[%s4 + $0x48] sm:$0xff]
    %v2546 = vld [vmem:[%s4 + $0x50] sm:$0xff]
    %v2547 = vld [vmem:[%s4 + $0x58] sm:$0xff]
    %v2548 = vld [vmem:[%s4 + $0x60] sm:$0xff]
    %v2549 = vld [vmem:[%s4 + $0x68] sm:$0xff]
    %v2550 = vld [vmem:[%s4 + $0x70] sm:$0xff]
    %v2551 = vld [vmem:[%s4 + $0x78] sm:$0xff]
    %v2552 = vld [vmem:[%s4 + $0x80] sm:$0xff]
    %v2553 = vld [vmem:[%s4 + $0x88] sm:$0xff]
    %v2554 = vld [vmem:[%s4 + $0x90] sm:$0xff]
    %v2555 = vld [vmem:[%s4 + $0x98] sm:$0xff]
    %v2556 = vld [vmem:[%s4 + $0xa0] sm:$0xff]
    %v2557 = vld [vmem:[%s4 + $0xa8] sm:$0xff]
    %v2558 = vld [vmem:[%s4 + $0xb0] sm:$0xff]
    %v2559 = vld [vmem:[%s4 + $0xb8] sm:$0xff]
    %v2560 = vld [vmem:[%s4 + $0xc0] sm:$0xff]
    %v2561 = vld [vmem:[%s4 + $0xc8] sm:$0xff]
    %v2562 = vld [vmem:[%s4 + $0xd0] sm:$0xff]
    %v2563 = vld [vmem:[%s4 + $0xd8] sm:$0xff]
    %v2564 = vld [vmem:[%s4 + $0xe0] sm:$0xff]
    %v2565 = vld [vmem:[%s4 + $0xe8] sm:$0xff]
    %v2566 = vld [vmem:[%s4 + $0xf0] sm:$0xff]
    %v2567 = vld [vmem:[%s4 + $0xf8] sm:$0xff]
    %v2568 = vld [vmem:[%s5] sm:$0x1]
    %v2570 = vlaneseq
    %v2571 = vshrl.u32 %v2570, 7
    %v2572 = vsub.s32 0, %v2571
    %v2573 = vrot.slane %v2568, %v2572
    %v2577 = vunpack.c.l.s4 1983009808
    %v2578 = vunpack.c.0.s8 %v2577
    %v2579 = vlaneseq
    %v2580 = vshrl.u32 %v2579, 7
    %v2581 = vsub.s32 %v2578, %v2580
    %v2582 = vrot.slane %v2534, %v2581
    %v2583 = vcombine.high %v2582, %v2582
    %2586 = vmatprep.subr.mxu0 0.0
    %2587 = vmatpush1.msra.mxu0 %v2536
    %2588 = vmatprep.subr.mxu0 0.0
    %2589 = vmatpush1.msra.mxu0 %v2537
    %2590 = vmatprep.subr.mxu0 0.0
    %2591 = vmatpush1.msra.mxu0 %v2538
    %2592 = vmatprep.subr.mxu0 0.0
    %2593 = vmatpush1.msra.mxu0 %v2539
    %2594 = vmatprep.subr.mxu0 0.0
    %2595 = vmatpush1.msra.mxu0 %v2540
    %2596 = vmatprep.subr.mxu0 0.0
    %2597 = vmatpush1.msra.mxu0 %v2541
    %2598 = vmatprep.subr.mxu0 0.0
    %2599 = vmatpush1.msra.mxu0 %v2542
    %2600 = vmatprep.subr.mxu0 0.0
    %2601 = vmatpush1.msra.mxu0 %v2543
    %2602 = vmatprep.subr.mxu0 0.0
    %2603 = vmatpush1.msra.mxu0 %v2544
    %2604 = vmatprep.subr.mxu0 0.0
    %2605 = vmatpush1.msra.mxu0 %v2545
    %2606 = vmatprep.subr.mxu0 0.0
    %2607 = vmatpush1.msra.mxu0 %v2546
    %2608 = vmatprep.subr.mxu0 0.0
    %2609 = vmatpush1.msra.mxu0 %v2547
    %2610 = vmatprep.subr.mxu0 0.0
    %2611 = vmatpush1.msra.mxu0 %v2548
    %2612 = vmatprep.subr.mxu0 0.0
    %2613 = vmatpush1.msra.mxu0 %v2549
    %2614 = vmatprep.subr.mxu0 0.0
    %2615 = vmatpush1.msra.mxu0 %v2550
    %2616 = vmatprep.subr.mxu0 0.0
    %2617 = vmatpush1.msra.mxu0 %v2551
    %2618 = vmatprep.subr.mxu0 0.0
    %2619 = vmatpush1.msra.mxu0 %v2552
    %2620 = vmatprep.subr.mxu0 0.0
    %2621 = vmatpush1.msra.mxu0 %v2553
    %2622 = vmatprep.subr.mxu0 0.0
    %2623 = vmatpush1.msra.mxu0 %v2554
    %2624 = vmatprep.subr.mxu0 0.0
    %2625 = vmatpush1.msra.mxu0 %v2555
    %2626 = vmatprep.subr.mxu0 0.0
    %2627 = vmatpush1.msra.mxu0 %v2556
    %2628 = vmatprep.subr.mxu0 0.0
    %2629 = vmatpush1.msra.mxu0 %v2557
    %2630 = vmatprep.subr.mxu0 0.0
    %2631 = vmatpush1.msra.mxu0 %v2558
    %2632 = vmatprep.subr.mxu0 0.0
    %2633 = vmatpush1.msra.mxu0 %v2559
    %2634 = vmatprep.subr.mxu0 0.0
    %2635 = vmatpush1.msra.mxu0 %v2560
    %2636 = vmatprep.subr.mxu0 0.0
    %2637 = vmatpush1.msra.mxu0 %v2561
    %2638 = vmatprep.subr.mxu0 0.0
    %2639 = vmatpush1.msra.mxu0 %v2562
    %2640 = vmatprep.subr.mxu0 0.0
    %2641 = vmatpush1.msra.mxu0 %v2563
    %2642 = vmatprep.subr.mxu0 0.0
    %2643 = vmatpush1.msra.mxu0 %v2564
    %2644 = vmatprep.subr.mxu0 0.0
    %2645 = vmatpush1.msra.mxu0 %v2565
    %2646 = vmatprep.subr.mxu0 0.0
    %2647 = vmatpush1.msra.mxu0 %v2566
    %2648 = vmatprep.subr.mxu0 0.0
    %2649 = vmatpush1.msra.mxu0 %v2567
    %2650 = vmatprep.mubr.f32.mxu0 %v2583
    %2651 = vmatmul.mubr.f32.gmra.mrb[0].mxu0 %v2582
    %v2652 = vpop.f32.mrb[0].mxu0
    %v2653 = vadd.f32 %v2573, %v2652
    %v2654 = vpop.f32.mrb[0].mxu0
    %2655 = vdwg.mxu0
    %2657 = vrot.lane.b32.xlu0 %v2653, 124
    %v2658 = vpop.permute.xlu0 %2657
    %vm2660 = vcmask 1024
    %2661 = vst.msk [vmem:[%s8] sm:$0x3] %vm2660, %v2658
    %vm2662 = vcmask 25600
    %v2663 = vsel %vm2662, %v2653, -inf
    %2664 = vmax.xlane.f32.xlu0 %v2663
    %v2665 = vpop.xlane.xlu0 %2664
    %v2666 = vsub.f32 %v2653, %v2665
    %v2667 = vmul.f32 %v2666, 1.442695
    %v2668 = vpow.pop %v2667
    %v2669 = vsel %vm2662, %v2668, 0.0
    %2670 = vadd.xlane.f32.xlu0 %v2669
    %v2671 = vpop.xlane.xlu0 %2670
    %v2672 = vlog2.pop %v2671
    %v2673 = vmul.f32 %v2672, 0.6931472
    %v2674 = vadd.f32 %v2665, %v2673
    %v2675 = vsub.f32 %v2653, %v2674
    %v2676 = vlaneseq
    %v2677 = vand.u32 %v2676, 127
    %s2678 = sld [smem:[#allocation2]]
    %v2679 = vstv %s2678
    %vm2680 = vcmp.eq.s32.totalorder %v2677, %v2679
    %v2681 = vsel %vm2680, %v2675, 0.0
    %vm2682 = vcmask 24576
    %v2683 = vsel %vm2682, %v2681, 0.0
    %2684 = vadd.xlane.f32.xlu0 %v2683
    %v2685 = vpop.xlane.xlu0 %2684
    %vm2686 = vcmask 0
    %2687 = vst.msk [vmem:[%s7] sm:$0x1] %vm2686, %v2685
    %s2688 = sld [smem:[#allocation2 + $0x80]]
    %v2689 = vstv %s2688
    %vm2690 = vcmp.eq.s32.totalorder %v2677, %v2689
    %v2691 = vsel %vm2690, %v2675, 0.0
    %vm2692 = vcmask 25601
    %v2693 = vsel %vm2692, %v2691, 0.0
    %2694 = vadd.xlane.f32.xlu0 %v2693
    %v2695 = vpop.xlane.xlu0 %2694
    %vm2696 = vcmask 1025
    %2697 = vst.msk [vmem:[%s7] sm:$0x2] %vm2696, %v2695
    // Predicated region
    $region34: #{tpu_custom_call.1} parent=1 // pred_check
      _
    $region35: #{tpu_custom_call.1} parent=1 // pred_check_branch
      %2699 = sbr.rel (0) target = $region37
    $region36: #{tpu_custom_call.1} parent=1 // pred_region
      %s2701 = ssub.s32 64, 64
      %2702 = vsyncadd [#allocation4], %s2701
      %s2704 = sshll.u32 [#allocation7], 4
      %s2705 = int_to_ptr.vmem [resolvable:$true] %s2704
      %2707 = dma.vmem_to_hbm [thread:$0]  %s2705, 64, %s6, [#allocation4]
    $region37: #{tpu_custom_call.1} parent=1 // pred_fallthru
      _
    // Predicated region
    $region38: #{tpu_custom_call.1} parent=1 // pred_check
      _
    $region39: #{tpu_custom_call.1} parent=1 // pred_check_branch
      %2709 = sbr.rel (0) target = $region41
    $region40: #{tpu_custom_call.1} parent=1 // pred_region
      _
    $region41: #{tpu_custom_call.1} parent=1 // pred_fallthru
      _
    // Predicated region
    $region42: #{tpu_custom_call.1} parent=1 // pred_check
      _
    $region43: #{tpu_custom_call.1} parent=1 // pred_check_branch
      %2711 = sbr.rel (0) target = $region45
    $region44: #{tpu_custom_call.1} parent=1 // pred_region
      _
    $region45: #{tpu_custom_call.1} parent=1 // pred_fallthru
      _
    // Predicated region
    $region46: #{tpu_custom_call.1} parent=1 // pred_check
      _
    $region47: #{tpu_custom_call.1} parent=1 // pred_check_branch
      %2713 = sbr.rel (0) target = $region49
    $region48: #{tpu_custom_call.1} parent=1 // pred_region
      %2714 = dma.done [#allocation4], 64
    $region49: #{tpu_custom_call.1} parent=1 // pred_fallthru
      _
    // Predicated region
    $region50: #{tpu_custom_call.1} parent=1 // pred_check
      _
    $region51: #{tpu_custom_call.1} parent=1 // pred_check_branch
      %2716 = sbr.rel (0) target = $region53
    $region52: #{tpu_custom_call.1} parent=1 // pred_region
      _
    $region53: #{tpu_custom_call.1} parent=1 // pred_fallthru
      _
    // Predicated region
    $region54: #{tpu_custom_call.1} parent=1 // pred_check
      _
    $region55: #{tpu_custom_call.1} parent=1 // pred_check_branch
      %2718 = sbr.rel (0) target = $region57
    $region56: #{tpu_custom_call.1} parent=1 // pred_region
      _
    $region57: #{tpu_custom_call.1} parent=1 // pred_fallthru
      _
    %2719 = vsyncpa [#allocation3], 1
    %2720 = vsyncpa [#allocation4], 1
    %2721 = vsyncpa [#allocation5], 1

</llo_original>
